<compile_context>
chip_gen: v6e
topology: v6e:2x2x1
jax: 0.10.0
libtpu: 0.0.40
codegen_flags: <defaults>
</compile_context>

<pallas_src>
import functools

import numpy as np
import jax
import jax.numpy as jnp
from jax.experimental import pallas as pl
from jax.experimental.pallas import tpu as pltpu


# ----------------------------------------------------------------------------
# small helpers used inside the kernel
# ----------------------------------------------------------------------------
def _mm(a, b):
    # bf16 MXU operands, f32 accumulation.
    return jnp.dot(a.astype(jnp.bfloat16), b.astype(jnp.bfloat16),
                   preferred_element_type=jnp.float32)


def _shift_rows(x, k):
    # out[r, :] = x[r + k, :], zero-filled at the edges (static k).
    if k == 0:
        return x
    rows, lanes = x.shape
    z = jnp.zeros((abs(k), lanes), x.dtype)
    if k > 0:
        return jnp.concatenate([x[k:, :], z], axis=0)
    return jnp.concatenate([z, x[: rows + k, :]], axis=0)


# ----------------------------------------------------------------------------
# fused kernel
# ----------------------------------------------------------------------------
def _fused_kernel(
    gasf_ref, mtf_ref,                                  # (B*IC, hw*hw) images
    sww_ref, swb_ref,                                   # extractor stand-in (pre-tiled)
    w1t_ref, b1c_ref,                                   # conv1x1 (+BN folded), transposed
    selbig_ref, wet_ref, bec_ref,                       # EDF lane-regroup + Linear
    w2_ref, b2r_ref, cmask_ref,                         # conv3x3 (+BN folded) + border masks
    selpool_ref,                                        # maxpool row selection
    g1w1_ref, g1b1_ref, g1w2_ref, g1b2_ref,             # GAM1 channel attention
    g1w3_ref, g1b3_ref, g1w4_ref, g1b4_ref,             # GAM1 spatial attention
    l0w_ref, l0b_ref, l1w_ref, l1b_ref, l2w_ref, l2b_ref,   # LSTM (i, g, o gates)
    g2w1_ref, g2b1_ref, g2w2_ref, g2b2_ref,             # GAM2 channel attention
    g2w3_ref, g2b3_ref, g2w4_ref, g2b4_ref,             # GAM2 spatial attention
    regw_ref, regb_ref,                                 # regressor
    out_ref,                                            # (B, 128) lane-dense output
    *, B, IC, S, H):
    f32 = jnp.float32
    S2 = S // 2
    S4 = S2 // 2
    P1 = S4 * S4
    NL = B * S2 * S2                    # conv-stage row / lane count

    # --- SwinExtractor stand-in: lane-dense GAP + Linear via VPU broadcast-FMAs ---
    def extract(img_ref):
        pooled = jnp.mean(img_ref[...], axis=1, keepdims=True)          # (B*IC, 1)
        z = pooled * sww_ref[...]                                       # (B*IC, S*S)
        segs = [jnp.sum(z[b * IC:(b + 1) * IC, :], axis=0, keepdims=True)
                for b in range(B)]
        return jnp.concatenate(segs, axis=1) + swb_ref[...]             # (1, B*S*S)

    f0 = jnp.concatenate([extract(gasf_ref), extract(mtf_ref)], axis=0)  # (2, B*S*S)

    # --- Conv1x1(2->C1)+BN+ReLU: pointwise -> two f32 VPU FMAs (no degenerate matmul) ---
    y = jnp.maximum(w1t_ref[:, 0:1] * f0[0:1, :]
                    + w1t_ref[:, 1:2] * f0[1:2, :] + b1c_ref[...], 0.0)  # (C1, B*S*S)

    # --- EDF: 2x2 patch-merge as one 0/1 lane-regroup matmul, then Linear(4C1 -> 2C1) ---
    ybig = _mm(y, selbig_ref[...])                                       # (C1, 4*NL)
    et = bec_ref[...]                                                    # (2C1, 1)
    for t in range(4):                                                   # (dh, dw) blocks
        et = et + _mm(wet_ref[t], ybig[:, t * NL:(t + 1) * NL])          # (2C1, NL)

    # --- switch spatial onto rows: single 2-D transpose ---
    e = jnp.transpose(et)                                                # (NL, 2C1)

    # --- Conv3x3(+BN)+ReLU: shifted-row taps + border masks (zero padding),
    #     3 kw taps merged per kh row -> 3 matmuls ---
    C2 = b2r_ref.shape[-1]
    acc = jnp.zeros((NL, C2), f32)
    for r, di in enumerate((-1, 0, 1)):
        taps = []
        for dj in (-1, 0, 1):
            t = (di + 1) * 3 + (dj + 1)
            taps.append(_shift_rows(e, S2 * di + dj) * cmask_ref[:, t:t + 1])
        acc = acc + _mm(jnp.concatenate(taps, axis=1), w2_ref[r])        # (NL, C2)
    c = jnp.maximum(acc + b2r_ref[...], 0.0)

    # --- MaxPool2d(2,2): two shifted maxima + one 0/1 row-selection matmul ---
    m = jnp.maximum(c, _shift_rows(c, 1))
    m = jnp.maximum(m, _shift_rows(m, S2))
    p = _mm(selpool_ref[...], m)                                         # (B*P1, C2)

    # --- GAM1 (vectorized; no per-pixel loops) ---
    gap = jnp.concatenate(
        [jnp.mean(p[b * P1:(b + 1) * P1, :], axis=0, keepdims=True) for b in range(B)],
        axis=0)                                                          # (B, C2)
    ca = jax.nn.sigmoid(
        _mm(jnp.maximum(_mm(gap, g1w1_ref[...]) + g1b1_ref[...], 0.0), g1w2_ref[...])
        + g1b2_ref[...])                                                 # (B, C2)
    ca_rows = jnp.concatenate(
        [jnp.broadcast_to(ca[b:b + 1, :], (P1, C2)) for b in range(B)], axis=0)
    xc = p * ca_rows                                                     # (B*P1, C2)
    hs = jnp.maximum(_mm(xc, g1w3_ref[...]) + g1b3_ref[...], 0.0)
    sa = jax.nn.sigmoid(jnp.sum(hs * g1w4_ref[...], axis=-1, keepdims=True)
                        + g1b4_ref[...])
    y1 = xc * sa                                                         # (B*P1, C2)

    # --- LSTM layer-0 input: fold (B*P1, C2) rows into a single (B, P1*C2) operand ---
    rows = []
    for b in range(B):
        pieces = [y1[b * P1 + q:b * P1 + q + 1, :] for q in range(P1)]
        rows.append(jnp.concatenate(pieces, axis=1))                     # (1, P1*C2)
    lstm_in = jnp.concatenate(rows, axis=0)                              # (B, P1*C2)

    # --- 3-layer LSTM, seq_len==1, zero init state: gates = x@W_ih + b, h = o*tanh(i*g)
    #     (W_hh matmuls and the f gate contribute nothing and are dropped) ---
    def lstm_layer(x, w_ref, b_ref):
        g = _mm(x, w_ref[...]) + b_ref[...]
        i = jax.nn.sigmoid(g[:, :H])
        gg = jnp.tanh(g[:, H:2 * H])
        o = jax.nn.sigmoid(g[:, 2 * H:])
        return o * jnp.tanh(i * gg)

    h = lstm_layer(lstm_in, l0w_ref, l0b_ref)
    h = lstm_layer(h, l1w_ref, l1b_ref)       # inter-layer dropout(0.25): identity (eval)
    h = lstm_layer(h, l2w_ref, l2b_ref)

    # --- GAM2 on (B, H) (1x1 spatial => GAP is identity) ---
    ca2 = jax.nn.sigmoid(
        _mm(jnp.maximum(_mm(h, g2w1_ref[...]) + g2b1_ref[...], 0.0), g2w2_ref[...])
        + g2b2_ref[...])
    xh = h * ca2
    hs2 = jnp.maximum(_mm(xh, g2w3_ref[...]) + g2b3_ref[...], 0.0)
    sa2 = jax.nn.sigmoid(jnp.sum(hs2 * g2w4_ref[...], axis=-1, keepdims=True)
                         + g2b4_ref[...])
    y2 = xh * sa2                                                        # (B, H)

    # --- regressor: Dropout(0.5) (eval identity) + Linear(H, 1) as a lane reduction ---
    r = jnp.sum(y2 * regw_ref[...], axis=-1, keepdims=True) + regb_ref[...]   # (B, 1)
    out_ref[...] = jnp.broadcast_to(r, out_ref.shape)                    # lane-dense store


# ----------------------------------------------------------------------------
# parameter / constant construction (deterministic, synthetic weights)
# ----------------------------------------------------------------------------
def init_params(key, cfg):
    IC, S = cfg["img_c"], cfg["feat_hw"]
    FD = cfg["feat_dim"]
    assert FD == S * S
    C1, C2, H, R = cfg["c1"], cfg["c2"], cfg["hidden"], cfg["reduction"]
    B = cfg["batch"]
    S2, S4 = S // 2, S // 4
    P1 = S4 * S4
    Cin = 2 * C1
    NL = B * S2 * S2
    bf16, f32 = jnp.bfloat16, jnp.float32
    ks = iter(jax.random.split(key, 24))

    def dense(k, fan_in, shape):
        return jax.random.normal(k, shape, f32) / jnp.sqrt(float(fan_in))

    bn_scale = 1.0 / np.sqrt(1.0 + 1e-5)   # eval BatchNorm with default running stats

    p = {}
    # SwinExtractor stand-in Linear(img_c -> feat_dim), pre-tiled per (b, c) row / per-b lanes.
    sw = dense(next(ks), IC, (IC, FD))
    sb = dense(next(ks), FD, (1, FD)) * 0.1
    p["sww"] = jnp.tile(sw, (B, 1))                      # (B*IC, FD)
    p["swb"] = jnp.tile(sb, (1, B))                      # (1, B*FD)

    # Conv2d(2, C1, 1) + BN folded; stored transposed (C1, 2) for the VPU FMA path.
    p["w1t"] = dense(next(ks), 2, (C1, 2)) * bn_scale
    p["b1c"] = jnp.zeros((C1, 1), f32)

    # EDF: 0/1 lane-regroup matrix ((b,i,j) -> ((dh,dw),(b,i2,j2))) + reduction Linear,
    # transposed and split into the 4 (dh, dw) blocks (PyTorch EDF ordering: dh, dw, c).
    sel = np.zeros((B * S * S, 4 * NL), np.float32)
    for b in range(B):
        for i2 in range(S2):
            for j2 in range(S2):
                for dh in range(2):
                    for dw in range(2):
                        src = b * S * S + (2 * i2 + dh) * S + (2 * j2 + dw)
                        dst = (dh * 2 + dw) * NL + b * S2 * S2 + i2 * S2 + j2
                        sel[src, dst] = 1.0
    p["selbig"] = jnp.asarray(sel, bf16)
    p["wet"] = dense(next(ks), 4 * C1, (4, Cin, C1)).astype(bf16)
    p["bec"] = dense(next(ks), 4 * C1, (Cin, 1))

    # Conv2d(Cin, C2, 3, pad=1) + BN folded; per kh row the 3 kw taps are merged: (3, 3*Cin, C2).
    p["w2"] = (dense(next(ks), 9 * Cin, (3, 3 * Cin, C2)) * bn_scale).astype(bf16)
    p["b2r"] = jnp.zeros((1, C2), f32)

    # conv zero-padding border masks (one column per tap) and maxpool 0/1 row selection.
    mask = np.zeros((NL, 9), np.float32)
    for b in range(B):
        for i in range(S2):
            for j in range(S2):
                row = b * S2 * S2 + i * S2 + j
                for di in (-1, 0, 1):
                    for dj in (-1, 0, 1):
                        if 0 <= i + di < S2 and 0 <= j + dj < S2:
                            mask[row, (di + 1) * 3 + (dj + 1)] = 1.0
    p["cmask"] = jnp.asarray(mask, np.float32)
    selp = np.zeros((B * P1, NL), np.float32)
    for b in range(B):
        for i2 in range(S4):
            for j2 in range(S4):
                selp[b * P1 + i2 * S4 + j2,
                     b * S2 * S2 + (2 * i2) * S2 + 2 * j2] = 1.0
    p["selpool"] = jnp.asarray(selp, bf16)

    def gam(kk, C):
        k1, k2, k3, k4 = jax.random.split(kk, 4)
        Cr = C // R
        return dict(
            w1=dense(k1, C, (C, Cr)).astype(bf16), b1=jnp.zeros((1, Cr), f32),
            w2=dense(k2, Cr, (Cr, C)).astype(bf16), b2=jnp.zeros((1, C), f32),
            w3=dense(k3, C, (C, Cr)).astype(bf16), b3=jnp.zeros((1, Cr), f32),
            # (Cr -> 1) spatial logit kept as an f32 row for an in-kernel lane reduction.
            w4=dense(k4, Cr, (1, Cr)), b4=jnp.zeros((1, 1), f32))

    p["gam1"] = gam(next(ks), C2)
    p["gam2"] = gam(next(ks), H)

    # 3-layer LSTM (seq_len == 1, zero initial state): only the (i, g, o) gate rows are
    # materialised, transposed to (in, 3H).  Layer-0 rows are (pixel, channel) ordered --
    # a pure row permutation of PyTorch's (channel, pixel) flatten, absorbed into the
    # synthetic weight layout.
    lstm = []
    for layer in range(3):
        k1, k2, k3 = jax.random.split(next(ks), 3)
        fan = P1 * C2 if layer == 0 else H
        w = dense(k1, fan, (fan, 3 * H)).astype(bf16)
        bb = dense(k2, H, (1, 3 * H)) + dense(k3, H, (1, 3 * H))   # b_ih + b_hh
        lstm.append((w, bb))
    p["lstm"] = lstm

    # regressor Linear(H, 1) as an f32 row for an in-kernel lane reduction.
    p["regw"] = dense(next(ks), H, (1, H))
    p["regb"] = jnp.zeros((1, 1), f32)
    return p


# ----------------------------------------------------------------------------
# forward pass (one pallas_call; host side does only free reshapes + final slice)
# ----------------------------------------------------------------------------
def swin_cnn_lstm_gam_forward(gasf, mtf, params, cfg):
    B, IC = gasf.shape[0], gasf.shape[1]
    HW2 = gasf.shape[2] * gasf.shape[3]
    S, H = cfg["feat_hw"], cfg["hidden"]
    g1, g2 = params["gam1"], params["gam2"]
    (l0w, l0b), (l1w, l1b), (l2w, l2b) = params["lstm"]

    args = (gasf.reshape(B * IC, HW2).astype(jnp.float32),
            mtf.reshape(B * IC, HW2).astype(jnp.float32),
            params["sww"], params["swb"], params["w1t"], params["b1c"],
            params["selbig"], params["wet"], params["bec"],
            params["w2"], params["b2r"], params["cmask"], params["selpool"],
            g1["w1"], g1["b1"], g1["w2"], g1["b2"], g1["w3"], g1["b3"], g1["w4"], g1["b4"],
            l0w, l0b, l1w, l1b, l2w, l2b,
            g2["w1"], g2["b1"], g2["w2"], g2["b2"], g2["w3"], g2["b3"], g2["w4"], g2["b4"],
            params["regw"], params["regb"])

    vmem = pl.BlockSpec(memory_space=pltpu.MemorySpace.VMEM)
    out = pl.pallas_call(
        functools.partial(_fused_kernel, B=B, IC=IC, S=S, H=H),
        out_shape=jax.ShapeDtypeStruct((B, 128), jnp.float32),
        in_specs=[vmem] * len(args),
        out_specs=vmem,
    )(*args)
    return out[:, :1]                                    # (B, 1)


# ----------------------------------------------------------------------------
if __name__ == "__main__":
    CFG = dict(
        img_c=3, img_hw=32,        # input images (scaled down from 3x256x256)
        feat_dim=256, feat_hw=16,  # feat_dim // feat_hw**2 == 1, like 1024 // 32**2
        c1=16,                     # orig 128
        c2=64,                     # orig 512
        hidden=64,                 # orig 1024
        reduction=4,
        batch=2,
    )

    key = jax.random.PRNGKey(0)
    k_p, k_g, k_m = jax.random.split(key, 3)
    params = init_params(k_p, CFG)

    B = CFG["batch"]
    gasf = jax.random.normal(k_g, (B, CFG["img_c"], CFG["img_hw"], CFG["img_hw"]), jnp.float32)
    mtf = jax.random.normal(k_m, (B, CFG["img_c"], CFG["img_hw"], CFG["img_hw"]), jnp.float32)

    fwd = jax.jit(lambda a, b: swin_cnn_lstm_gam_forward(a, b, params, CFG))
    out = jax.block_until_ready(fwd(gasf, mtf))
    assert out.shape == (B, 1), out.shape
    assert bool(jnp.all(jnp.isfinite(out)))
    print("KERNEL_OK")
</pallas_src>

<mosaic_0001>
module attributes {stable_mosaic.version = 11 : i64} {
  func.func @_fused_kernel(%arg0: memref<6x1024xf32, #tpu.memory_space<vmem>>, %arg1: memref<6x1024xf32, #tpu.memory_space<vmem>>, %arg2: memref<6x256xf32, #tpu.memory_space<vmem>>, %arg3: memref<1x512xf32, #tpu.memory_space<vmem>>, %arg4: memref<16x2xf32, #tpu.memory_space<vmem>>, %arg5: memref<16x1xf32, #tpu.memory_space<vmem>>, %arg6: memref<512x512xbf16, #tpu.memory_space<vmem>>, %arg7: memref<4x32x16xbf16, #tpu.memory_space<vmem>>, %arg8: memref<32x1xf32, #tpu.memory_space<vmem>>, %arg9: memref<3x96x64xbf16, #tpu.memory_space<vmem>>, %arg10: memref<1x64xf32, #tpu.memory_space<vmem>>, %arg11: memref<128x9xf32, #tpu.memory_space<vmem>>, %arg12: memref<32x128xbf16, #tpu.memory_space<vmem>>, %arg13: memref<64x16xbf16, #tpu.memory_space<vmem>>, %arg14: memref<1x16xf32, #tpu.memory_space<vmem>>, %arg15: memref<16x64xbf16, #tpu.memory_space<vmem>>, %arg16: memref<1x64xf32, #tpu.memory_space<vmem>>, %arg17: memref<64x16xbf16, #tpu.memory_space<vmem>>, %arg18: memref<1x16xf32, #tpu.memory_space<vmem>>, %arg19: memref<1x16xf32, #tpu.memory_space<vmem>>, %arg20: memref<1x1xf32, #tpu.memory_space<vmem>>, %arg21: memref<1024x192xbf16, #tpu.memory_space<vmem>>, %arg22: memref<1x192xf32, #tpu.memory_space<vmem>>, %arg23: memref<64x192xbf16, #tpu.memory_space<vmem>>, %arg24: memref<1x192xf32, #tpu.memory_space<vmem>>, %arg25: memref<64x192xbf16, #tpu.memory_space<vmem>>, %arg26: memref<1x192xf32, #tpu.memory_space<vmem>>, %arg27: memref<64x16xbf16, #tpu.memory_space<vmem>>, %arg28: memref<1x16xf32, #tpu.memory_space<vmem>>, %arg29: memref<16x64xbf16, #tpu.memory_space<vmem>>, %arg30: memref<1x64xf32, #tpu.memory_space<vmem>>, %arg31: memref<64x16xbf16, #tpu.memory_space<vmem>>, %arg32: memref<1x16xf32, #tpu.memory_space<vmem>>, %arg33: memref<1x16xf32, #tpu.memory_space<vmem>>, %arg34: memref<1x1xf32, #tpu.memory_space<vmem>>, %arg35: memref<1x64xf32, #tpu.memory_space<vmem>>, %arg36: memref<1x1xf32, #tpu.memory_space<vmem>>, %arg37: memref<2x128xf32, #tpu.memory_space<vmem>>) attributes {dimension_semantics = [], scalar_prefetch = 0 : i64, scratch_operands = 0 : i64, tpu.core_type = #tpu.core_type<tc>} {
    %c0 = arith.constant 0 : index
    %c0_0 = arith.constant 0 : index
    %0 = vector.load %arg0[%c0, %c0_0] : memref<6x1024xf32, #tpu.memory_space<vmem>>, vector<6x1024xf32>
    %cst = arith.constant dense<0.000000e+00> : vector<6xf32>
    %1 = vector.multi_reduction <add>, %0, %cst [1] : vector<6x1024xf32> to vector<6xf32>
    %2 = vector.shape_cast %1 : vector<6xf32> to vector<6x1xf32>
    %cst_1 = arith.constant 1.024000e+03 : f32
    %3 = vector.broadcast %cst_1 : f32 to vector<6x1xf32>
    %4 = arith.divf %2, %3 : vector<6x1xf32>
    %c0_2 = arith.constant 0 : index
    %c0_3 = arith.constant 0 : index
    %5 = vector.load %arg2[%c0_2, %c0_3] : memref<6x256xf32, #tpu.memory_space<vmem>>, vector<6x256xf32>
    %6 = vector.broadcast %4 : vector<6x1xf32> to vector<6x256xf32>
    %7 = arith.mulf %6, %5 : vector<6x256xf32>
    %8 = vector.extract_strided_slice %7 {offsets = [0, 0], sizes = [3, 256], strides = [1, 1]} : vector<6x256xf32> to vector<3x256xf32>
    %cst_4 = arith.constant dense<0.000000e+00> : vector<256xf32>
    %9 = vector.multi_reduction <add>, %8, %cst_4 [0] : vector<3x256xf32> to vector<256xf32>
    %10 = vector.shape_cast %9 : vector<256xf32> to vector<1x256xf32>
    %11 = vector.extract_strided_slice %7 {offsets = [3, 0], sizes = [3, 256], strides = [1, 1]} : vector<6x256xf32> to vector<3x256xf32>
    %cst_5 = arith.constant dense<0.000000e+00> : vector<256xf32>
    %12 = vector.multi_reduction <add>, %11, %cst_5 [0] : vector<3x256xf32> to vector<256xf32>
    %13 = vector.shape_cast %12 : vector<256xf32> to vector<1x256xf32>
    %14 = tpu.concatenate %10, %13 in 1 : vector<1x256xf32>, vector<1x256xf32> -> vector<1x512xf32>
    %c0_6 = arith.constant 0 : index
    %c0_7 = arith.constant 0 : index
    %15 = vector.load %arg3[%c0_6, %c0_7] : memref<1x512xf32, #tpu.memory_space<vmem>>, vector<1x512xf32>
    %16 = arith.addf %14, %15 : vector<1x512xf32>
    %c0_8 = arith.constant 0 : index
    %c0_9 = arith.constant 0 : index
    %17 = vector.load %arg1[%c0_8, %c0_9] : memref<6x1024xf32, #tpu.memory_space<vmem>>, vector<6x1024xf32>
    %cst_10 = arith.constant dense<0.000000e+00> : vector<6xf32>
    %18 = vector.multi_reduction <add>, %17, %cst_10 [1] : vector<6x1024xf32> to vector<6xf32>
    %19 = vector.shape_cast %18 : vector<6xf32> to vector<6x1xf32>
    %cst_11 = arith.constant 1.024000e+03 : f32
    %20 = vector.broadcast %cst_11 : f32 to vector<6x1xf32>
    %21 = arith.divf %19, %20 : vector<6x1xf32>
    %c0_12 = arith.constant 0 : index
    %c0_13 = arith.constant 0 : index
    %22 = vector.load %arg2[%c0_12, %c0_13] : memref<6x256xf32, #tpu.memory_space<vmem>>, vector<6x256xf32>
    %23 = vector.broadcast %21 : vector<6x1xf32> to vector<6x256xf32>
    %24 = arith.mulf %23, %22 : vector<6x256xf32>
    %25 = vector.extract_strided_slice %24 {offsets = [0, 0], sizes = [3, 256], strides = [1, 1]} : vector<6x256xf32> to vector<3x256xf32>
    %cst_14 = arith.constant dense<0.000000e+00> : vector<256xf32>
    %26 = vector.multi_reduction <add>, %25, %cst_14 [0] : vector<3x256xf32> to vector<256xf32>
    %27 = vector.shape_cast %26 : vector<256xf32> to vector<1x256xf32>
    %28 = vector.extract_strided_slice %24 {offsets = [3, 0], sizes = [3, 256], strides = [1, 1]} : vector<6x256xf32> to vector<3x256xf32>
    %cst_15 = arith.constant dense<0.000000e+00> : vector<256xf32>
    %29 = vector.multi_reduction <add>, %28, %cst_15 [0] : vector<3x256xf32> to vector<256xf32>
    %30 = vector.shape_cast %29 : vector<256xf32> to vector<1x256xf32>
    %31 = tpu.concatenate %27, %30 in 1 : vector<1x256xf32>, vector<1x256xf32> -> vector<1x512xf32>
    %c0_16 = arith.constant 0 : index
    %c0_17 = arith.constant 0 : index
    %32 = vector.load %arg3[%c0_16, %c0_17] : memref<1x512xf32, #tpu.memory_space<vmem>>, vector<1x512xf32>
    %33 = arith.addf %31, %32 : vector<1x512xf32>
    %34 = tpu.concatenate %16, %33 in 0 : vector<1x512xf32>, vector<1x512xf32> -> vector<2x512xf32>
    %c0_18 = arith.constant 0 : index
    %c0_19 = arith.constant 0 : index
    %35 = vector.load %arg4[%c0_18, %c0_19] : memref<16x2xf32, #tpu.memory_space<vmem>>, vector<16x1xf32>
    %36 = vector.extract_strided_slice %34 {offsets = [0, 0], sizes = [1, 512], strides = [1, 1]} : vector<2x512xf32> to vector<1x512xf32>
    %37 = vector.broadcast %35 : vector<16x1xf32> to vector<16x512xf32>
    %38 = vector.broadcast %36 : vector<1x512xf32> to vector<16x512xf32>
    %39 = arith.mulf %37, %38 : vector<16x512xf32>
    %c0_20 = arith.constant 0 : index
    %c1 = arith.constant 1 : index
    %40 = vector.load %arg4[%c0_20, %c1] : memref<16x2xf32, #tpu.memory_space<vmem>>, vector<16x1xf32>
    %41 = vector.extract_strided_slice %34 {offsets = [1, 0], sizes = [1, 512], strides = [1, 1]} : vector<2x512xf32> to vector<1x512xf32>
    %42 = vector.broadcast %40 : vector<16x1xf32> to vector<16x512xf32>
    %43 = vector.broadcast %41 : vector<1x512xf32> to vector<16x512xf32>
    %44 = arith.mulf %42, %43 : vector<16x512xf32>
    %45 = arith.addf %39, %44 : vector<16x512xf32>
    %c0_21 = arith.constant 0 : index
    %c0_22 = arith.constant 0 : index
    %46 = vector.load %arg5[%c0_21, %c0_22] : memref<16x1xf32, #tpu.memory_space<vmem>>, vector<16x1xf32>
    %47 = vector.broadcast %46 : vector<16x1xf32> to vector<16x512xf32>
    %48 = arith.addf %45, %47 : vector<16x512xf32>
    %cst_23 = arith.constant 0.000000e+00 : f32
    %49 = vector.broadcast %cst_23 : f32 to vector<16x512xf32>
    %50 = arith.maximumf %48, %49 : vector<16x512xf32>
    %c0_24 = arith.constant 0 : index
    %c0_25 = arith.constant 0 : index
    %51 = vector.load %arg6[%c0_24, %c0_25] : memref<512x512xbf16, #tpu.memory_space<vmem>>, vector<512x512xbf16>
    %52 = arith.truncf %50 : vector<16x512xf32> to vector<16x512xbf16>
    %cst_26 = arith.constant dense<0.000000e+00> : vector<16x512xf32>
    %53 = tpu.matmul %52, %51, %cst_26 {dimension_numbers = #tpu.dot_dimension_numbers<[1], [0], [0], [1], [0, 0, 1, 1], [], []>} : vector<16x512xbf16>, vector<512x512xbf16>, vector<16x512xf32> -> vector<16x512xf32>
    %c0_27 = arith.constant 0 : index
    %c0_28 = arith.constant 0 : index
    %54 = vector.load %arg8[%c0_27, %c0_28] : memref<32x1xf32, #tpu.memory_space<vmem>>, vector<32x1xf32>
    %c0_29 = arith.constant 0 : index
    %c0_30 = arith.constant 0 : index
    %c0_31 = arith.constant 0 : index
    %55 = vector.load %arg7[%c0_29, %c0_30, %c0_31] : memref<4x32x16xbf16, #tpu.memory_space<vmem>>, vector<1x32x16xbf16>
    %56 = vector.shape_cast %55 : vector<1x32x16xbf16> to vector<32x16xbf16>
    %57 = vector.extract_strided_slice %53 {offsets = [0, 0], sizes = [16, 128], strides = [1, 1]} : vector<16x512xf32> to vector<16x128xf32>
    %58 = arith.truncf %57 : vector<16x128xf32> to vector<16x128xbf16>
    %cst_32 = arith.constant dense<0.000000e+00> : vector<32x128xf32>
    %59 = tpu.matmul %56, %58, %cst_32 {dimension_numbers = #tpu.dot_dimension_numbers<[1], [0], [0], [1], [0, 0, 1, 1], [], []>} : vector<32x16xbf16>, vector<16x128xbf16>, vector<32x128xf32> -> vector<32x128xf32>
    %60 = vector.broadcast %54 : vector<32x1xf32> to vector<32x128xf32>
    %61 = arith.addf %60, %59 : vector<32x128xf32>
    %c1_33 = arith.constant 1 : index
    %c0_34 = arith.constant 0 : index
    %c0_35 = arith.constant 0 : index
    %62 = vector.load %arg7[%c1_33, %c0_34, %c0_35] : memref<4x32x16xbf16, #tpu.memory_space<vmem>>, vector<1x32x16xbf16>
    %63 = vector.shape_cast %62 : vector<1x32x16xbf16> to vector<32x16xbf16>
    %64 = vector.extract_strided_slice %53 {offsets = [0, 128], sizes = [16, 128], strides = [1, 1]} : vector<16x512xf32> to vector<16x128xf32>
    %65 = arith.truncf %64 : vector<16x128xf32> to vector<16x128xbf16>
    %cst_36 = arith.constant dense<0.000000e+00> : vector<32x128xf32>
    %66 = tpu.matmul %63, %65, %cst_36 {dimension_numbers = #tpu.dot_dimension_numbers<[1], [0], [0], [1], [0, 0, 1, 1], [], []>} : vector<32x16xbf16>, vector<16x128xbf16>, vector<32x128xf32> -> vector<32x128xf32>
    %67 = arith.addf %61, %66 : vector<32x128xf32>
    %c2 = arith.constant 2 : index
    %c0_37 = arith.constant 0 : index
    %c0_38 = arith.constant 0 : index
    %68 = vector.load %arg7[%c2, %c0_37, %c0_38] : memref<4x32x16xbf16, #tpu.memory_space<vmem>>, vector<1x32x16xbf16>
    %69 = vector.shape_cast %68 : vector<1x32x16xbf16> to vector<32x16xbf16>
    %70 = vector.extract_strided_slice %53 {offsets = [0, 256], sizes = [16, 128], strides = [1, 1]} : vector<16x512xf32> to vector<16x128xf32>
    %71 = arith.truncf %70 : vector<16x128xf32> to vector<16x128xbf16>
    %cst_39 = arith.constant dense<0.000000e+00> : vector<32x128xf32>
    %72 = tpu.matmul %69, %71, %cst_39 {dimension_numbers = #tpu.dot_dimension_numbers<[1], [0], [0], [1], [0, 0, 1, 1], [], []>} : vector<32x16xbf16>, vector<16x128xbf16>, vector<32x128xf32> -> vector<32x128xf32>
    %73 = arith.addf %67, %72 : vector<32x128xf32>
    %c3 = arith.constant 3 : index
    %c0_40 = arith.constant 0 : index
    %c0_41 = arith.constant 0 : index
    %74 = vector.load %arg7[%c3, %c0_40, %c0_41] : memref<4x32x16xbf16, #tpu.memory_space<vmem>>, vector<1x32x16xbf16>
    %75 = vector.shape_cast %74 : vector<1x32x16xbf16> to vector<32x16xbf16>
    %76 = vector.extract_strided_slice %53 {offsets = [0, 384], sizes = [16, 128], strides = [1, 1]} : vector<16x512xf32> to vector<16x128xf32>
    %77 = arith.truncf %76 : vector<16x128xf32> to vector<16x128xbf16>
    %cst_42 = arith.constant dense<0.000000e+00> : vector<32x128xf32>
    %78 = tpu.matmul %75, %77, %cst_42 {dimension_numbers = #tpu.dot_dimension_numbers<[1], [0], [0], [1], [0, 0, 1, 1], [], []>} : vector<32x16xbf16>, vector<16x128xbf16>, vector<32x128xf32> -> vector<32x128xf32>
    %79 = arith.addf %73, %78 : vector<32x128xf32>
    %80 = tpu.transpose %79, [1, 0] : vector<32x128xf32> -> vector<128x32xf32>
    %cst_43 = arith.constant 0.000000e+00 : f32
    %81 = vector.broadcast %cst_43 : f32 to vector<128x64xf32>
    %cst_44 = arith.constant 0.000000e+00 : f32
    %82 = vector.broadcast %cst_44 : f32 to vector<9x32xf32>
    %83 = vector.extract_strided_slice %80 {offsets = [0, 0], sizes = [119, 32], strides = [1, 1]} : vector<128x32xf32> to vector<119x32xf32>
    %84 = tpu.concatenate %82, %83 in 0 : vector<9x32xf32>, vector<119x32xf32> -> vector<128x32xf32>
    %c0_45 = arith.constant 0 : index
    %c0_46 = arith.constant 0 : index
    %85 = vector.load %arg11[%c0_45, %c0_46] : memref<128x9xf32, #tpu.memory_space<vmem>>, vector<128x1xf32>
    %86 = vector.broadcast %85 : vector<128x1xf32> to vector<128x32xf32>
    %87 = arith.mulf %84, %86 : vector<128x32xf32>
    %cst_47 = arith.constant 0.000000e+00 : f32
    %88 = vector.broadcast %cst_47 : f32 to vector<8x32xf32>
    %89 = vector.extract_strided_slice %80 {offsets = [0, 0], sizes = [120, 32], strides = [1, 1]} : vector<128x32xf32> to vector<120x32xf32>
    %90 = tpu.concatenate %88, %89 in 0 : vector<8x32xf32>, vector<120x32xf32> -> vector<128x32xf32>
    %c0_48 = arith.constant 0 : index
    %c1_49 = arith.constant 1 : index
    %91 = vector.load %arg11[%c0_48, %c1_49] : memref<128x9xf32, #tpu.memory_space<vmem>>, vector<128x1xf32>
    %92 = vector.broadcast %91 : vector<128x1xf32> to vector<128x32xf32>
    %93 = arith.mulf %90, %92 : vector<128x32xf32>
    %cst_50 = arith.constant 0.000000e+00 : f32
    %94 = vector.broadcast %cst_50 : f32 to vector<7x32xf32>
    %95 = vector.extract_strided_slice %80 {offsets = [0, 0], sizes = [121, 32], strides = [1, 1]} : vector<128x32xf32> to vector<121x32xf32>
    %96 = tpu.concatenate %94, %95 in 0 : vector<7x32xf32>, vector<121x32xf32> -> vector<128x32xf32>
    %c0_51 = arith.constant 0 : index
    %c2_52 = arith.constant 2 : index
    %97 = vector.load %arg11[%c0_51, %c2_52] : memref<128x9xf32, #tpu.memory_space<vmem>>, vector<128x1xf32>
    %98 = vector.broadcast %97 : vector<128x1xf32> to vector<128x32xf32>
    %99 = arith.mulf %96, %98 : vector<128x32xf32>
    %100 = tpu.concatenate %87, %93, %99 in 1 : vector<128x32xf32>, vector<128x32xf32>, vector<128x32xf32> -> vector<128x96xf32>
    %c0_53 = arith.constant 0 : index
    %c0_54 = arith.constant 0 : index
    %c0_55 = arith.constant 0 : index
    %101 = vector.load %arg9[%c0_53, %c0_54, %c0_55] : memref<3x96x64xbf16, #tpu.memory_space<vmem>>, vector<1x96x64xbf16>
    %102 = vector.shape_cast %101 : vector<1x96x64xbf16> to vector<96x64xbf16>
    %103 = arith.truncf %100 : vector<128x96xf32> to vector<128x96xbf16>
    %cst_56 = arith.constant dense<0.000000e+00> : vector<128x64xf32>
    %104 = tpu.matmul %103, %102, %cst_56 {dimension_numbers = #tpu.dot_dimension_numbers<[1], [0], [0], [1], [0, 0, 1, 1], [], []>} : vector<128x96xbf16>, vector<96x64xbf16>, vector<128x64xf32> -> vector<128x64xf32>
    %105 = arith.addf %81, %104 : vector<128x64xf32>
    %cst_57 = arith.constant 0.000000e+00 : f32
    %106 = vector.broadcast %cst_57 : f32 to vector<1x32xf32>
    %107 = vector.extract_strided_slice %80 {offsets = [0, 0], sizes = [127, 32], strides = [1, 1]} : vector<128x32xf32> to vector<127x32xf32>
    %108 = tpu.concatenate %106, %107 in 0 : vector<1x32xf32>, vector<127x32xf32> -> vector<128x32xf32>
    %c0_58 = arith.constant 0 : index
    %c3_59 = arith.constant 3 : index
    %109 = vector.load %arg11[%c0_58, %c3_59] : memref<128x9xf32, #tpu.memory_space<vmem>>, vector<128x1xf32>
    %110 = vector.broadcast %109 : vector<128x1xf32> to vector<128x32xf32>
    %111 = arith.mulf %108, %110 : vector<128x32xf32>
    %c0_60 = arith.constant 0 : index
    %c4 = arith.constant 4 : index
    %112 = vector.load %arg11[%c0_60, %c4] : memref<128x9xf32, #tpu.memory_space<vmem>>, vector<128x1xf32>
    %113 = vector.broadcast %112 : vector<128x1xf32> to vector<128x32xf32>
    %114 = arith.mulf %80, %113 : vector<128x32xf32>
    %cst_61 = arith.constant 0.000000e+00 : f32
    %115 = vector.broadcast %cst_61 : f32 to vector<1x32xf32>
    %116 = vector.extract_strided_slice %80 {offsets = [1, 0], sizes = [127, 32], strides = [1, 1]} : vector<128x32xf32> to vector<127x32xf32>
    %117 = tpu.concatenate %116, %115 in 0 : vector<127x32xf32>, vector<1x32xf32> -> vector<128x32xf32>
    %c0_62 = arith.constant 0 : index
    %c5 = arith.constant 5 : index
    %118 = vector.load %arg11[%c0_62, %c5] : memref<128x9xf32, #tpu.memory_space<vmem>>, vector<128x1xf32>
    %119 = vector.broadcast %118 : vector<128x1xf32> to vector<128x32xf32>
    %120 = arith.mulf %117, %119 : vector<128x32xf32>
    %121 = tpu.concatenate %111, %114, %120 in 1 : vector<128x32xf32>, vector<128x32xf32>, vector<128x32xf32> -> vector<128x96xf32>
    %c1_63 = arith.constant 1 : index
    %c0_64 = arith.constant 0 : index
    %c0_65 = arith.constant 0 : index
    %122 = vector.load %arg9[%c1_63, %c0_64, %c0_65] : memref<3x96x64xbf16, #tpu.memory_space<vmem>>, vector<1x96x64xbf16>
    %123 = vector.shape_cast %122 : vector<1x96x64xbf16> to vector<96x64xbf16>
    %124 = arith.truncf %121 : vector<128x96xf32> to vector<128x96xbf16>
    %cst_66 = arith.constant dense<0.000000e+00> : vector<128x64xf32>
    %125 = tpu.matmul %124, %123, %cst_66 {dimension_numbers = #tpu.dot_dimension_numbers<[1], [0], [0], [1], [0, 0, 1, 1], [], []>} : vector<128x96xbf16>, vector<96x64xbf16>, vector<128x64xf32> -> vector<128x64xf32>
    %126 = arith.addf %105, %125 : vector<128x64xf32>
    %cst_67 = arith.constant 0.000000e+00 : f32
    %127 = vector.broadcast %cst_67 : f32 to vector<7x32xf32>
    %128 = vector.extract_strided_slice %80 {offsets = [7, 0], sizes = [121, 32], strides = [1, 1]} : vector<128x32xf32> to vector<121x32xf32>
    %129 = tpu.concatenate %128, %127 in 0 : vector<121x32xf32>, vector<7x32xf32> -> vector<128x32xf32>
    %c0_68 = arith.constant 0 : index
    %c6 = arith.constant 6 : index
    %130 = vector.load %arg11[%c0_68, %c6] : memref<128x9xf32, #tpu.memory_space<vmem>>, vector<128x1xf32>
    %131 = vector.broadcast %130 : vector<128x1xf32> to vector<128x32xf32>
    %132 = arith.mulf %129, %131 : vector<128x32xf32>
    %cst_69 = arith.constant 0.000000e+00 : f32
    %133 = vector.broadcast %cst_69 : f32 to vector<8x32xf32>
    %134 = vector.extract_strided_slice %80 {offsets = [8, 0], sizes = [120, 32], strides = [1, 1]} : vector<128x32xf32> to vector<120x32xf32>
    %135 = tpu.concatenate %134, %133 in 0 : vector<120x32xf32>, vector<8x32xf32> -> vector<128x32xf32>
    %c0_70 = arith.constant 0 : index
    %c7 = arith.constant 7 : index
    %136 = vector.load %arg11[%c0_70, %c7] : memref<128x9xf32, #tpu.memory_space<vmem>>, vector<128x1xf32>
    %137 = vector.broadcast %136 : vector<128x1xf32> to vector<128x32xf32>
    %138 = arith.mulf %135, %137 : vector<128x32xf32>
    %cst_71 = arith.constant 0.000000e+00 : f32
    %139 = vector.broadcast %cst_71 : f32 to vector<9x32xf32>
    %140 = vector.extract_strided_slice %80 {offsets = [9, 0], sizes = [119, 32], strides = [1, 1]} : vector<128x32xf32> to vector<119x32xf32>
    %141 = tpu.concatenate %140, %139 in 0 : vector<119x32xf32>, vector<9x32xf32> -> vector<128x32xf32>
    %c0_72 = arith.constant 0 : index
    %c8 = arith.constant 8 : index
    %142 = vector.load %arg11[%c0_72, %c8] : memref<128x9xf32, #tpu.memory_space<vmem>>, vector<128x1xf32>
    %143 = vector.broadcast %142 : vector<128x1xf32> to vector<128x32xf32>
    %144 = arith.mulf %141, %143 : vector<128x32xf32>
    %145 = tpu.concatenate %132, %138, %144 in 1 : vector<128x32xf32>, vector<128x32xf32>, vector<128x32xf32> -> vector<128x96xf32>
    %c2_73 = arith.constant 2 : index
    %c0_74 = arith.constant 0 : index
    %c0_75 = arith.constant 0 : index
    %146 = vector.load %arg9[%c2_73, %c0_74, %c0_75] : memref<3x96x64xbf16, #tpu.memory_space<vmem>>, vector<1x96x64xbf16>
    %147 = vector.shape_cast %146 : vector<1x96x64xbf16> to vector<96x64xbf16>
    %148 = arith.truncf %145 : vector<128x96xf32> to vector<128x96xbf16>
    %cst_76 = arith.constant dense<0.000000e+00> : vector<128x64xf32>
    %149 = tpu.matmul %148, %147, %cst_76 {dimension_numbers = #tpu.dot_dimension_numbers<[1], [0], [0], [1], [0, 0, 1, 1], [], []>} : vector<128x96xbf16>, vector<96x64xbf16>, vector<128x64xf32> -> vector<128x64xf32>
    %150 = arith.addf %126, %149 : vector<128x64xf32>
    %c0_77 = arith.constant 0 : index
    %c0_78 = arith.constant 0 : index
    %151 = vector.load %arg10[%c0_77, %c0_78] : memref<1x64xf32, #tpu.memory_space<vmem>>, vector<1x64xf32>
    %152 = vector.broadcast %151 : vector<1x64xf32> to vector<128x64xf32>
    %153 = arith.addf %150, %152 : vector<128x64xf32>
    %cst_79 = arith.constant 0.000000e+00 : f32
    %154 = vector.broadcast %cst_79 : f32 to vector<128x64xf32>
    %155 = arith.maximumf %153, %154 : vector<128x64xf32>
    %cst_80 = arith.constant 0.000000e+00 : f32
    %156 = vector.broadcast %cst_80 : f32 to vector<1x64xf32>
    %157 = vector.extract_strided_slice %155 {offsets = [1, 0], sizes = [127, 64], strides = [1, 1]} : vector<128x64xf32> to vector<127x64xf32>
    %158 = tpu.concatenate %157, %156 in 0 : vector<127x64xf32>, vector<1x64xf32> -> vector<128x64xf32>
    %159 = arith.maximumf %155, %158 : vector<128x64xf32>
    %cst_81 = arith.constant 0.000000e+00 : f32
    %160 = vector.broadcast %cst_81 : f32 to vector<8x64xf32>
    %161 = vector.extract_strided_slice %159 {offsets = [8, 0], sizes = [120, 64], strides = [1, 1]} : vector<128x64xf32> to vector<120x64xf32>
    %162 = tpu.concatenate %161, %160 in 0 : vector<120x64xf32>, vector<8x64xf32> -> vector<128x64xf32>
    %163 = arith.maximumf %159, %162 : vector<128x64xf32>
    %c0_82 = arith.constant 0 : index
    %c0_83 = arith.constant 0 : index
    %164 = vector.load %arg12[%c0_82, %c0_83] : memref<32x128xbf16, #tpu.memory_space<vmem>>, vector<32x128xbf16>
    %165 = arith.truncf %163 : vector<128x64xf32> to vector<128x64xbf16>
    %cst_84 = arith.constant dense<0.000000e+00> : vector<32x64xf32>
    %166 = tpu.matmul %164, %165, %cst_84 {dimension_numbers = #tpu.dot_dimension_numbers<[1], [0], [0], [1], [0, 0, 1, 1], [], []>} : vector<32x128xbf16>, vector<128x64xbf16>, vector<32x64xf32> -> vector<32x64xf32>
    %167 = vector.extract_strided_slice %166 {offsets = [0, 0], sizes = [16, 64], strides = [1, 1]} : vector<32x64xf32> to vector<16x64xf32>
    %cst_85 = arith.constant dense<0.000000e+00> : vector<64xf32>
    %168 = vector.multi_reduction <add>, %167, %cst_85 [0] : vector<16x64xf32> to vector<64xf32>
    %169 = vector.shape_cast %168 : vector<64xf32> to vector<1x64xf32>
    %cst_86 = arith.constant 1.600000e+01 : f32
    %170 = vector.broadcast %cst_86 : f32 to vector<1x64xf32>
    %171 = arith.divf %169, %170 : vector<1x64xf32>
    %172 = vector.extract_strided_slice %166 {offsets = [16, 0], sizes = [16, 64], strides = [1, 1]} : vector<32x64xf32> to vector<16x64xf32>
    %cst_87 = arith.constant dense<0.000000e+00> : vector<64xf32>
    %173 = vector.multi_reduction <add>, %172, %cst_87 [0] : vector<16x64xf32> to vector<64xf32>
    %174 = vector.shape_cast %173 : vector<64xf32> to vector<1x64xf32>
    %cst_88 = arith.constant 1.600000e+01 : f32
    %175 = vector.broadcast %cst_88 : f32 to vector<1x64xf32>
    %176 = arith.divf %174, %175 : vector<1x64xf32>
    %177 = tpu.concatenate %171, %176 in 0 : vector<1x64xf32>, vector<1x64xf32> -> vector<2x64xf32>
    %c0_89 = arith.constant 0 : index
    %c0_90 = arith.constant 0 : index
    %178 = vector.load %arg13[%c0_89, %c0_90] : memref<64x16xbf16, #tpu.memory_space<vmem>>, vector<64x16xbf16>
    %179 = arith.truncf %177 : vector<2x64xf32> to vector<2x64xbf16>
    %cst_91 = arith.constant dense<0.000000e+00> : vector<2x16xf32>
    %180 = tpu.matmul %179, %178, %cst_91 {dimension_numbers = #tpu.dot_dimension_numbers<[1], [0], [0], [1], [0, 0, 1, 1], [], []>} : vector<2x64xbf16>, vector<64x16xbf16>, vector<2x16xf32> -> vector<2x16xf32>
    %c0_92 = arith.constant 0 : index
    %c0_93 = arith.constant 0 : index
    %181 = vector.load %arg14[%c0_92, %c0_93] : memref<1x16xf32, #tpu.memory_space<vmem>>, vector<1x16xf32>
    %182 = vector.broadcast %181 : vector<1x16xf32> to vector<2x16xf32>
    %183 = arith.addf %180, %182 : vector<2x16xf32>
    %cst_94 = arith.constant 0.000000e+00 : f32
    %184 = vector.broadcast %cst_94 : f32 to vector<2x16xf32>
    %185 = arith.maximumf %183, %184 : vector<2x16xf32>
    %c0_95 = arith.constant 0 : index
    %c0_96 = arith.constant 0 : index
    %186 = vector.load %arg15[%c0_95, %c0_96] : memref<16x64xbf16, #tpu.memory_space<vmem>>, vector<16x64xbf16>
    %187 = arith.truncf %185 : vector<2x16xf32> to vector<2x16xbf16>
    %cst_97 = arith.constant dense<0.000000e+00> : vector<2x64xf32>
    %188 = tpu.matmul %187, %186, %cst_97 {dimension_numbers = #tpu.dot_dimension_numbers<[1], [0], [0], [1], [0, 0, 1, 1], [], []>} : vector<2x16xbf16>, vector<16x64xbf16>, vector<2x64xf32> -> vector<2x64xf32>
    %c0_98 = arith.constant 0 : index
    %c0_99 = arith.constant 0 : index
    %189 = vector.load %arg16[%c0_98, %c0_99] : memref<1x64xf32, #tpu.memory_space<vmem>>, vector<1x64xf32>
    %190 = vector.broadcast %189 : vector<1x64xf32> to vector<2x64xf32>
    %191 = arith.addf %188, %190 : vector<2x64xf32>
    %192 = arith.negf %191 : vector<2x64xf32>
    %193 = math.exp %192 : vector<2x64xf32>
    %cst_100 = arith.constant 1.000000e+00 : f32
    %194 = vector.broadcast %cst_100 : f32 to vector<2x64xf32>
    %195 = arith.addf %194, %193 : vector<2x64xf32>
    %196 = arith.divf %194, %195 : vector<2x64xf32>
    %197 = vector.extract_strided_slice %196 {offsets = [0, 0], sizes = [1, 64], strides = [1, 1]} : vector<2x64xf32> to vector<1x64xf32>
    %198 = vector.shape_cast %197 : vector<1x64xf32> to vector<1x64xf32>
    %199 = vector.broadcast %198 : vector<1x64xf32> to vector<16x64xf32>
    %200 = vector.extract_strided_slice %196 {offsets = [1, 0], sizes = [1, 64], strides = [1, 1]} : vector<2x64xf32> to vector<1x64xf32>
    %201 = vector.shape_cast %200 : vector<1x64xf32> to vector<1x64xf32>
    %202 = vector.broadcast %201 : vector<1x64xf32> to vector<16x64xf32>
    %203 = tpu.concatenate %199, %202 in 0 : vector<16x64xf32>, vector<16x64xf32> -> vector<32x64xf32>
    %204 = arith.mulf %166, %203 : vector<32x64xf32>
    %c0_101 = arith.constant 0 : index
    %c0_102 = arith.constant 0 : index
    %205 = vector.load %arg17[%c0_101, %c0_102] : memref<64x16xbf16, #tpu.memory_space<vmem>>, vector<64x16xbf16>
    %206 = arith.truncf %204 : vector<32x64xf32> to vector<32x64xbf16>
    %cst_103 = arith.constant dense<0.000000e+00> : vector<32x16xf32>
    %207 = tpu.matmul %206, %205, %cst_103 {dimension_numbers = #tpu.dot_dimension_numbers<[1], [0], [0], [1], [0, 0, 1, 1], [], []>} : vector<32x64xbf16>, vector<64x16xbf16>, vector<32x16xf32> -> vector<32x16xf32>
    %c0_104 = arith.constant 0 : index
    %c0_105 = arith.constant 0 : index
    %208 = vector.load %arg18[%c0_104, %c0_105] : memref<1x16xf32, #tpu.memory_space<vmem>>, vector<1x16xf32>
    %209 = vector.broadcast %208 : vector<1x16xf32> to vector<32x16xf32>
    %210 = arith.addf %207, %209 : vector<32x16xf32>
    %cst_106 = arith.constant 0.000000e+00 : f32
    %211 = vector.broadcast %cst_106 : f32 to vector<32x16xf32>
    %212 = arith.maximumf %210, %211 : vector<32x16xf32>
    %c0_107 = arith.constant 0 : index
    %c0_108 = arith.constant 0 : index
    %213 = vector.load %arg19[%c0_107, %c0_108] : memref<1x16xf32, #tpu.memory_space<vmem>>, vector<1x16xf32>
    %214 = vector.broadcast %213 : vector<1x16xf32> to vector<32x16xf32>
    %215 = arith.mulf %212, %214 : vector<32x16xf32>
    %cst_109 = arith.constant dense<0.000000e+00> : vector<32xf32>
    %216 = vector.multi_reduction <add>, %215, %cst_109 [1] : vector<32x16xf32> to vector<32xf32>
    %217 = vector.shape_cast %216 : vector<32xf32> to vector<32x1xf32>
    %c0_110 = arith.constant 0 : index
    %c0_111 = arith.constant 0 : index
    %218 = vector.load %arg20[%c0_110, %c0_111] : memref<1x1xf32, #tpu.memory_space<vmem>>, vector<1x1xf32>
    %219 = vector.broadcast %218 : vector<1x1xf32> to vector<32x1xf32>
    %220 = arith.addf %217, %219 : vector<32x1xf32>
    %221 = arith.negf %220 : vector<32x1xf32>
    %222 = math.exp %221 : vector<32x1xf32>
    %cst_112 = arith.constant 1.000000e+00 : f32
    %223 = vector.broadcast %cst_112 : f32 to vector<32x1xf32>
    %224 = arith.addf %223, %222 : vector<32x1xf32>
    %225 = arith.divf %223, %224 : vector<32x1xf32>
    %226 = vector.broadcast %225 : vector<32x1xf32> to vector<32x64xf32>
    %227 = arith.mulf %204, %226 : vector<32x64xf32>
    %228 = vector.extract_strided_slice %227 {offsets = [0, 0], sizes = [1, 64], strides = [1, 1]} : vector<32x64xf32> to vector<1x64xf32>
    %229 = vector.extract_strided_slice %227 {offsets = [1, 0], sizes = [1, 64], strides = [1, 1]} : vector<32x64xf32> to vector<1x64xf32>
    %230 = vector.extract_strided_slice %227 {offsets = [2, 0], sizes = [1, 64], strides = [1, 1]} : vector<32x64xf32> to vector<1x64xf32>
    %231 = vector.extract_strided_slice %227 {offsets = [3, 0], sizes = [1, 64], strides = [1, 1]} : vector<32x64xf32> to vector<1x64xf32>
    %232 = vector.extract_strided_slice %227 {offsets = [4, 0], sizes = [1, 64], strides = [1, 1]} : vector<32x64xf32> to vector<1x64xf32>
    %233 = vector.extract_strided_slice %227 {offsets = [5, 0], sizes = [1, 64], strides = [1, 1]} : vector<32x64xf32> to vector<1x64xf32>
    %234 = vector.extract_strided_slice %227 {offsets = [6, 0], sizes = [1, 64], strides = [1, 1]} : vector<32x64xf32> to vector<1x64xf32>
    %235 = vector.extract_strided_slice %227 {offsets = [7, 0], sizes = [1, 64], strides = [1, 1]} : vector<32x64xf32> to vector<1x64xf32>
    %236 = vector.extract_strided_slice %227 {offsets = [8, 0], sizes = [1, 64], strides = [1, 1]} : vector<32x64xf32> to vector<1x64xf32>
    %237 = vector.extract_strided_slice %227 {offsets = [9, 0], sizes = [1, 64], strides = [1, 1]} : vector<32x64xf32> to vector<1x64xf32>
    %238 = vector.extract_strided_slice %227 {offsets = [10, 0], sizes = [1, 64], strides = [1, 1]} : vector<32x64xf32> to vector<1x64xf32>
    %239 = vector.extract_strided_slice %227 {offsets = [11, 0], sizes = [1, 64], strides = [1, 1]} : vector<32x64xf32> to vector<1x64xf32>
    %240 = vector.extract_strided_slice %227 {offsets = [12, 0], sizes = [1, 64], strides = [1, 1]} : vector<32x64xf32> to vector<1x64xf32>
    %241 = vector.extract_strided_slice %227 {offsets = [13, 0], sizes = [1, 64], strides = [1, 1]} : vector<32x64xf32> to vector<1x64xf32>
    %242 = vector.extract_strided_slice %227 {offsets = [14, 0], sizes = [1, 64], strides = [1, 1]} : vector<32x64xf32> to vector<1x64xf32>
    %243 = vector.extract_strided_slice %227 {offsets = [15, 0], sizes = [1, 64], strides = [1, 1]} : vector<32x64xf32> to vector<1x64xf32>
    %244 = tpu.concatenate %228, %229, %230, %231, %232, %233, %234, %235, %236, %237, %238, %239, %240, %241, %242, %243 in 1 : vector<1x64xf32>, vector<1x64xf32>, vector<1x64xf32>, vector<1x64xf32>, vector<1x64xf32>, vector<1x64xf32>, vector<1x64xf32>, vector<1x64xf32>, vector<1x64xf32>, vector<1x64xf32>, vector<1x64xf32>, vector<1x64xf32>, vector<1x64xf32>, vector<1x64xf32>, vector<1x64xf32>, vector<1x64xf32> -> vector<1x1024xf32>
    %245 = vector.extract_strided_slice %227 {offsets = [16, 0], sizes = [1, 64], strides = [1, 1]} : vector<32x64xf32> to vector<1x64xf32>
    %246 = vector.extract_strided_slice %227 {offsets = [17, 0], sizes = [1, 64], strides = [1, 1]} : vector<32x64xf32> to vector<1x64xf32>
    %247 = vector.extract_strided_slice %227 {offsets = [18, 0], sizes = [1, 64], strides = [1, 1]} : vector<32x64xf32> to vector<1x64xf32>
    %248 = vector.extract_strided_slice %227 {offsets = [19, 0], sizes = [1, 64], strides = [1, 1]} : vector<32x64xf32> to vector<1x64xf32>
    %249 = vector.extract_strided_slice %227 {offsets = [20, 0], sizes = [1, 64], strides = [1, 1]} : vector<32x64xf32> to vector<1x64xf32>
    %250 = vector.extract_strided_slice %227 {offsets = [21, 0], sizes = [1, 64], strides = [1, 1]} : vector<32x64xf32> to vector<1x64xf32>
    %251 = vector.extract_strided_slice %227 {offsets = [22, 0], sizes = [1, 64], strides = [1, 1]} : vector<32x64xf32> to vector<1x64xf32>
    %252 = vector.extract_strided_slice %227 {offsets = [23, 0], sizes = [1, 64], strides = [1, 1]} : vector<32x64xf32> to vector<1x64xf32>
    %253 = vector.extract_strided_slice %227 {offsets = [24, 0], sizes = [1, 64], strides = [1, 1]} : vector<32x64xf32> to vector<1x64xf32>
    %254 = vector.extract_strided_slice %227 {offsets = [25, 0], sizes = [1, 64], strides = [1, 1]} : vector<32x64xf32> to vector<1x64xf32>
    %255 = vector.extract_strided_slice %227 {offsets = [26, 0], sizes = [1, 64], strides = [1, 1]} : vector<32x64xf32> to vector<1x64xf32>
    %256 = vector.extract_strided_slice %227 {offsets = [27, 0], sizes = [1, 64], strides = [1, 1]} : vector<32x64xf32> to vector<1x64xf32>
    %257 = vector.extract_strided_slice %227 {offsets = [28, 0], sizes = [1, 64], strides = [1, 1]} : vector<32x64xf32> to vector<1x64xf32>
    %258 = vector.extract_strided_slice %227 {offsets = [29, 0], sizes = [1, 64], strides = [1, 1]} : vector<32x64xf32> to vector<1x64xf32>
    %259 = vector.extract_strided_slice %227 {offsets = [30, 0], sizes = [1, 64], strides = [1, 1]} : vector<32x64xf32> to vector<1x64xf32>
    %260 = vector.extract_strided_slice %227 {offsets = [31, 0], sizes = [1, 64], strides = [1, 1]} : vector<32x64xf32> to vector<1x64xf32>
    %261 = tpu.concatenate %245, %246, %247, %248, %249, %250, %251, %252, %253, %254, %255, %256, %257, %258, %259, %260 in 1 : vector<1x64xf32>, vector<1x64xf32>, vector<1x64xf32>, vector<1x64xf32>, vector<1x64xf32>, vector<1x64xf32>, vector<1x64xf32>, vector<1x64xf32>, vector<1x64xf32>, vector<1x64xf32>, vector<1x64xf32>, vector<1x64xf32>, vector<1x64xf32>, vector<1x64xf32>, vector<1x64xf32>, vector<1x64xf32> -> vector<1x1024xf32>
    %262 = tpu.concatenate %244, %261 in 0 : vector<1x1024xf32>, vector<1x1024xf32> -> vector<2x1024xf32>
    %c0_113 = arith.constant 0 : index
    %c0_114 = arith.constant 0 : index
    %263 = vector.load %arg21[%c0_113, %c0_114] : memref<1024x192xbf16, #tpu.memory_space<vmem>>, vector<1024x192xbf16>
    %264 = arith.truncf %262 : vector<2x1024xf32> to vector<2x1024xbf16>
    %cst_115 = arith.constant dense<0.000000e+00> : vector<2x192xf32>
    %265 = tpu.matmul %264, %263, %cst_115 {dimension_numbers = #tpu.dot_dimension_numbers<[1], [0], [0], [1], [0, 0, 1, 1], [], []>} : vector<2x1024xbf16>, vector<1024x192xbf16>, vector<2x192xf32> -> vector<2x192xf32>
    %c0_116 = arith.constant 0 : index
    %c0_117 = arith.constant 0 : index
    %266 = vector.load %arg22[%c0_116, %c0_117] : memref<1x192xf32, #tpu.memory_space<vmem>>, vector<1x192xf32>
    %267 = vector.broadcast %266 : vector<1x192xf32> to vector<2x192xf32>
    %268 = arith.addf %265, %267 : vector<2x192xf32>
    %269 = vector.extract_strided_slice %268 {offsets = [0, 0], sizes = [2, 64], strides = [1, 1]} : vector<2x192xf32> to vector<2x64xf32>
    %270 = arith.negf %269 : vector<2x64xf32>
    %271 = math.exp %270 : vector<2x64xf32>
    %cst_118 = arith.constant 1.000000e+00 : f32
    %272 = vector.broadcast %cst_118 : f32 to vector<2x64xf32>
    %273 = arith.addf %272, %271 : vector<2x64xf32>
    %274 = arith.divf %272, %273 : vector<2x64xf32>
    %275 = vector.extract_strided_slice %268 {offsets = [0, 64], sizes = [2, 64], strides = [1, 1]} : vector<2x192xf32> to vector<2x64xf32>
    %276 = math.tanh %275 : vector<2x64xf32>
    %277 = vector.extract_strided_slice %268 {offsets = [0, 128], sizes = [2, 64], strides = [1, 1]} : vector<2x192xf32> to vector<2x64xf32>
    %278 = arith.negf %277 : vector<2x64xf32>
    %279 = math.exp %278 : vector<2x64xf32>
    %cst_119 = arith.constant 1.000000e+00 : f32
    %280 = vector.broadcast %cst_119 : f32 to vector<2x64xf32>
    %281 = arith.addf %280, %279 : vector<2x64xf32>
    %282 = arith.divf %280, %281 : vector<2x64xf32>
    %283 = arith.mulf %274, %276 : vector<2x64xf32>
    %284 = math.tanh %283 : vector<2x64xf32>
    %285 = arith.mulf %282, %284 : vector<2x64xf32>
    %c0_120 = arith.constant 0 : index
    %c0_121 = arith.constant 0 : index
    %286 = vector.load %arg23[%c0_120, %c0_121] : memref<64x192xbf16, #tpu.memory_space<vmem>>, vector<64x192xbf16>
    %287 = arith.truncf %285 : vector<2x64xf32> to vector<2x64xbf16>
    %cst_122 = arith.constant dense<0.000000e+00> : vector<2x192xf32>
    %288 = tpu.matmul %287, %286, %cst_122 {dimension_numbers = #tpu.dot_dimension_numbers<[1], [0], [0], [1], [0, 0, 1, 1], [], []>} : vector<2x64xbf16>, vector<64x192xbf16>, vector<2x192xf32> -> vector<2x192xf32>
    %c0_123 = arith.constant 0 : index
    %c0_124 = arith.constant 0 : index
    %289 = vector.load %arg24[%c0_123, %c0_124] : memref<1x192xf32, #tpu.memory_space<vmem>>, vector<1x192xf32>
    %290 = vector.broadcast %289 : vector<1x192xf32> to vector<2x192xf32>
    %291 = arith.addf %288, %290 : vector<2x192xf32>
    %292 = vector.extract_strided_slice %291 {offsets = [0, 0], sizes = [2, 64], strides = [1, 1]} : vector<2x192xf32> to vector<2x64xf32>
    %293 = arith.negf %292 : vector<2x64xf32>
    %294 = math.exp %293 : vector<2x64xf32>
    %cst_125 = arith.constant 1.000000e+00 : f32
    %295 = vector.broadcast %cst_125 : f32 to vector<2x64xf32>
    %296 = arith.addf %295, %294 : vector<2x64xf32>
    %297 = arith.divf %295, %296 : vector<2x64xf32>
    %298 = vector.extract_strided_slice %291 {offsets = [0, 64], sizes = [2, 64], strides = [1, 1]} : vector<2x192xf32> to vector<2x64xf32>
    %299 = math.tanh %298 : vector<2x64xf32>
    %300 = vector.extract_strided_slice %291 {offsets = [0, 128], sizes = [2, 64], strides = [1, 1]} : vector<2x192xf32> to vector<2x64xf32>
    %301 = arith.negf %300 : vector<2x64xf32>
    %302 = math.exp %301 : vector<2x64xf32>
    %cst_126 = arith.constant 1.000000e+00 : f32
    %303 = vector.broadcast %cst_126 : f32 to vector<2x64xf32>
    %304 = arith.addf %303, %302 : vector<2x64xf32>
    %305 = arith.divf %303, %304 : vector<2x64xf32>
    %306 = arith.mulf %297, %299 : vector<2x64xf32>
    %307 = math.tanh %306 : vector<2x64xf32>
    %308 = arith.mulf %305, %307 : vector<2x64xf32>
    %c0_127 = arith.constant 0 : index
    %c0_128 = arith.constant 0 : index
    %309 = vector.load %arg25[%c0_127, %c0_128] : memref<64x192xbf16, #tpu.memory_space<vmem>>, vector<64x192xbf16>
    %310 = arith.truncf %308 : vector<2x64xf32> to vector<2x64xbf16>
    %cst_129 = arith.constant dense<0.000000e+00> : vector<2x192xf32>
    %311 = tpu.matmul %310, %309, %cst_129 {dimension_numbers = #tpu.dot_dimension_numbers<[1], [0], [0], [1], [0, 0, 1, 1], [], []>} : vector<2x64xbf16>, vector<64x192xbf16>, vector<2x192xf32> -> vector<2x192xf32>
    %c0_130 = arith.constant 0 : index
    %c0_131 = arith.constant 0 : index
    %312 = vector.load %arg26[%c0_130, %c0_131] : memref<1x192xf32, #tpu.memory_space<vmem>>, vector<1x192xf32>
    %313 = vector.broadcast %312 : vector<1x192xf32> to vector<2x192xf32>
    %314 = arith.addf %311, %313 : vector<2x192xf32>
    %315 = vector.extract_strided_slice %314 {offsets = [0, 0], sizes = [2, 64], strides = [1, 1]} : vector<2x192xf32> to vector<2x64xf32>
    %316 = arith.negf %315 : vector<2x64xf32>
    %317 = math.exp %316 : vector<2x64xf32>
    %cst_132 = arith.constant 1.000000e+00 : f32
    %318 = vector.broadcast %cst_132 : f32 to vector<2x64xf32>
    %319 = arith.addf %318, %317 : vector<2x64xf32>
    %320 = arith.divf %318, %319 : vector<2x64xf32>
    %321 = vector.extract_strided_slice %314 {offsets = [0, 64], sizes = [2, 64], strides = [1, 1]} : vector<2x192xf32> to vector<2x64xf32>
    %322 = math.tanh %321 : vector<2x64xf32>
    %323 = vector.extract_strided_slice %314 {offsets = [0, 128], sizes = [2, 64], strides = [1, 1]} : vector<2x192xf32> to vector<2x64xf32>
    %324 = arith.negf %323 : vector<2x64xf32>
    %325 = math.exp %324 : vector<2x64xf32>
    %cst_133 = arith.constant 1.000000e+00 : f32
    %326 = vector.broadcast %cst_133 : f32 to vector<2x64xf32>
    %327 = arith.addf %326, %325 : vector<2x64xf32>
    %328 = arith.divf %326, %327 : vector<2x64xf32>
    %329 = arith.mulf %320, %322 : vector<2x64xf32>
    %330 = math.tanh %329 : vector<2x64xf32>
    %331 = arith.mulf %328, %330 : vector<2x64xf32>
    %c0_134 = arith.constant 0 : index
    %c0_135 = arith.constant 0 : index
    %332 = vector.load %arg27[%c0_134, %c0_135] : memref<64x16xbf16, #tpu.memory_space<vmem>>, vector<64x16xbf16>
    %333 = arith.truncf %331 : vector<2x64xf32> to vector<2x64xbf16>
    %cst_136 = arith.constant dense<0.000000e+00> : vector<2x16xf32>
    %334 = tpu.matmul %333, %332, %cst_136 {dimension_numbers = #tpu.dot_dimension_numbers<[1], [0], [0], [1], [0, 0, 1, 1], [], []>} : vector<2x64xbf16>, vector<64x16xbf16>, vector<2x16xf32> -> vector<2x16xf32>
    %c0_137 = arith.constant 0 : index
    %c0_138 = arith.constant 0 : index
    %335 = vector.load %arg28[%c0_137, %c0_138] : memref<1x16xf32, #tpu.memory_space<vmem>>, vector<1x16xf32>
    %336 = vector.broadcast %335 : vector<1x16xf32> to vector<2x16xf32>
    %337 = arith.addf %334, %336 : vector<2x16xf32>
    %cst_139 = arith.constant 0.000000e+00 : f32
    %338 = vector.broadcast %cst_139 : f32 to vector<2x16xf32>
    %339 = arith.maximumf %337, %338 : vector<2x16xf32>
    %c0_140 = arith.constant 0 : index
    %c0_141 = arith.constant 0 : index
    %340 = vector.load %arg29[%c0_140, %c0_141] : memref<16x64xbf16, #tpu.memory_space<vmem>>, vector<16x64xbf16>
    %341 = arith.truncf %339 : vector<2x16xf32> to vector<2x16xbf16>
    %cst_142 = arith.constant dense<0.000000e+00> : vector<2x64xf32>
    %342 = tpu.matmul %341, %340, %cst_142 {dimension_numbers = #tpu.dot_dimension_numbers<[1], [0], [0], [1], [0, 0, 1, 1], [], []>} : vector<2x16xbf16>, vector<16x64xbf16>, vector<2x64xf32> -> vector<2x64xf32>
    %c0_143 = arith.constant 0 : index
    %c0_144 = arith.constant 0 : index
    %343 = vector.load %arg30[%c0_143, %c0_144] : memref<1x64xf32, #tpu.memory_space<vmem>>, vector<1x64xf32>
    %344 = vector.broadcast %343 : vector<1x64xf32> to vector<2x64xf32>
    %345 = arith.addf %342, %344 : vector<2x64xf32>
    %346 = arith.negf %345 : vector<2x64xf32>
    %347 = math.exp %346 : vector<2x64xf32>
    %cst_145 = arith.constant 1.000000e+00 : f32
    %348 = vector.broadcast %cst_145 : f32 to vector<2x64xf32>
    %349 = arith.addf %348, %347 : vector<2x64xf32>
    %350 = arith.divf %348, %349 : vector<2x64xf32>
    %351 = arith.mulf %331, %350 : vector<2x64xf32>
    %c0_146 = arith.constant 0 : index
    %c0_147 = arith.constant 0 : index
    %352 = vector.load %arg31[%c0_146, %c0_147] : memref<64x16xbf16, #tpu.memory_space<vmem>>, vector<64x16xbf16>
    %353 = arith.truncf %351 : vector<2x64xf32> to vector<2x64xbf16>
    %cst_148 = arith.constant dense<0.000000e+00> : vector<2x16xf32>
    %354 = tpu.matmul %353, %352, %cst_148 {dimension_numbers = #tpu.dot_dimension_numbers<[1], [0], [0], [1], [0, 0, 1, 1], [], []>} : vector<2x64xbf16>, vector<64x16xbf16>, vector<2x16xf32> -> vector<2x16xf32>
    %c0_149 = arith.constant 0 : index
    %c0_150 = arith.constant 0 : index
    %355 = vector.load %arg32[%c0_149, %c0_150] : memref<1x16xf32, #tpu.memory_space<vmem>>, vector<1x16xf32>
    %356 = vector.broadcast %355 : vector<1x16xf32> to vector<2x16xf32>
    %357 = arith.addf %354, %356 : vector<2x16xf32>
    %cst_151 = arith.constant 0.000000e+00 : f32
    %358 = vector.broadcast %cst_151 : f32 to vector<2x16xf32>
    %359 = arith.maximumf %357, %358 : vector<2x16xf32>
    %c0_152 = arith.constant 0 : index
    %c0_153 = arith.constant 0 : index
    %360 = vector.load %arg33[%c0_152, %c0_153] : memref<1x16xf32, #tpu.memory_space<vmem>>, vector<1x16xf32>
    %361 = vector.broadcast %360 : vector<1x16xf32> to vector<2x16xf32>
    %362 = arith.mulf %359, %361 : vector<2x16xf32>
    %cst_154 = arith.constant dense<0.000000e+00> : vector<2xf32>
    %363 = vector.multi_reduction <add>, %362, %cst_154 [1] : vector<2x16xf32> to vector<2xf32>
    %364 = vector.shape_cast %363 : vector<2xf32> to vector<2x1xf32>
    %c0_155 = arith.constant 0 : index
    %c0_156 = arith.constant 0 : index
    %365 = vector.load %arg34[%c0_155, %c0_156] : memref<1x1xf32, #tpu.memory_space<vmem>>, vector<1x1xf32>
    %366 = vector.broadcast %365 : vector<1x1xf32> to vector<2x1xf32>
    %367 = arith.addf %364, %366 : vector<2x1xf32>
    %368 = arith.negf %367 : vector<2x1xf32>
    %369 = math.exp %368 : vector<2x1xf32>
    %cst_157 = arith.constant 1.000000e+00 : f32
    %370 = vector.broadcast %cst_157 : f32 to vector<2x1xf32>
    %371 = arith.addf %370, %369 : vector<2x1xf32>
    %372 = arith.divf %370, %371 : vector<2x1xf32>
    %373 = vector.broadcast %372 : vector<2x1xf32> to vector<2x64xf32>
    %374 = arith.mulf %351, %373 : vector<2x64xf32>
    %c0_158 = arith.constant 0 : index
    %c0_159 = arith.constant 0 : index
    %375 = vector.load %arg35[%c0_158, %c0_159] : memref<1x64xf32, #tpu.memory_space<vmem>>, vector<1x64xf32>
    %376 = vector.broadcast %375 : vector<1x64xf32> to vector<2x64xf32>
    %377 = arith.mulf %374, %376 : vector<2x64xf32>
    %cst_160 = arith.constant dense<0.000000e+00> : vector<2xf32>
    %378 = vector.multi_reduction <add>, %377, %cst_160 [1] : vector<2x64xf32> to vector<2xf32>
    %379 = vector.shape_cast %378 : vector<2xf32> to vector<2x1xf32>
    %c0_161 = arith.constant 0 : index
    %c0_162 = arith.constant 0 : index
    %380 = vector.load %arg36[%c0_161, %c0_162] : memref<1x1xf32, #tpu.memory_space<vmem>>, vector<1x1xf32>
    %381 = vector.broadcast %380 : vector<1x1xf32> to vector<2x1xf32>
    %382 = arith.addf %379, %381 : vector<2x1xf32>
    %383 = vector.shape_cast %382 : vector<2x1xf32> to vector<2x1xf32>
    %384 = vector.broadcast %383 : vector<2x1xf32> to vector<2x128xf32>
    %c0_163 = arith.constant 0 : index
    %c0_164 = arith.constant 0 : index
    %385 = vector.load %arg37[%c0_163, %c0_164] : memref<2x128xf32, #tpu.memory_space<vmem>>, vector<2x128xf32>
    tpu.vector_store %arg37[%c0_163, %c0_164], %384 {strides = array<i32>} : memref<2x128xf32, #tpu.memory_space<vmem>>, vector<2x128xf32>,
    return
  }
}

</mosaic_0001>

<llo_original>
// kernel: _lambda_.1
$region0: #{_lambda_.1}
  #allocation0 [shape = 'u32[]', space=smem, size = 0x4, offset = 0x4, fixed_abs, tag = 'smem constant byte address 0x4 - core index']
  #allocation1 [shape = 'u32[144,128]{1,0:T(1,128)}', space=vmem, size = 0x12000, scoped, tag = 'internal scratch']
  #allocation2 [shape = 'f32[1,1]{1,0:T(1,128)S(1)}', space=vmem, size = 0x200, scoped, tag = 'scoped memory for _lambda_.1']
  #allocation3 [shape = 'f32[1,1]{1,0:T(1,128)S(1)}', space=vmem, size = 0x200, scoped, tag = 'scoped memory for _lambda_.1']
  #allocation4 [shape = 'f32[1,1]{1,0:T(1,128)S(1)}', space=vmem, size = 0x200, scoped, tag = 'scoped memory for _lambda_.1']
  %s0 = inlined_call_operand.smem [shape: u32[38], index: -1, kind: input, shape index: {}]
  %s1 = sld [smem:[%s0]]
  %s2 = scalar_lea.smem %s0, 1
  %s3 = sld [smem:[%s2]]
  %s4 = scalar_lea.smem %s0, 2
  %s5 = sld [smem:[%s4]]
  %s6 = scalar_lea.smem %s0, 3
  %s7 = sld [smem:[%s6]]
  %s8 = scalar_lea.smem %s0, 4
  %s9 = sld [smem:[%s8]]
  %s10 = scalar_lea.smem %s0, 5
  %s11 = sld [smem:[%s10]]
  %s12 = scalar_lea.smem %s0, 6
  %s13 = sld [smem:[%s12]]
  %s14 = scalar_lea.smem %s0, 7
  %s15 = sld [smem:[%s14]]
  %s16 = scalar_lea.smem %s0, 8
  %s17 = sld [smem:[%s16]]
  %s18 = scalar_lea.smem %s0, 9
  %s19 = sld [smem:[%s18]]
  %s20 = scalar_lea.smem %s0, 10
  %s21 = sld [smem:[%s20]]
  %s22 = scalar_lea.smem %s0, 11
  %s23 = sld [smem:[%s22]]
  %s24 = scalar_lea.smem %s0, 12
  %s25 = sld [smem:[%s24]]
  %s26 = scalar_lea.smem %s0, 13
  %s27 = sld [smem:[%s26]]
  %s28 = scalar_lea.smem %s0, 14
  %s29 = sld [smem:[%s28]]
  %s30 = scalar_lea.smem %s0, 15
  %s31 = sld [smem:[%s30]]
  %s32 = scalar_lea.smem %s0, 16
  %s33 = sld [smem:[%s32]]
  %s34 = scalar_lea.smem %s0, 17
  %s35 = sld [smem:[%s34]]
  %s36 = scalar_lea.smem %s0, 18
  %s37 = sld [smem:[%s36]]
  %s38 = scalar_lea.smem %s0, 19
  %s39 = sld [smem:[%s38]]
  %s40 = scalar_lea.smem %s0, 20
  %s41 = sld [smem:[%s40]]
  %s42 = scalar_lea.smem %s0, 21
  %s43 = sld [smem:[%s42]]
  %s44 = scalar_lea.smem %s0, 22
  %s45 = sld [smem:[%s44]]
  %s46 = scalar_lea.smem %s0, 23
  %s47 = sld [smem:[%s46]]
  %s48 = scalar_lea.smem %s0, 24
  %s49 = sld [smem:[%s48]]
  %s50 = scalar_lea.smem %s0, 25
  %s51 = sld [smem:[%s50]]
  %s52 = scalar_lea.smem %s0, 26
  %s53 = sld [smem:[%s52]]
  %s54 = scalar_lea.smem %s0, 27
  %s55 = sld [smem:[%s54]]
  %s56 = scalar_lea.smem %s0, 28
  %s57 = sld [smem:[%s56]]
  %s58 = scalar_lea.smem %s0, 29
  %s59 = sld [smem:[%s58]]
  %s60 = scalar_lea.smem %s0, 30
  %s61 = sld [smem:[%s60]]
  %s62 = scalar_lea.smem %s0, 31
  %s63 = sld [smem:[%s62]]
  %s64 = scalar_lea.smem %s0, 32
  %s65 = sld [smem:[%s64]]
  %s66 = scalar_lea.smem %s0, 33
  %s67 = sld [smem:[%s66]]
  %s68 = scalar_lea.smem %s0, 34
  %s69 = sld [smem:[%s68]]
  %s70 = scalar_lea.smem %s0, 35
  %s71 = sld [smem:[%s70]]
  %s72 = scalar_lea.smem %s0, 36
  %s73 = sld [smem:[%s72]]
  %s74 = scalar_lea.smem %s0, 37
  %s75 = sld [smem:[%s74]]
  %s76 = sld [smem:[#allocation0]]
  $region226: #{_lambda_.1} parent=0
    _
  %s78 = ssub.s32 1, %s76
  %s79 = scalar_select 0, %s78, %s76
  %v80 = vstv %s41
  %81 = vst [vmem:[#allocation2] sm:$0x1] %v80
  %v82 = vstv %s69
  %83 = vst [vmem:[#allocation3] sm:$0x1] %v82
  %v84 = vstv %s73
  %85 = vst [vmem:[#allocation4] sm:$0x1] %v84
  $region1: #{_lambda_.1} parent=0
    #allocation5 [shape = 'u8[8192]{0}', space=vmem, size = 0x2000, scoped, tag = 'input window, operand 2, single buffered']
    #allocation6 [shape = 's32[1]{0}', space=sflag, size = 0x4, scoped, tag = 'scoped memory for _lambda_.1']
    #allocation7 [shape = 'u8[2048]{0}', space=vmem, size = 0x800, scoped, tag = 'input window, operand 3, single buffered']
    #allocation8 [shape = 's32[1]{0}', space=sflag, size = 0x4, scoped, tag = 'scoped memory for _lambda_.1']
    #allocation9 [shape = 'u8[8192]{0}', space=vmem, size = 0x2000, scoped, tag = 'input window, operand 4, single buffered']
    #allocation10 [shape = 'u8[524288]{0}', space=vmem, size = 0x80000, scoped, tag = 'input window, operand 6, single buffered']
    #allocation11 [shape = 's32[1]{0}', space=sflag, size = 0x4, scoped, tag = 'scoped memory for _lambda_.1']
    #allocation12 [shape = 'u8[32768]{0}', space=vmem, size = 0x8000, scoped, tag = 'input window, operand 7, single buffered']
    #allocation13 [shape = 'u8[16384]{0}', space=vmem, size = 0x4000, scoped, tag = 'input window, operand 8, single buffered']
    #allocation14 [shape = 's32[1]{0}', space=sflag, size = 0x4, scoped, tag = 'scoped memory for _lambda_.1']
    #allocation15 [shape = 'u8[8192]{0}', space=vmem, size = 0x2000, scoped, tag = 'input window, operand 12, single buffered']
    #allocation16 [shape = 'u8[16384]{0}', space=vmem, size = 0x4000, scoped, tag = 'input window, operand 13, single buffered']
    #allocation17 [shape = 's32[1]{0}', space=sflag, size = 0x4, scoped, tag = 'scoped memory for _lambda_.1']
    #allocation18 [shape = 'u8[4096]{0}', space=vmem, size = 0x1000, scoped, tag = 'input window, operand 15, single buffered']
    #allocation19 [shape = 'u8[16384]{0}', space=vmem, size = 0x4000, scoped, tag = 'input window, operand 17, single buffered']
    #allocation20 [shape = 's32[1]{0}', space=sflag, size = 0x4, scoped, tag = 'scoped memory for _lambda_.1']
    #allocation21 [shape = 'u8[512]{0}', space=vmem, size = 0x400, scoped, tag = 'input window, operand 19, single buffered']
    #allocation22 [shape = 'u8[524288]{0}', space=vmem, size = 0x80000, scoped, tag = 'input window, operand 21, single buffered']
    #allocation23 [shape = 's32[1]{0}', space=sflag, size = 0x4, scoped, tag = 'scoped memory for _lambda_.1']
    #allocation24 [shape = 'u8[1024]{0}', space=vmem, size = 0x400, scoped, tag = 'input window, operand 22, single buffered']
    #allocation25 [shape = 'u8[32768]{0}', space=vmem, size = 0x8000, scoped, tag = 'input window, operand 23, single buffered']
    #allocation26 [shape = 's32[1]{0}', space=sflag, size = 0x4, scoped, tag = 'scoped memory for _lambda_.1']
    #allocation27 [shape = 'u8[1024]{0}', space=vmem, size = 0x400, scoped, tag = 'input window, operand 24, single buffered']
    #allocation28 [shape = 'u8[1024]{0}', space=vmem, size = 0x400, scoped, tag = 'input window, operand 26, single buffered']
    #allocation29 [shape = 's32[1]{0}', space=sflag, size = 0x4, scoped, tag = 'scoped memory for _lambda_.1']
    #allocation30 [shape = 'u8[16384]{0}', space=vmem, size = 0x4000, scoped, tag = 'input window, operand 27, single buffered']
    %86 = vsyncpa [#allocation6], 0
    %87 = vsyncpa [#allocation8], 0
    %88 = vsyncpa [#allocation11], 0
    %89 = vsyncpa [#allocation14], 0
    %90 = vsyncpa [#allocation17], 0
    %91 = vsyncpa [#allocation20], 0
    %92 = vsyncpa [#allocation23], 0
    %93 = vsyncpa [#allocation26], 0
    %94 = vsyncpa [#allocation29], 0
    // Predicated region
    $region2: #{_lambda_.1} parent=1 // pred_check
      _
    $region3: #{_lambda_.1} parent=1 // pred_check_branch
      %96 = sbr.rel (0) target = $region5
    $region4: #{_lambda_.1} parent=1 // pred_region
      _
    $region5: #{_lambda_.1} parent=1 // pred_fallthru
      _
    // Predicated region
    $region6: #{_lambda_.1} parent=1 // pred_check
      _
    $region7: #{_lambda_.1} parent=1 // pred_check_branch
      %98 = sbr.rel (0) target = $region9
    $region8: #{_lambda_.1} parent=1 // pred_region
      _
    $region9: #{_lambda_.1} parent=1 // pred_fallthru
      _
    // Predicated region
    $region10: #{_lambda_.1} parent=1 // pred_check
      _
    $region11: #{_lambda_.1} parent=1 // pred_check_branch
      %100 = sbr.rel (0) target = $region13
    $region12: #{_lambda_.1} parent=1 // pred_region
      %s102 = ssub.s32 256, 256
      %103 = vsyncadd [#allocation6], %s102
      %s105 = sshll.u32 [#allocation5], 4
      %s106 = int_to_ptr.vmem [resolvable:$true] %s105
      %108 = dma.hbm_to_vmem [thread:$0]  %s5, 256, %s106, [#allocation6]
    $region13: #{_lambda_.1} parent=1 // pred_fallthru
      _
    // Predicated region
    $region14: #{_lambda_.1} parent=1 // pred_check
      _
    $region15: #{_lambda_.1} parent=1 // pred_check_branch
      %110 = sbr.rel (0) target = $region17
    $region16: #{_lambda_.1} parent=1 // pred_region
      %s112 = ssub.s32 64, 64
      %113 = vsyncadd [#allocation8], %s112
      %s115 = sshll.u32 [#allocation7], 4
      %s116 = int_to_ptr.vmem [resolvable:$true] %s115
      %118 = dma.hbm_to_vmem [thread:$0]  %s7, 64, %s116, [#allocation8]
    $region17: #{_lambda_.1} parent=1 // pred_fallthru
      _
    // Predicated region
    $region18: #{_lambda_.1} parent=1 // pred_check
      _
    $region19: #{_lambda_.1} parent=1 // pred_check_branch
      %120 = sbr.rel (0) target = $region21
    $region20: #{_lambda_.1} parent=1 // pred_region
      %s122 = ssub.s32 256, 256
      %123 = vsyncadd [#allocation8], %s122
      %s124 = sshll.u32 [#allocation9], 4
      %s125 = int_to_ptr.vmem [resolvable:$true] %s124
      %130 = dma.hbm_to_vmem [thread:$0]  %s9, 256, %s125, [#allocation8], 128, 128, 8
    $region21: #{_lambda_.1} parent=1 // pred_fallthru
      _
    // Predicated region
    $region22: #{_lambda_.1} parent=1 // pred_check
      _
    $region23: #{_lambda_.1} parent=1 // pred_check_branch
      %132 = sbr.rel (0) target = $region25
    $region24: #{_lambda_.1} parent=1 // pred_region
      _
    $region25: #{_lambda_.1} parent=1 // pred_fallthru
      _
    // Predicated region
    $region26: #{_lambda_.1} parent=1 // pred_check
      _
    $region27: #{_lambda_.1} parent=1 // pred_check_branch
      %134 = sbr.rel (0) target = $region29
    $region28: #{_lambda_.1} parent=1 // pred_region
      %s136 = ssub.s32 16384, 16384
      %137 = vsyncadd [#allocation11], %s136
      %s138 = sshll.u32 [#allocation10], 4
      %s139 = int_to_ptr.vmem [resolvable:$true] %s138
      %144 = dma.hbm_to_vmem [thread:$0]  %s13, 16384, %s139, [#allocation11], 256, 256, 16
    $region29: #{_lambda_.1} parent=1 // pred_fallthru
      _
    // Predicated region
    $region30: #{_lambda_.1} parent=1 // pred_check
      _
    $region31: #{_lambda_.1} parent=1 // pred_check_branch
      %146 = sbr.rel (0) target = $region33
    $region32: #{_lambda_.1} parent=1 // pred_region
      %s148 = ssub.s32 1024, 1024
      %149 = vsyncadd [#allocation11], %s148
      %s150 = sshll.u32 [#allocation12], 4
      %s151 = int_to_ptr.vmem [resolvable:$true] %s150
      %156 = dma.hbm_to_vmem [thread:$0]  %s15, 1024, %s151, [#allocation11], 64, 64, 4
    $region33: #{_lambda_.1} parent=1 // pred_fallthru
      _
    // Predicated region
    $region34: #{_lambda_.1} parent=1 // pred_check
      _
    $region35: #{_lambda_.1} parent=1 // pred_check_branch
      %158 = sbr.rel (0) target = $region37
    $region36: #{_lambda_.1} parent=1 // pred_region
      %s160 = ssub.s32 512, 512
      %161 = vsyncadd [#allocation14], %s160
      %s162 = sshll.u32 [#allocation13], 4
      %s163 = int_to_ptr.vmem [resolvable:$true] %s162
      %168 = dma.hbm_to_vmem [thread:$0]  %s17, 512, %s163, [#allocation14], 128, 128, 8
    $region37: #{_lambda_.1} parent=1 // pred_fallthru
      _
    // Predicated region
    $region38: #{_lambda_.1} parent=1 // pred_check
      _
    $region39: #{_lambda_.1} parent=1 // pred_check_branch
      %170 = sbr.rel (0) target = $region41
    $region40: #{_lambda_.1} parent=1 // pred_region
      _
    $region41: #{_lambda_.1} parent=1 // pred_fallthru
      _
    // Predicated region
    $region42: #{_lambda_.1} parent=1 // pred_check
      _
    $region43: #{_lambda_.1} parent=1 // pred_check_branch
      %172 = sbr.rel (0) target = $region45
    $region44: #{_lambda_.1} parent=1 // pred_region
      _
    $region45: #{_lambda_.1} parent=1 // pred_fallthru
      _
    // Predicated region
    $region46: #{_lambda_.1} parent=1 // pred_check
      _
    $region47: #{_lambda_.1} parent=1 // pred_check_branch
      %174 = sbr.rel (0) target = $region49
    $region48: #{_lambda_.1} parent=1 // pred_region
      _
    $region49: #{_lambda_.1} parent=1 // pred_fallthru
      _
    // Predicated region
    $region50: #{_lambda_.1} parent=1 // pred_check
      _
    $region51: #{_lambda_.1} parent=1 // pred_check_branch
      %176 = sbr.rel (0) target = $region53
    $region52: #{_lambda_.1} parent=1 // pred_region
      %s178 = ssub.s32 256, 256
      %179 = vsyncadd [#allocation14], %s178
      %s180 = sshll.u32 [#allocation15], 4
      %s181 = int_to_ptr.vmem [resolvable:$true] %s180
      %186 = dma.hbm_to_vmem [thread:$0]  %s25, 256, %s181, [#allocation14], 64, 64, 4
    $region53: #{_lambda_.1} parent=1 // pred_fallthru
      _
    // Predicated region
    $region54: #{_lambda_.1} parent=1 // pred_check
      _
    $region55: #{_lambda_.1} parent=1 // pred_check_branch
      %188 = sbr.rel (0) target = $region57
    $region56: #{_lambda_.1} parent=1 // pred_region
      %s190 = ssub.s32 512, 512
      %191 = vsyncadd [#allocation17], %s190
      %s192 = sshll.u32 [#allocation16], 4
      %s193 = int_to_ptr.vmem [resolvable:$true] %s192
      %198 = dma.hbm_to_vmem [thread:$0]  %s27, 512, %s193, [#allocation17], 64, 64, 4
    $region57: #{_lambda_.1} parent=1 // pred_fallthru
      _
    // Predicated region
    $region58: #{_lambda_.1} parent=1 // pred_check
      _
    $region59: #{_lambda_.1} parent=1 // pred_check_branch
      %200 = sbr.rel (0) target = $region61
    $region60: #{_lambda_.1} parent=1 // pred_region
      _
    $region61: #{_lambda_.1} parent=1 // pred_fallthru
      _
    // Predicated region
    $region62: #{_lambda_.1} parent=1 // pred_check
      _
    $region63: #{_lambda_.1} parent=1 // pred_check_branch
      %202 = sbr.rel (0) target = $region65
    $region64: #{_lambda_.1} parent=1 // pred_region
      %s204 = ssub.s32 128, 128
      %205 = vsyncadd [#allocation17], %s204
      %s206 = sshll.u32 [#allocation18], 4
      %s207 = int_to_ptr.vmem [resolvable:$true] %s206
      %212 = dma.hbm_to_vmem [thread:$0]  %s31, 128, %s207, [#allocation17], 64, 64, 4
    $region65: #{_lambda_.1} parent=1 // pred_fallthru
      _
    // Predicated region
    $region66: #{_lambda_.1} parent=1 // pred_check
      _
    $region67: #{_lambda_.1} parent=1 // pred_check_branch
      %214 = sbr.rel (0) target = $region69
    $region68: #{_lambda_.1} parent=1 // pred_region
      _
    $region69: #{_lambda_.1} parent=1 // pred_fallthru
      _
    // Predicated region
    $region70: #{_lambda_.1} parent=1 // pred_check
      _
    $region71: #{_lambda_.1} parent=1 // pred_check_branch
      %216 = sbr.rel (0) target = $region73
    $region72: #{_lambda_.1} parent=1 // pred_region
      %s218 = ssub.s32 512, 512
      %219 = vsyncadd [#allocation20], %s218
      %s220 = sshll.u32 [#allocation19], 4
      %s221 = int_to_ptr.vmem [resolvable:$true] %s220
      %226 = dma.hbm_to_vmem [thread:$0]  %s35, 512, %s221, [#allocation20], 64, 64, 4
    $region73: #{_lambda_.1} parent=1 // pred_fallthru
      _
    // Predicated region
    $region74: #{_lambda_.1} parent=1 // pred_check
      _
    $region75: #{_lambda_.1} parent=1 // pred_check_branch
      %228 = sbr.rel (0) target = $region77
    $region76: #{_lambda_.1} parent=1 // pred_region
      _
    $region77: #{_lambda_.1} parent=1 // pred_fallthru
      _
    // Predicated region
    $region78: #{_lambda_.1} parent=1 // pred_check
      _
    $region79: #{_lambda_.1} parent=1 // pred_check_branch
      %230 = sbr.rel (0) target = $region81
    $region80: #{_lambda_.1} parent=1 // pred_region
      %s232 = ssub.s32 16, 16
      %233 = vsyncadd [#allocation20], %s232
      %s235 = sshll.u32 [#allocation21], 4
      %s236 = int_to_ptr.vmem [resolvable:$true] %s235
      %238 = dma.hbm_to_vmem [thread:$0]  %s39, 16, %s236, [#allocation20]
    $region81: #{_lambda_.1} parent=1 // pred_fallthru
      _
    // Predicated region
    $region82: #{_lambda_.1} parent=1 // pred_check
      _
    $region83: #{_lambda_.1} parent=1 // pred_check_branch
      %240 = sbr.rel (0) target = $region85
    $region84: #{_lambda_.1} parent=1 // pred_region
      _
    $region85: #{_lambda_.1} parent=1 // pred_fallthru
      _
    // Predicated region
    $region86: #{_lambda_.1} parent=1 // pred_check
      _
    $region87: #{_lambda_.1} parent=1 // pred_check_branch
      %242 = sbr.rel (0) target = $region89
    $region88: #{_lambda_.1} parent=1 // pred_region
      %s244 = ssub.s32 16384, 16384
      %245 = vsyncadd [#allocation23], %s244
      %s246 = sshll.u32 [#allocation22], 4
      %s247 = int_to_ptr.vmem [resolvable:$true] %s246
      %252 = dma.hbm_to_vmem [thread:$0]  %s43, 16384, %s247, [#allocation23], 128, 128, 8
    $region89: #{_lambda_.1} parent=1 // pred_fallthru
      _
    // Predicated region
    $region90: #{_lambda_.1} parent=1 // pred_check
      _
    $region91: #{_lambda_.1} parent=1 // pred_check_branch
      %254 = sbr.rel (0) target = $region93
    $region92: #{_lambda_.1} parent=1 // pred_region
      %s256 = ssub.s32 32, 32
      %257 = vsyncadd [#allocation23], %s256
      %s259 = sshll.u32 [#allocation24], 4
      %s260 = int_to_ptr.vmem [resolvable:$true] %s259
      %262 = dma.hbm_to_vmem [thread:$0]  %s45, 32, %s260, [#allocation23]
    $region93: #{_lambda_.1} parent=1 // pred_fallthru
      _
    // Predicated region
    $region94: #{_lambda_.1} parent=1 // pred_check
      _
    $region95: #{_lambda_.1} parent=1 // pred_check_branch
      %264 = sbr.rel (0) target = $region97
    $region96: #{_lambda_.1} parent=1 // pred_region
      %s266 = ssub.s32 1024, 1024
      %267 = vsyncadd [#allocation26], %s266
      %s268 = sshll.u32 [#allocation25], 4
      %s269 = int_to_ptr.vmem [resolvable:$true] %s268
      %274 = dma.hbm_to_vmem [thread:$0]  %s47, 1024, %s269, [#allocation26], 128, 128, 8
    $region97: #{_lambda_.1} parent=1 // pred_fallthru
      _
    // Predicated region
    $region98: #{_lambda_.1} parent=1 // pred_check
      _
    $region99: #{_lambda_.1} parent=1 // pred_check_branch
      %276 = sbr.rel (0) target = $region101
    $region100: #{_lambda_.1} parent=1 // pred_region
      %s278 = ssub.s32 32, 32
      %279 = vsyncadd [#allocation26], %s278
      %s281 = sshll.u32 [#allocation27], 4
      %s282 = int_to_ptr.vmem [resolvable:$true] %s281
      %284 = dma.hbm_to_vmem [thread:$0]  %s49, 32, %s282, [#allocation26]
    $region101: #{_lambda_.1} parent=1 // pred_fallthru
      _
    // Predicated region
    $region102: #{_lambda_.1} parent=1 // pred_check
      _
    $region103: #{_lambda_.1} parent=1 // pred_check_branch
      %286 = sbr.rel (0) target = $region105
    $region104: #{_lambda_.1} parent=1 // pred_region
      _
    $region105: #{_lambda_.1} parent=1 // pred_fallthru
      _
    // Predicated region
    $region106: #{_lambda_.1} parent=1 // pred_check
      _
    $region107: #{_lambda_.1} parent=1 // pred_check_branch
      %288 = sbr.rel (0) target = $region109
    $region108: #{_lambda_.1} parent=1 // pred_region
      %s290 = ssub.s32 32, 32
      %291 = vsyncadd [#allocation29], %s290
      %s293 = sshll.u32 [#allocation28], 4
      %s294 = int_to_ptr.vmem [resolvable:$true] %s293
      %296 = dma.hbm_to_vmem [thread:$0]  %s53, 32, %s294, [#allocation29]
    $region109: #{_lambda_.1} parent=1 // pred_fallthru
      _
    // Predicated region
    $region110: #{_lambda_.1} parent=1 // pred_check
      _
    $region111: #{_lambda_.1} parent=1 // pred_check_branch
      %298 = sbr.rel (0) target = $region113
    $region112: #{_lambda_.1} parent=1 // pred_region
      %s300 = ssub.s32 512, 512
      %301 = vsyncadd [#allocation29], %s300
      %s302 = sshll.u32 [#allocation30], 4
      %s303 = int_to_ptr.vmem [resolvable:$true] %s302
      %308 = dma.hbm_to_vmem [thread:$0]  %s55, 512, %s303, [#allocation29], 64, 64, 4
    $region113: #{_lambda_.1} parent=1 // pred_fallthru
      _
    // Predicated region
    $region114: #{_lambda_.1} parent=1 // pred_check
      _
    $region115: #{_lambda_.1} parent=1 // pred_check_branch
      %310 = sbr.rel (0) target = $region117
    $region116: #{_lambda_.1} parent=1 // pred_region
      _
    $region117: #{_lambda_.1} parent=1 // pred_fallthru
      _
    // Predicated region
    $region118: #{_lambda_.1} parent=1 // pred_check
      _
    $region119: #{_lambda_.1} parent=1 // pred_check_branch
      %312 = sbr.rel (0) target = $region121
    $region120: #{_lambda_.1} parent=1 // pred_region
      _
    $region121: #{_lambda_.1} parent=1 // pred_fallthru
      _
    // Predicated region
    $region122: #{_lambda_.1} parent=1 // pred_check
      _
    $region123: #{_lambda_.1} parent=1 // pred_check_branch
      %314 = sbr.rel (0) target = $region125
    $region124: #{_lambda_.1} parent=1 // pred_region
      _
    $region125: #{_lambda_.1} parent=1 // pred_fallthru
      _
    // Predicated region
    $region126: #{_lambda_.1} parent=1 // pred_check
      _
    $region127: #{_lambda_.1} parent=1 // pred_check_branch
      %316 = sbr.rel (0) target = $region129
    $region128: #{_lambda_.1} parent=1 // pred_region
      _
    $region129: #{_lambda_.1} parent=1 // pred_fallthru
      _
    // Predicated region
    $region130: #{_lambda_.1} parent=1 // pred_check
      _
    $region131: #{_lambda_.1} parent=1 // pred_check_branch
      %318 = sbr.rel (0) target = $region133
    $region132: #{_lambda_.1} parent=1 // pred_region
      _
    $region133: #{_lambda_.1} parent=1 // pred_fallthru
      _
    // Predicated region
    $region134: #{_lambda_.1} parent=1 // pred_check
      _
    $region135: #{_lambda_.1} parent=1 // pred_check_branch
      %320 = sbr.rel (0) target = $region137
    $region136: #{_lambda_.1} parent=1 // pred_region
      _
    $region137: #{_lambda_.1} parent=1 // pred_fallthru
      _
    // Predicated region
    $region138: #{_lambda_.1} parent=1 // pred_check
      _
    $region139: #{_lambda_.1} parent=1 // pred_check_branch
      %322 = sbr.rel (0) target = $region141
    $region140: #{_lambda_.1} parent=1 // pred_region
      _
    $region141: #{_lambda_.1} parent=1 // pred_fallthru
      _
    // Predicated region
    $region142: #{_lambda_.1} parent=1 // pred_check
      _
    $region143: #{_lambda_.1} parent=1 // pred_check_branch
      %324 = sbr.rel (0) target = $region145
    $region144: #{_lambda_.1} parent=1 // pred_region
      _
    $region145: #{_lambda_.1} parent=1 // pred_fallthru
      _
    // Predicated region
    $region146: #{_lambda_.1} parent=1 // pred_check
      _
    $region147: #{_lambda_.1} parent=1 // pred_check_branch
      %326 = sbr.rel (0) target = $region149
    $region148: #{_lambda_.1} parent=1 // pred_region
      _
    $region149: #{_lambda_.1} parent=1 // pred_fallthru
      _
    // Predicated region
    $region150: #{_lambda_.1} parent=1 // pred_check
      _
    $region151: #{_lambda_.1} parent=1 // pred_check_branch
      %328 = sbr.rel (0) target = $region153
    $region152: #{_lambda_.1} parent=1 // pred_region
      %329 = dma.done [#allocation6], 256
    $region153: #{_lambda_.1} parent=1 // pred_fallthru
      _
    // Predicated region
    $region154: #{_lambda_.1} parent=1 // pred_check
      _
    $region155: #{_lambda_.1} parent=1 // pred_check_branch
      %331 = sbr.rel (0) target = $region157
    $region156: #{_lambda_.1} parent=1 // pred_region
      %332 = dma.done [#allocation8], 64
    $region157: #{_lambda_.1} parent=1 // pred_fallthru
      _
    // Predicated region
    $region158: #{_lambda_.1} parent=1 // pred_check
      _
    $region159: #{_lambda_.1} parent=1 // pred_check_branch
      %334 = sbr.rel (0) target = $region161
    $region160: #{_lambda_.1} parent=1 // pred_region
      %335 = dma.done [#allocation8], 256
    $region161: #{_lambda_.1} parent=1 // pred_fallthru
      _
    // Predicated region
    $region162: #{_lambda_.1} parent=1 // pred_check
      _
    $region163: #{_lambda_.1} parent=1 // pred_check_branch
      %337 = sbr.rel (0) target = $region165
    $region164: #{_lambda_.1} parent=1 // pred_region
      %338 = dma.done [#allocation11], 16384
    $region165: #{_lambda_.1} parent=1 // pred_fallthru
      _
    // Predicated region
    $region166: #{_lambda_.1} parent=1 // pred_check
      _
    $region167: #{_lambda_.1} parent=1 // pred_check_branch
      %340 = sbr.rel (0) target = $region169
    $region168: #{_lambda_.1} parent=1 // pred_region
      %341 = dma.done [#allocation11], 1024
    $region169: #{_lambda_.1} parent=1 // pred_fallthru
      _
    // Predicated region
    $region170: #{_lambda_.1} parent=1 // pred_check
      _
    $region171: #{_lambda_.1} parent=1 // pred_check_branch
      %343 = sbr.rel (0) target = $region173
    $region172: #{_lambda_.1} parent=1 // pred_region
      %344 = dma.done [#allocation14], 512
    $region173: #{_lambda_.1} parent=1 // pred_fallthru
      _
    // Predicated region
    $region174: #{_lambda_.1} parent=1 // pred_check
      _
    $region175: #{_lambda_.1} parent=1 // pred_check_branch
      %346 = sbr.rel (0) target = $region177
    $region176: #{_lambda_.1} parent=1 // pred_region
      %347 = dma.done [#allocation14], 256
    $region177: #{_lambda_.1} parent=1 // pred_fallthru
      _
    // Predicated region
    $region178: #{_lambda_.1} parent=1 // pred_check
      _
    $region179: #{_lambda_.1} parent=1 // pred_check_branch
      %349 = sbr.rel (0) target = $region181
    $region180: #{_lambda_.1} parent=1 // pred_region
      %350 = dma.done [#allocation17], 512
    $region181: #{_lambda_.1} parent=1 // pred_fallthru
      _
    // Predicated region
    $region182: #{_lambda_.1} parent=1 // pred_check
      _
    $region183: #{_lambda_.1} parent=1 // pred_check_branch
      %352 = sbr.rel (0) target = $region185
    $region184: #{_lambda_.1} parent=1 // pred_region
      %353 = dma.done [#allocation17], 128
    $region185: #{_lambda_.1} parent=1 // pred_fallthru
      _
    // Predicated region
    $region186: #{_lambda_.1} parent=1 // pred_check
      _
    $region187: #{_lambda_.1} parent=1 // pred_check_branch
      %355 = sbr.rel (0) target = $region189
    $region188: #{_lambda_.1} parent=1 // pred_region
      %356 = dma.done [#allocation20], 512
    $region189: #{_lambda_.1} parent=1 // pred_fallthru
      _
    // Predicated region
    $region190: #{_lambda_.1} parent=1 // pred_check
      _
    $region191: #{_lambda_.1} parent=1 // pred_check_branch
      %358 = sbr.rel (0) target = $region193
    $region192: #{_lambda_.1} parent=1 // pred_region
      %359 = dma.done [#allocation20], 16
    $region193: #{_lambda_.1} parent=1 // pred_fallthru
      _
    // Predicated region
    $region194: #{_lambda_.1} parent=1 // pred_check
      _
    $region195: #{_lambda_.1} parent=1 // pred_check_branch
      %361 = sbr.rel (0) target = $region197
    $region196: #{_lambda_.1} parent=1 // pred_region
      %362 = dma.done [#allocation23], 16384
    $region197: #{_lambda_.1} parent=1 // pred_fallthru
      _
    // Predicated region
    $region198: #{_lambda_.1} parent=1 // pred_check
      _
    $region199: #{_lambda_.1} parent=1 // pred_check_branch
      %364 = sbr.rel (0) target = $region201
    $region200: #{_lambda_.1} parent=1 // pred_region
      %365 = dma.done [#allocation23], 32
    $region201: #{_lambda_.1} parent=1 // pred_fallthru
      _
    // Predicated region
    $region202: #{_lambda_.1} parent=1 // pred_check
      _
    $region203: #{_lambda_.1} parent=1 // pred_check_branch
      %367 = sbr.rel (0) target = $region205
    $region204: #{_lambda_.1} parent=1 // pred_region
      %368 = dma.done [#allocation26], 1024
    $region205: #{_lambda_.1} parent=1 // pred_fallthru
      _
    // Predicated region
    $region206: #{_lambda_.1} parent=1 // pred_check
      _
    $region207: #{_lambda_.1} parent=1 // pred_check_branch
      %370 = sbr.rel (0) target = $region209
    $region208: #{_lambda_.1} parent=1 // pred_region
      %371 = dma.done [#allocation26], 32
    $region209: #{_lambda_.1} parent=1 // pred_fallthru
      _
    // Predicated region
    $region210: #{_lambda_.1} parent=1 // pred_check
      _
    $region211: #{_lambda_.1} parent=1 // pred_check_branch
      %373 = sbr.rel (0) target = $region213
    $region212: #{_lambda_.1} parent=1 // pred_region
      %374 = dma.done [#allocation29], 32
    $region213: #{_lambda_.1} parent=1 // pred_fallthru
      _
    // Predicated region
    $region214: #{_lambda_.1} parent=1 // pred_check
      _
    $region215: #{_lambda_.1} parent=1 // pred_check_branch
      %376 = sbr.rel (0) target = $region217
    $region216: #{_lambda_.1} parent=1 // pred_region
      %377 = dma.done [#allocation29], 512
    $region217: #{_lambda_.1} parent=1 // pred_fallthru
      _
    %v379 = vld [vmem:[%s1] sm:$0x3f]
    %v380 = vld [vmem:[%s1 + $0x8] sm:$0x3f]
    %v381 = vld [vmem:[%s1 + $0x10] sm:$0x3f]
    %v382 = vld [vmem:[%s1 + $0x18] sm:$0x3f]
    %v383 = vld [vmem:[%s1 + $0x20] sm:$0x3f]
    %v384 = vld [vmem:[%s1 + $0x28] sm:$0x3f]
    %v385 = vld [vmem:[%s1 + $0x30] sm:$0x3f]
    %v386 = vld [vmem:[%s1 + $0x38] sm:$0x3f]
    %vm387 = vcmask 1045504
    %v388 = vsel %vm387, %v379, 0.0
    %v389 = vsel %vm387, %v380, 0.0
    %v390 = vadd.f32 %v388, %v389
    %v391 = vsel %vm387, %v381, 0.0
    %v392 = vadd.f32 %v390, %v391
    %v393 = vsel %vm387, %v382, 0.0
    %v394 = vadd.f32 %v392, %v393
    %v395 = vsel %vm387, %v383, 0.0
    %v396 = vadd.f32 %v394, %v395
    %v397 = vsel %vm387, %v384, 0.0
    %v398 = vadd.f32 %v396, %v397
    %v399 = vsel %vm387, %v385, 0.0
    %v400 = vadd.f32 %v398, %v399
    %v401 = vsel %vm387, %v386, 0.0
    %v402 = vadd.f32 %v400, %v401
    %403 = vadd.xlane.f32.xlu0 %v402
    %v404 = vpop.xlane.xlu0 %403
    %v405 = vrcp.pop 1024.0
    %v406 = vmul.f32 %v404, %v405
    %v407 = vld [vmem:[#allocation5] sm:$0x3f]
    %v408 = vld [vmem:[#allocation5 + $0x8] sm:$0x3f]
    %v409 = vmul.f32 %v406, %v407
    %v410 = vmul.f32 %v406, %v408
    %vm411 = vcmask 1042432
    %v412 = vsel %vm411, %v409, 0.0
    %v413 = vrot.slane %v412, 4
    %v414 = vadd.f32 %v412, %v413
    %v415 = vrot.slane %v414, 2
    %v416 = vadd.f32 %v414, %v415
    %v417 = vrot.slane %v416, 1
    %v418 = vadd.f32 %v416, %v417
    %v419 = vsel %vm411, %v410, 0.0
    %v420 = vrot.slane %v419, 4
    %v421 = vadd.f32 %v419, %v420
    %v422 = vrot.slane %v421, 2
    %v423 = vadd.f32 %v421, %v422
    %v424 = vrot.slane %v423, 1
    %v425 = vadd.f32 %v423, %v424
    %v428 = vrot.slane %v409, 3
    %v429 = vrot.slane %v410, 3
    %v432 = vsel %vm411, %v428, 0.0
    %v433 = vrot.slane %v432, 4
    %v434 = vadd.f32 %v432, %v433
    %v435 = vrot.slane %v434, 2
    %v436 = vadd.f32 %v434, %v435
    %v437 = vrot.slane %v436, 1
    %v438 = vadd.f32 %v436, %v437
    %v439 = vsel %vm411, %v429, 0.0
    %v440 = vrot.slane %v439, 4
    %v441 = vadd.f32 %v439, %v440
    %v442 = vrot.slane %v441, 2
    %v443 = vadd.f32 %v441, %v442
    %v444 = vrot.slane %v443, 1
    %v445 = vadd.f32 %v443, %v444
    %v446 = vld [vmem:[#allocation7] sm:$0xf]
    %v448 = vlaneseq
    %v449 = vshrl.u32 %v448, 7
    %v450 = vsub.s32 0, %v449
    %v451 = vrot.slane %v446, %v450
    %v452 = vlaneseq
    %v453 = vshrl.u32 %v452, 7
    %v454 = vsub.s32 1, %v453
    %v455 = vrot.slane %v446, %v454
    %v456 = vlaneseq
    %v457 = vshrl.u32 %v456, 7
    %v458 = vsub.s32 2, %v457
    %v459 = vrot.slane %v446, %v458
    %v460 = vlaneseq
    %v461 = vshrl.u32 %v460, 7
    %v462 = vsub.s32 3, %v461
    %v463 = vrot.slane %v446, %v462
    %v468 = vadd.f32 %v418, %v451
    %v469 = vadd.f32 %v425, %v455
    %v470 = vadd.f32 %v438, %v459
    %v471 = vadd.f32 %v445, %v463
    %v472 = vld [vmem:[%s3] sm:$0x3f]
    %v473 = vld [vmem:[%s3 + $0x8] sm:$0x3f]
    %v474 = vld [vmem:[%s3 + $0x10] sm:$0x3f]
    %v475 = vld [vmem:[%s3 + $0x18] sm:$0x3f]
    %v476 = vld [vmem:[%s3 + $0x20] sm:$0x3f]
    %v477 = vld [vmem:[%s3 + $0x28] sm:$0x3f]
    %v478 = vld [vmem:[%s3 + $0x30] sm:$0x3f]
    %v479 = vld [vmem:[%s3 + $0x38] sm:$0x3f]
    %v480 = vsel %vm387, %v472, 0.0
    %v481 = vsel %vm387, %v473, 0.0
    %v482 = vadd.f32 %v480, %v481
    %v483 = vsel %vm387, %v474, 0.0
    %v484 = vadd.f32 %v482, %v483
    %v485 = vsel %vm387, %v475, 0.0
    %v486 = vadd.f32 %v484, %v485
    %v487 = vsel %vm387, %v476, 0.0
    %v488 = vadd.f32 %v486, %v487
    %v489 = vsel %vm387, %v477, 0.0
    %v490 = vadd.f32 %v488, %v489
    %v491 = vsel %vm387, %v478, 0.0
    %v492 = vadd.f32 %v490, %v491
    %v493 = vsel %vm387, %v479, 0.0
    %v494 = vadd.f32 %v492, %v493
    %495 = vadd.xlane.f32.xlu0 %v494
    %v496 = vpop.xlane.xlu0 %495
    %v497 = vmul.f32 %v496, %v405
    %v498 = vmul.f32 %v497, %v407
    %v499 = vmul.f32 %v497, %v408
    %v500 = vsel %vm411, %v498, 0.0
    %v501 = vrot.slane %v500, 4
    %v502 = vadd.f32 %v500, %v501
    %v503 = vrot.slane %v502, 2
    %v504 = vadd.f32 %v502, %v503
    %v505 = vrot.slane %v504, 1
    %v506 = vadd.f32 %v504, %v505
    %v507 = vsel %vm411, %v499, 0.0
    %v508 = vrot.slane %v507, 4
    %v509 = vadd.f32 %v507, %v508
    %v510 = vrot.slane %v509, 2
    %v511 = vadd.f32 %v509, %v510
    %v512 = vrot.slane %v511, 1
    %v513 = vadd.f32 %v511, %v512
    %v516 = vrot.slane %v498, 3
    %v517 = vrot.slane %v499, 3
    %v520 = vsel %vm411, %v516, 0.0
    %v521 = vrot.slane %v520, 4
    %v522 = vadd.f32 %v520, %v521
    %v523 = vrot.slane %v522, 2
    %v524 = vadd.f32 %v522, %v523
    %v525 = vrot.slane %v524, 1
    %v526 = vadd.f32 %v524, %v525
    %v527 = vsel %vm411, %v517, 0.0
    %v528 = vrot.slane %v527, 4
    %v529 = vadd.f32 %v527, %v528
    %v530 = vrot.slane %v529, 2
    %v531 = vadd.f32 %v529, %v530
    %v532 = vrot.slane %v531, 1
    %v533 = vadd.f32 %v531, %v532
    %v534 = vadd.f32 %v506, %v451
    %v535 = vadd.f32 %v513, %v455
    %v536 = vadd.f32 %v526, %v459
    %v537 = vadd.f32 %v533, %v463
    %v542 = vrot.slane %v534, 7
    %v543 = vrot.slane %v535, 7
    %v544 = vrot.slane %v536, 7
    %v545 = vrot.slane %v537, 7
    %vm550 = vcmask 1040384
    %v551 = vsel %vm550, %v468, %v542
    %v552 = vsel %vm550, %v469, %v543
    %v553 = vsel %vm550, %v470, %v544
    %v554 = vsel %vm550, %v471, %v545
    %v555 = vld [vmem:[#allocation9] sm:$0xff]
    %v556 = vld [vmem:[#allocation9 + $0x8] sm:$0xff]
    %558 = vset.pattern.permute.xlu0 0
    %559 = vperm.xlu0 %558, %v555
    %v560 = vpop.permute.xlu0 %559
    %563 = vset.pattern.permute.xlu0 0
    %564 = vperm.xlu0 %563, %v556
    %v565 = vpop.permute.xlu0 %564
    %v567 = vlaneseq
    %v568 = vshrl.u32 %v567, 7
    %v569 = vsub.s32 0, %v568
    %v570 = vrot.slane %v551, %v569
    %v571 = vlaneseq
    %v572 = vshrl.u32 %v571, 7
    %v573 = vsub.s32 0, %v572
    %v574 = vrot.slane %v552, %v573
    %v575 = vlaneseq
    %v576 = vshrl.u32 %v575, 7
    %v577 = vsub.s32 0, %v576
    %v578 = vrot.slane %v553, %v577
    %v579 = vlaneseq
    %v580 = vshrl.u32 %v579, 7
    %v581 = vsub.s32 0, %v580
    %v582 = vrot.slane %v554, %v581
    %v583 = vmul.f32 %v560, %v570
    %v584 = vmul.f32 %v560, %v574
    %v585 = vmul.f32 %v560, %v578
    %v586 = vmul.f32 %v560, %v582
    %v587 = vmul.f32 %v565, %v570
    %v588 = vmul.f32 %v565, %v574
    %v589 = vmul.f32 %v565, %v578
    %v590 = vmul.f32 %v565, %v582
    %591 = vset.pattern.permute.xlu0 1
    %592 = vperm.xlu0 %591, %v555
    %v593 = vpop.permute.xlu0 %592
    %595 = vset.pattern.permute.xlu0 1
    %596 = vperm.xlu0 %595, %v556
    %v597 = vpop.permute.xlu0 %596
    %v599 = vlaneseq
    %v600 = vshrl.u32 %v599, 7
    %v601 = vsub.s32 1, %v600
    %v602 = vrot.slane %v551, %v601
    %v603 = vlaneseq
    %v604 = vshrl.u32 %v603, 7
    %v605 = vsub.s32 1, %v604
    %v606 = vrot.slane %v552, %v605
    %v607 = vlaneseq
    %v608 = vshrl.u32 %v607, 7
    %v609 = vsub.s32 1, %v608
    %v610 = vrot.slane %v553, %v609
    %v611 = vlaneseq
    %v612 = vshrl.u32 %v611, 7
    %v613 = vsub.s32 1, %v612
    %v614 = vrot.slane %v554, %v613
    %v615 = vmul.f32 %v593, %v602
    %v616 = vmul.f32 %v593, %v606
    %v617 = vmul.f32 %v593, %v610
    %v618 = vmul.f32 %v593, %v614
    %v619 = vmul.f32 %v597, %v602
    %v620 = vmul.f32 %v597, %v606
    %v621 = vmul.f32 %v597, %v610
    %v622 = vmul.f32 %v597, %v614
    %v623 = vadd.f32 %v583, %v615
    %v624 = vadd.f32 %v584, %v616
    %v625 = vadd.f32 %v585, %v617
    %v626 = vadd.f32 %v586, %v618
    %v627 = vadd.f32 %v587, %v619
    %v628 = vadd.f32 %v588, %v620
    %v629 = vadd.f32 %v589, %v621
    %v630 = vadd.f32 %v590, %v622
    %v631 = vld [vmem:[%s11] sm:$0xff]
    %v632 = vld [vmem:[%s11 + $0x8] sm:$0xff]
    %634 = vset.pattern.permute.xlu0 0
    %635 = vperm.xlu0 %634, %v631
    %v636 = vpop.permute.xlu0 %635
    %639 = vset.pattern.permute.xlu0 0
    %640 = vperm.xlu0 %639, %v632
    %v641 = vpop.permute.xlu0 %640
    %v643 = vadd.f32 %v623, %v636
    %v644 = vadd.f32 %v624, %v636
    %v645 = vadd.f32 %v625, %v636
    %v646 = vadd.f32 %v626, %v636
    %v647 = vadd.f32 %v627, %v641
    %v648 = vadd.f32 %v628, %v641
    %v649 = vadd.f32 %v629, %v641
    %v650 = vadd.f32 %v630, %v641
    %v651 = vmax.f32 %v643, 0.0
    %v652 = vmax.f32 %v644, 0.0
    %v653 = vmax.f32 %v645, 0.0
    %v654 = vmax.f32 %v646, 0.0
    %v655 = vmax.f32 %v647, 0.0
    %v656 = vmax.f32 %v648, 0.0
    %v657 = vmax.f32 %v649, 0.0
    %v658 = vmax.f32 %v650, 0.0
    %v659 = vld [vmem:[#allocation10] sm:$0xff]
    %v660 = vld [vmem:[#allocation10 + $0x8] sm:$0xff]
    %v661 = vld [vmem:[#allocation10 + $0x10] sm:$0xff]
    %v662 = vld [vmem:[#allocation10 + $0x18] sm:$0xff]
    %v663 = vld [vmem:[#allocation10 + $0x20] sm:$0xff]
    %v664 = vld [vmem:[#allocation10 + $0x28] sm:$0xff]
    %v665 = vld [vmem:[#allocation10 + $0x30] sm:$0xff]
    %v666 = vld [vmem:[#allocation10 + $0x38] sm:$0xff]
    %v667 = vld [vmem:[#allocation10 + $0x40] sm:$0xff]
    %v668 = vld [vmem:[#allocation10 + $0x48] sm:$0xff]
    %v669 = vld [vmem:[#allocation10 + $0x50] sm:$0xff]
    %v670 = vld [vmem:[#allocation10 + $0x58] sm:$0xff]
    %v671 = vld [vmem:[#allocation10 + $0x60] sm:$0xff]
    %v672 = vld [vmem:[#allocation10 + $0x68] sm:$0xff]
    %v673 = vld [vmem:[#allocation10 + $0x70] sm:$0xff]
    %v674 = vld [vmem:[#allocation10 + $0x78] sm:$0xff]
    %v675 = vld [vmem:[#allocation10 + $0x80] sm:$0xff]
    %v676 = vld [vmem:[#allocation10 + $0x88] sm:$0xff]
    %v677 = vld [vmem:[#allocation10 + $0x90] sm:$0xff]
    %v678 = vld [vmem:[#allocation10 + $0x98] sm:$0xff]
    %v679 = vld [vmem:[#allocation10 + $0xa0] sm:$0xff]
    %v680 = vld [vmem:[#allocation10 + $0xa8] sm:$0xff]
    %v681 = vld [vmem:[#allocation10 + $0xb0] sm:$0xff]
    %v682 = vld [vmem:[#allocation10 + $0xb8] sm:$0xff]
    %v683 = vld [vmem:[#allocation10 + $0xc0] sm:$0xff]
    %v684 = vld [vmem:[#allocation10 + $0xc8] sm:$0xff]
    %v685 = vld [vmem:[#allocation10 + $0xd0] sm:$0xff]
    %v686 = vld [vmem:[#allocation10 + $0xd8] sm:$0xff]
    %v687 = vld [vmem:[#allocation10 + $0xe0] sm:$0xff]
    %v688 = vld [vmem:[#allocation10 + $0xe8] sm:$0xff]
    %v689 = vld [vmem:[#allocation10 + $0xf0] sm:$0xff]
    %v690 = vld [vmem:[#allocation10 + $0xf8] sm:$0xff]
    %v691 = vld [vmem:[#allocation10 + $0x100] sm:$0xff]
    %v692 = vld [vmem:[#allocation10 + $0x108] sm:$0xff]
    %v693 = vld [vmem:[#allocation10 + $0x110] sm:$0xff]
    %v694 = vld [vmem:[#allocation10 + $0x118] sm:$0xff]
    %v695 = vld [vmem:[#allocation10 + $0x120] sm:$0xff]
    %v696 = vld [vmem:[#allocation10 + $0x128] sm:$0xff]
    %v697 = vld [vmem:[#allocation10 + $0x130] sm:$0xff]
    %v698 = vld [vmem:[#allocation10 + $0x138] sm:$0xff]
    %v699 = vld [vmem:[#allocation10 + $0x140] sm:$0xff]
    %v700 = vld [vmem:[#allocation10 + $0x148] sm:$0xff]
    %v701 = vld [vmem:[#allocation10 + $0x150] sm:$0xff]
    %v702 = vld [vmem:[#allocation10 + $0x158] sm:$0xff]
    %v703 = vld [vmem:[#allocation10 + $0x160] sm:$0xff]
    %v704 = vld [vmem:[#allocation10 + $0x168] sm:$0xff]
    %v705 = vld [vmem:[#allocation10 + $0x170] sm:$0xff]
    %v706 = vld [vmem:[#allocation10 + $0x178] sm:$0xff]
    %v707 = vld [vmem:[#allocation10 + $0x180] sm:$0xff]
    %v708 = vld [vmem:[#allocation10 + $0x188] sm:$0xff]
    %v709 = vld [vmem:[#allocation10 + $0x190] sm:$0xff]
    %v710 = vld [vmem:[#allocation10 + $0x198] sm:$0xff]
    %v711 = vld [vmem:[#allocation10 + $0x1a0] sm:$0xff]
    %v712 = vld [vmem:[#allocation10 + $0x1a8] sm:$0xff]
    %v713 = vld [vmem:[#allocation10 + $0x1b0] sm:$0xff]
    %v714 = vld [vmem:[#allocation10 + $0x1b8] sm:$0xff]
    %v715 = vld [vmem:[#allocation10 + $0x1c0] sm:$0xff]
    %v716 = vld [vmem:[#allocation10 + $0x1c8] sm:$0xff]
    %v717 = vld [vmem:[#allocation10 + $0x1d0] sm:$0xff]
    %v718 = vld [vmem:[#allocation10 + $0x1d8] sm:$0xff]
    %v719 = vld [vmem:[#allocation10 + $0x1e0] sm:$0xff]
    %v720 = vld [vmem:[#allocation10 + $0x1e8] sm:$0xff]
    %v721 = vld [vmem:[#allocation10 + $0x1f0] sm:$0xff]
    %v722 = vld [vmem:[#allocation10 + $0x1f8] sm:$0xff]
    %v723 = vld [vmem:[#allocation10 + $0x200] sm:$0xff]
    %v724 = vld [vmem:[#allocation10 + $0x208] sm:$0xff]
    %v725 = vld [vmem:[#allocation10 + $0x210] sm:$0xff]
    %v726 = vld [vmem:[#allocation10 + $0x218] sm:$0xff]
    %v727 = vld [vmem:[#allocation10 + $0x220] sm:$0xff]
    %v728 = vld [vmem:[#allocation10 + $0x228] sm:$0xff]
    %v729 = vld [vmem:[#allocation10 + $0x230] sm:$0xff]
    %v730 = vld [vmem:[#allocation10 + $0x238] sm:$0xff]
    %v731 = vld [vmem:[#allocation10 + $0x240] sm:$0xff]
    %v732 = vld [vmem:[#allocation10 + $0x248] sm:$0xff]
    %v733 = vld [vmem:[#allocation10 + $0x250] sm:$0xff]
    %v734 = vld [vmem:[#allocation10 + $0x258] sm:$0xff]
    %v735 = vld [vmem:[#allocation10 + $0x260] sm:$0xff]
    %v736 = vld [vmem:[#allocation10 + $0x268] sm:$0xff]
    %v737 = vld [vmem:[#allocation10 + $0x270] sm:$0xff]
    %v738 = vld [vmem:[#allocation10 + $0x278] sm:$0xff]
    %v739 = vld [vmem:[#allocation10 + $0x280] sm:$0xff]
    %v740 = vld [vmem:[#allocation10 + $0x288] sm:$0xff]
    %v741 = vld [vmem:[#allocation10 + $0x290] sm:$0xff]
    %v742 = vld [vmem:[#allocation10 + $0x298] sm:$0xff]
    %v743 = vld [vmem:[#allocation10 + $0x2a0] sm:$0xff]
    %v744 = vld [vmem:[#allocation10 + $0x2a8] sm:$0xff]
    %v745 = vld [vmem:[#allocation10 + $0x2b0] sm:$0xff]
    %v746 = vld [vmem:[#allocation10 + $0x2b8] sm:$0xff]
    %v747 = vld [vmem:[#allocation10 + $0x2c0] sm:$0xff]
    %v748 = vld [vmem:[#allocation10 + $0x2c8] sm:$0xff]
    %v749 = vld [vmem:[#allocation10 + $0x2d0] sm:$0xff]
    %v750 = vld [vmem:[#allocation10 + $0x2d8] sm:$0xff]
    %v751 = vld [vmem:[#allocation10 + $0x2e0] sm:$0xff]
    %v752 = vld [vmem:[#allocation10 + $0x2e8] sm:$0xff]
    %v753 = vld [vmem:[#allocation10 + $0x2f0] sm:$0xff]
    %v754 = vld [vmem:[#allocation10 + $0x2f8] sm:$0xff]
    %v755 = vld [vmem:[#allocation10 + $0x300] sm:$0xff]
    %v756 = vld [vmem:[#allocation10 + $0x308] sm:$0xff]
    %v757 = vld [vmem:[#allocation10 + $0x310] sm:$0xff]
    %v758 = vld [vmem:[#allocation10 + $0x318] sm:$0xff]
    %v759 = vld [vmem:[#allocation10 + $0x320] sm:$0xff]
    %v760 = vld [vmem:[#allocation10 + $0x328] sm:$0xff]
    %v761 = vld [vmem:[#allocation10 + $0x330] sm:$0xff]
    %v762 = vld [vmem:[#allocation10 + $0x338] sm:$0xff]
    %v763 = vld [vmem:[#allocation10 + $0x340] sm:$0xff]
    %v764 = vld [vmem:[#allocation10 + $0x348] sm:$0xff]
    %v765 = vld [vmem:[#allocation10 + $0x350] sm:$0xff]
    %v766 = vld [vmem:[#allocation10 + $0x358] sm:$0xff]
    %v767 = vld [vmem:[#allocation10 + $0x360] sm:$0xff]
    %v768 = vld [vmem:[#allocation10 + $0x368] sm:$0xff]
    %v769 = vld [vmem:[#allocation10 + $0x370] sm:$0xff]
    %v770 = vld [vmem:[#allocation10 + $0x378] sm:$0xff]
    %v771 = vld [vmem:[#allocation10 + $0x380] sm:$0xff]
    %v772 = vld [vmem:[#allocation10 + $0x388] sm:$0xff]
    %v773 = vld [vmem:[#allocation10 + $0x390] sm:$0xff]
    %v774 = vld [vmem:[#allocation10 + $0x398] sm:$0xff]
    %v775 = vld [vmem:[#allocation10 + $0x3a0] sm:$0xff]
    %v776 = vld [vmem:[#allocation10 + $0x3a8] sm:$0xff]
    %v777 = vld [vmem:[#allocation10 + $0x3b0] sm:$0xff]
    %v778 = vld [vmem:[#allocation10 + $0x3b8] sm:$0xff]
    %v779 = vld [vmem:[#allocation10 + $0x3c0] sm:$0xff]
    %v780 = vld [vmem:[#allocation10 + $0x3c8] sm:$0xff]
    %v781 = vld [vmem:[#allocation10 + $0x3d0] sm:$0xff]
    %v782 = vld [vmem:[#allocation10 + $0x3d8] sm:$0xff]
    %v783 = vld [vmem:[#allocation10 + $0x3e0] sm:$0xff]
    %v784 = vld [vmem:[#allocation10 + $0x3e8] sm:$0xff]
    %v785 = vld [vmem:[#allocation10 + $0x3f0] sm:$0xff]
    %v786 = vld [vmem:[#allocation10 + $0x3f8] sm:$0xff]
    %v787 = vpack.c.bf16 %v655, %v651
    %v788 = vpack.c.bf16 %v656, %v652
    %v789 = vpack.c.bf16 %v657, %v653
    %v790 = vpack.c.bf16 %v658, %v654
    %v919 = vunpack.c.l.b16 %v659
    %v920 = vunpack.c.h.b16 %v659
    %v921 = vunpack.c.l.b16 %v660
    %v922 = vunpack.c.h.b16 %v660
    %v923 = vunpack.c.l.b16 %v661
    %v924 = vunpack.c.h.b16 %v661
    %v925 = vunpack.c.l.b16 %v662
    %v926 = vunpack.c.h.b16 %v662
    %v927 = vunpack.c.l.b16 %v663
    %v928 = vunpack.c.h.b16 %v663
    %v929 = vunpack.c.l.b16 %v664
    %v930 = vunpack.c.h.b16 %v664
    %v931 = vunpack.c.l.b16 %v665
    %v932 = vunpack.c.h.b16 %v665
    %v933 = vunpack.c.l.b16 %v666
    %v934 = vunpack.c.h.b16 %v666
    %v935 = vunpack.c.l.b16 %v667
    %v936 = vunpack.c.h.b16 %v667
    %v937 = vunpack.c.l.b16 %v668
    %v938 = vunpack.c.h.b16 %v668
    %v939 = vunpack.c.l.b16 %v669
    %v940 = vunpack.c.h.b16 %v669
    %v941 = vunpack.c.l.b16 %v670
    %v942 = vunpack.c.h.b16 %v670
    %v943 = vunpack.c.l.b16 %v671
    %v944 = vunpack.c.h.b16 %v671
    %v945 = vunpack.c.l.b16 %v672
    %v946 = vunpack.c.h.b16 %v672
    %v947 = vunpack.c.l.b16 %v673
    %v948 = vunpack.c.h.b16 %v673
    %v949 = vunpack.c.l.b16 %v674
    %v950 = vunpack.c.h.b16 %v674
    %v951 = vunpack.c.l.b16 %v675
    %v952 = vunpack.c.h.b16 %v675
    %v953 = vunpack.c.l.b16 %v676
    %v954 = vunpack.c.h.b16 %v676
    %v955 = vunpack.c.l.b16 %v677
    %v956 = vunpack.c.h.b16 %v677
    %v957 = vunpack.c.l.b16 %v678
    %v958 = vunpack.c.h.b16 %v678
    %v959 = vunpack.c.l.b16 %v679
    %v960 = vunpack.c.h.b16 %v679
    %v961 = vunpack.c.l.b16 %v680
    %v962 = vunpack.c.h.b16 %v680
    %v963 = vunpack.c.l.b16 %v681
    %v964 = vunpack.c.h.b16 %v681
    %v965 = vunpack.c.l.b16 %v682
    %v966 = vunpack.c.h.b16 %v682
    %v967 = vunpack.c.l.b16 %v683
    %v968 = vunpack.c.h.b16 %v683
    %v969 = vunpack.c.l.b16 %v684
    %v970 = vunpack.c.h.b16 %v684
    %v971 = vunpack.c.l.b16 %v685
    %v972 = vunpack.c.h.b16 %v685
    %v973 = vunpack.c.l.b16 %v686
    %v974 = vunpack.c.h.b16 %v686
    %v975 = vunpack.c.l.b16 %v687
    %v976 = vunpack.c.h.b16 %v687
    %v977 = vunpack.c.l.b16 %v688
    %v978 = vunpack.c.h.b16 %v688
    %v979 = vunpack.c.l.b16 %v689
    %v980 = vunpack.c.h.b16 %v689
    %v981 = vunpack.c.l.b16 %v690
    %v982 = vunpack.c.h.b16 %v690
    %v983 = vunpack.c.l.b16 %v691
    %v984 = vunpack.c.h.b16 %v691
    %v985 = vunpack.c.l.b16 %v692
    %v986 = vunpack.c.h.b16 %v692
    %v987 = vunpack.c.l.b16 %v693
    %v988 = vunpack.c.h.b16 %v693
    %v989 = vunpack.c.l.b16 %v694
    %v990 = vunpack.c.h.b16 %v694
    %v991 = vunpack.c.l.b16 %v695
    %v992 = vunpack.c.h.b16 %v695
    %v993 = vunpack.c.l.b16 %v696
    %v994 = vunpack.c.h.b16 %v696
    %v995 = vunpack.c.l.b16 %v697
    %v996 = vunpack.c.h.b16 %v697
    %v997 = vunpack.c.l.b16 %v698
    %v998 = vunpack.c.h.b16 %v698
    %v999 = vunpack.c.l.b16 %v699
    %v1000 = vunpack.c.h.b16 %v699
    %v1001 = vunpack.c.l.b16 %v700
    %v1002 = vunpack.c.h.b16 %v700
    %v1003 = vunpack.c.l.b16 %v701
    %v1004 = vunpack.c.h.b16 %v701
    %v1005 = vunpack.c.l.b16 %v702
    %v1006 = vunpack.c.h.b16 %v702
    %v1007 = vunpack.c.l.b16 %v703
    %v1008 = vunpack.c.h.b16 %v703
    %v1009 = vunpack.c.l.b16 %v704
    %v1010 = vunpack.c.h.b16 %v704
    %v1011 = vunpack.c.l.b16 %v705
    %v1012 = vunpack.c.h.b16 %v705
    %v1013 = vunpack.c.l.b16 %v706
    %v1014 = vunpack.c.h.b16 %v706
    %v1015 = vunpack.c.l.b16 %v707
    %v1016 = vunpack.c.h.b16 %v707
    %v1017 = vunpack.c.l.b16 %v708
    %v1018 = vunpack.c.h.b16 %v708
    %v1019 = vunpack.c.l.b16 %v709
    %v1020 = vunpack.c.h.b16 %v709
    %v1021 = vunpack.c.l.b16 %v710
    %v1022 = vunpack.c.h.b16 %v710
    %v1023 = vunpack.c.l.b16 %v711
    %v1024 = vunpack.c.h.b16 %v711
    %v1025 = vunpack.c.l.b16 %v712
    %v1026 = vunpack.c.h.b16 %v712
    %v1027 = vunpack.c.l.b16 %v713
    %v1028 = vunpack.c.h.b16 %v713
    %v1029 = vunpack.c.l.b16 %v714
    %v1030 = vunpack.c.h.b16 %v714
    %v1031 = vunpack.c.l.b16 %v715
    %v1032 = vunpack.c.h.b16 %v715
    %v1033 = vunpack.c.l.b16 %v716
    %v1034 = vunpack.c.h.b16 %v716
    %v1035 = vunpack.c.l.b16 %v717
    %v1036 = vunpack.c.h.b16 %v717
    %v1037 = vunpack.c.l.b16 %v718
    %v1038 = vunpack.c.h.b16 %v718
    %v1039 = vunpack.c.l.b16 %v719
    %v1040 = vunpack.c.h.b16 %v719
    %v1041 = vunpack.c.l.b16 %v720
    %v1042 = vunpack.c.h.b16 %v720
    %v1043 = vunpack.c.l.b16 %v721
    %v1044 = vunpack.c.h.b16 %v721
    %v1045 = vunpack.c.l.b16 %v722
    %v1046 = vunpack.c.h.b16 %v722
    %v1047 = vunpack.c.l.b16 %v723
    %v1048 = vunpack.c.h.b16 %v723
    %v1049 = vunpack.c.l.b16 %v724
    %v1050 = vunpack.c.h.b16 %v724
    %v1051 = vunpack.c.l.b16 %v725
    %v1052 = vunpack.c.h.b16 %v725
    %v1053 = vunpack.c.l.b16 %v726
    %v1054 = vunpack.c.h.b16 %v726
    %v1055 = vunpack.c.l.b16 %v727
    %v1056 = vunpack.c.h.b16 %v727
    %v1057 = vunpack.c.l.b16 %v728
    %v1058 = vunpack.c.h.b16 %v728
    %v1059 = vunpack.c.l.b16 %v729
    %v1060 = vunpack.c.h.b16 %v729
    %v1061 = vunpack.c.l.b16 %v730
    %v1062 = vunpack.c.h.b16 %v730
    %v1063 = vunpack.c.l.b16 %v731
    %v1064 = vunpack.c.h.b16 %v731
    %v1065 = vunpack.c.l.b16 %v732
    %v1066 = vunpack.c.h.b16 %v732
    %v1067 = vunpack.c.l.b16 %v733
    %v1068 = vunpack.c.h.b16 %v733
    %v1069 = vunpack.c.l.b16 %v734
    %v1070 = vunpack.c.h.b16 %v734
    %v1071 = vunpack.c.l.b16 %v735
    %v1072 = vunpack.c.h.b16 %v735
    %v1073 = vunpack.c.l.b16 %v736
    %v1074 = vunpack.c.h.b16 %v736
    %v1075 = vunpack.c.l.b16 %v737
    %v1076 = vunpack.c.h.b16 %v737
    %v1077 = vunpack.c.l.b16 %v738
    %v1078 = vunpack.c.h.b16 %v738
    %v1079 = vunpack.c.l.b16 %v739
    %v1080 = vunpack.c.h.b16 %v739
    %v1081 = vunpack.c.l.b16 %v740
    %v1082 = vunpack.c.h.b16 %v740
    %v1083 = vunpack.c.l.b16 %v741
    %v1084 = vunpack.c.h.b16 %v741
    %v1085 = vunpack.c.l.b16 %v742
    %v1086 = vunpack.c.h.b16 %v742
    %v1087 = vunpack.c.l.b16 %v743
    %v1088 = vunpack.c.h.b16 %v743
    %v1089 = vunpack.c.l.b16 %v744
    %v1090 = vunpack.c.h.b16 %v744
    %v1091 = vunpack.c.l.b16 %v745
    %v1092 = vunpack.c.h.b16 %v745
    %v1093 = vunpack.c.l.b16 %v746
    %v1094 = vunpack.c.h.b16 %v746
    %v1095 = vunpack.c.l.b16 %v747
    %v1096 = vunpack.c.h.b16 %v747
    %v1097 = vunpack.c.l.b16 %v748
    %v1098 = vunpack.c.h.b16 %v748
    %v1099 = vunpack.c.l.b16 %v749
    %v1100 = vunpack.c.h.b16 %v749
    %v1101 = vunpack.c.l.b16 %v750
    %v1102 = vunpack.c.h.b16 %v750
    %v1103 = vunpack.c.l.b16 %v751
    %v1104 = vunpack.c.h.b16 %v751
    %v1105 = vunpack.c.l.b16 %v752
    %v1106 = vunpack.c.h.b16 %v752
    %v1107 = vunpack.c.l.b16 %v753
    %v1108 = vunpack.c.h.b16 %v753
    %v1109 = vunpack.c.l.b16 %v754
    %v1110 = vunpack.c.h.b16 %v754
    %v1111 = vunpack.c.l.b16 %v755
    %v1112 = vunpack.c.h.b16 %v755
    %v1113 = vunpack.c.l.b16 %v756
    %v1114 = vunpack.c.h.b16 %v756
    %v1115 = vunpack.c.l.b16 %v757
    %v1116 = vunpack.c.h.b16 %v757
    %v1117 = vunpack.c.l.b16 %v758
    %v1118 = vunpack.c.h.b16 %v758
    %v1119 = vunpack.c.l.b16 %v759
    %v1120 = vunpack.c.h.b16 %v759
    %v1121 = vunpack.c.l.b16 %v760
    %v1122 = vunpack.c.h.b16 %v760
    %v1123 = vunpack.c.l.b16 %v761
    %v1124 = vunpack.c.h.b16 %v761
    %v1125 = vunpack.c.l.b16 %v762
    %v1126 = vunpack.c.h.b16 %v762
    %v1127 = vunpack.c.l.b16 %v763
    %v1128 = vunpack.c.h.b16 %v763
    %v1129 = vunpack.c.l.b16 %v764
    %v1130 = vunpack.c.h.b16 %v764
    %v1131 = vunpack.c.l.b16 %v765
    %v1132 = vunpack.c.h.b16 %v765
    %v1133 = vunpack.c.l.b16 %v766
    %v1134 = vunpack.c.h.b16 %v766
    %v1135 = vunpack.c.l.b16 %v767
    %v1136 = vunpack.c.h.b16 %v767
    %v1137 = vunpack.c.l.b16 %v768
    %v1138 = vunpack.c.h.b16 %v768
    %v1139 = vunpack.c.l.b16 %v769
    %v1140 = vunpack.c.h.b16 %v769
    %v1141 = vunpack.c.l.b16 %v770
    %v1142 = vunpack.c.h.b16 %v770
    %v1143 = vunpack.c.l.b16 %v771
    %v1144 = vunpack.c.h.b16 %v771
    %v1145 = vunpack.c.l.b16 %v772
    %v1146 = vunpack.c.h.b16 %v772
    %v1147 = vunpack.c.l.b16 %v773
    %v1148 = vunpack.c.h.b16 %v773
    %v1149 = vunpack.c.l.b16 %v774
    %v1150 = vunpack.c.h.b16 %v774
    %v1151 = vunpack.c.l.b16 %v775
    %v1152 = vunpack.c.h.b16 %v775
    %v1153 = vunpack.c.l.b16 %v776
    %v1154 = vunpack.c.h.b16 %v776
    %v1155 = vunpack.c.l.b16 %v777
    %v1156 = vunpack.c.h.b16 %v777
    %v1157 = vunpack.c.l.b16 %v778
    %v1158 = vunpack.c.h.b16 %v778
    %v1159 = vunpack.c.l.b16 %v779
    %v1160 = vunpack.c.h.b16 %v779
    %v1161 = vunpack.c.l.b16 %v780
    %v1162 = vunpack.c.h.b16 %v780
    %v1163 = vunpack.c.l.b16 %v781
    %v1164 = vunpack.c.h.b16 %v781
    %v1165 = vunpack.c.l.b16 %v782
    %v1166 = vunpack.c.h.b16 %v782
    %v1167 = vunpack.c.l.b16 %v783
    %v1168 = vunpack.c.h.b16 %v783
    %v1169 = vunpack.c.l.b16 %v784
    %v1170 = vunpack.c.h.b16 %v784
    %v1171 = vunpack.c.l.b16 %v785
    %v1172 = vunpack.c.h.b16 %v785
    %v1173 = vunpack.c.l.b16 %v786
    %v1174 = vunpack.c.h.b16 %v786
    %v1175 = vpack.c.b16 %v923, %v919
    %v1176 = vpack.c.b16 %v924, %v920
    %v1177 = vpack.c.b16 %v925, %v921
    %v1178 = vpack.c.b16 %v926, %v922
    %v1179 = vpack.c.b16 %v931, %v927
    %v1180 = vpack.c.b16 %v932, %v928
    %v1181 = vpack.c.b16 %v933, %v929
    %v1182 = vpack.c.b16 %v934, %v930
    %v1183 = vpack.c.b16 %v939, %v935
    %v1184 = vpack.c.b16 %v940, %v936
    %v1185 = vpack.c.b16 %v941, %v937
    %v1186 = vpack.c.b16 %v942, %v938
    %v1187 = vpack.c.b16 %v947, %v943
    %v1188 = vpack.c.b16 %v948, %v944
    %v1189 = vpack.c.b16 %v949, %v945
    %v1190 = vpack.c.b16 %v950, %v946
    %v1191 = vpack.c.b16 %v955, %v951
    %v1192 = vpack.c.b16 %v956, %v952
    %v1193 = vpack.c.b16 %v957, %v953
    %v1194 = vpack.c.b16 %v958, %v954
    %v1195 = vpack.c.b16 %v963, %v959
    %v1196 = vpack.c.b16 %v964, %v960
    %v1197 = vpack.c.b16 %v965, %v961
    %v1198 = vpack.c.b16 %v966, %v962
    %v1199 = vpack.c.b16 %v971, %v967
    %v1200 = vpack.c.b16 %v972, %v968
    %v1201 = vpack.c.b16 %v973, %v969
    %v1202 = vpack.c.b16 %v974, %v970
    %v1203 = vpack.c.b16 %v979, %v975
    %v1204 = vpack.c.b16 %v980, %v976
    %v1205 = vpack.c.b16 %v981, %v977
    %v1206 = vpack.c.b16 %v982, %v978
    %v1207 = vpack.c.b16 %v987, %v983
    %v1208 = vpack.c.b16 %v988, %v984
    %v1209 = vpack.c.b16 %v989, %v985
    %v1210 = vpack.c.b16 %v990, %v986
    %v1211 = vpack.c.b16 %v995, %v991
    %v1212 = vpack.c.b16 %v996, %v992
    %v1213 = vpack.c.b16 %v997, %v993
    %v1214 = vpack.c.b16 %v998, %v994
    %v1215 = vpack.c.b16 %v1003, %v999
    %v1216 = vpack.c.b16 %v1004, %v1000
    %v1217 = vpack.c.b16 %v1005, %v1001
    %v1218 = vpack.c.b16 %v1006, %v1002
    %v1219 = vpack.c.b16 %v1011, %v1007
    %v1220 = vpack.c.b16 %v1012, %v1008
    %v1221 = vpack.c.b16 %v1013, %v1009
    %v1222 = vpack.c.b16 %v1014, %v1010
    %v1223 = vpack.c.b16 %v1019, %v1015
    %v1224 = vpack.c.b16 %v1020, %v1016
    %v1225 = vpack.c.b16 %v1021, %v1017
    %v1226 = vpack.c.b16 %v1022, %v1018
    %v1227 = vpack.c.b16 %v1027, %v1023
    %v1228 = vpack.c.b16 %v1028, %v1024
    %v1229 = vpack.c.b16 %v1029, %v1025
    %v1230 = vpack.c.b16 %v1030, %v1026
    %v1231 = vpack.c.b16 %v1035, %v1031
    %v1232 = vpack.c.b16 %v1036, %v1032
    %v1233 = vpack.c.b16 %v1037, %v1033
    %v1234 = vpack.c.b16 %v1038, %v1034
    %v1235 = vpack.c.b16 %v1043, %v1039
    %v1236 = vpack.c.b16 %v1044, %v1040
    %v1237 = vpack.c.b16 %v1045, %v1041
    %v1238 = vpack.c.b16 %v1046, %v1042
    %v1239 = vpack.c.b16 %v1051, %v1047
    %v1240 = vpack.c.b16 %v1052, %v1048
    %v1241 = vpack.c.b16 %v1053, %v1049
    %v1242 = vpack.c.b16 %v1054, %v1050
    %v1243 = vpack.c.b16 %v1059, %v1055
    %v1244 = vpack.c.b16 %v1060, %v1056
    %v1245 = vpack.c.b16 %v1061, %v1057
    %v1246 = vpack.c.b16 %v1062, %v1058
    %v1247 = vpack.c.b16 %v1067, %v1063
    %v1248 = vpack.c.b16 %v1068, %v1064
    %v1249 = vpack.c.b16 %v1069, %v1065
    %v1250 = vpack.c.b16 %v1070, %v1066
    %v1251 = vpack.c.b16 %v1075, %v1071
    %v1252 = vpack.c.b16 %v1076, %v1072
    %v1253 = vpack.c.b16 %v1077, %v1073
    %v1254 = vpack.c.b16 %v1078, %v1074
    %v1255 = vpack.c.b16 %v1083, %v1079
    %v1256 = vpack.c.b16 %v1084, %v1080
    %v1257 = vpack.c.b16 %v1085, %v1081
    %v1258 = vpack.c.b16 %v1086, %v1082
    %v1259 = vpack.c.b16 %v1091, %v1087
    %v1260 = vpack.c.b16 %v1092, %v1088
    %v1261 = vpack.c.b16 %v1093, %v1089
    %v1262 = vpack.c.b16 %v1094, %v1090
    %v1263 = vpack.c.b16 %v1099, %v1095
    %v1264 = vpack.c.b16 %v1100, %v1096
    %v1265 = vpack.c.b16 %v1101, %v1097
    %v1266 = vpack.c.b16 %v1102, %v1098
    %v1267 = vpack.c.b16 %v1107, %v1103
    %v1268 = vpack.c.b16 %v1108, %v1104
    %v1269 = vpack.c.b16 %v1109, %v1105
    %v1270 = vpack.c.b16 %v1110, %v1106
    %v1271 = vpack.c.b16 %v1115, %v1111
    %v1272 = vpack.c.b16 %v1116, %v1112
    %v1273 = vpack.c.b16 %v1117, %v1113
    %v1274 = vpack.c.b16 %v1118, %v1114
    %v1275 = vpack.c.b16 %v1123, %v1119
    %v1276 = vpack.c.b16 %v1124, %v1120
    %v1277 = vpack.c.b16 %v1125, %v1121
    %v1278 = vpack.c.b16 %v1126, %v1122
    %v1279 = vpack.c.b16 %v1131, %v1127
    %v1280 = vpack.c.b16 %v1132, %v1128
    %v1281 = vpack.c.b16 %v1133, %v1129
    %v1282 = vpack.c.b16 %v1134, %v1130
    %v1283 = vpack.c.b16 %v1139, %v1135
    %v1284 = vpack.c.b16 %v1140, %v1136
    %v1285 = vpack.c.b16 %v1141, %v1137
    %v1286 = vpack.c.b16 %v1142, %v1138
    %v1287 = vpack.c.b16 %v1147, %v1143
    %v1288 = vpack.c.b16 %v1148, %v1144
    %v1289 = vpack.c.b16 %v1149, %v1145
    %v1290 = vpack.c.b16 %v1150, %v1146
    %v1291 = vpack.c.b16 %v1155, %v1151
    %v1292 = vpack.c.b16 %v1156, %v1152
    %v1293 = vpack.c.b16 %v1157, %v1153
    %v1294 = vpack.c.b16 %v1158, %v1154
    %v1295 = vpack.c.b16 %v1163, %v1159
    %v1296 = vpack.c.b16 %v1164, %v1160
    %v1297 = vpack.c.b16 %v1165, %v1161
    %v1298 = vpack.c.b16 %v1166, %v1162
    %v1299 = vpack.c.b16 %v1171, %v1167
    %v1300 = vpack.c.b16 %v1172, %v1168
    %v1301 = vpack.c.b16 %v1173, %v1169
    %v1302 = vpack.c.b16 %v1174, %v1170
    %1431 = vmatprep.subr.bf16.mxu0 %v1204
    %1432 = vmatpush1.bf16.msra.mxu0 %v1203
    %1433 = vmatprep.subr.bf16.mxu0 %v1200
    %1434 = vmatpush1.bf16.msra.mxu0 %v1199
    %1435 = vmatprep.subr.bf16.mxu0 %v1196
    %1436 = vmatpush1.bf16.msra.mxu0 %v1195
    %1437 = vmatprep.subr.bf16.mxu0 %v1192
    %1438 = vmatpush1.bf16.msra.mxu0 %v1191
    %1439 = vmatprep.subr.bf16.mxu0 %v1188
    %1440 = vmatpush1.bf16.msra.mxu0 %v1187
    %1441 = vmatprep.subr.bf16.mxu0 %v1184
    %1442 = vmatpush1.bf16.msra.mxu0 %v1183
    %1443 = vmatprep.subr.bf16.mxu0 %v1180
    %1444 = vmatpush1.bf16.msra.mxu0 %v1179
    %1445 = vmatprep.subr.bf16.mxu0 %v1176
    %1446 = vmatpush1.bf16.msra.mxu0 %v1175
    %1447 = vmatprep.subr.bf16.mxu0 %v1236
    %1448 = vmatpush2.bf16.msra.mxu0 %v1235
    %1449 = vmatprep.subr.bf16.mxu0 %v1232
    %1450 = vmatpush2.bf16.msra.mxu0 %v1231
    %1451 = vmatprep.subr.bf16.mxu0 %v1228
    %1452 = vmatpush2.bf16.msra.mxu0 %v1227
    %1453 = vmatprep.subr.bf16.mxu0 %v1224
    %1454 = vmatpush2.bf16.msra.mxu0 %v1223
    %1455 = vmatprep.subr.bf16.mxu0 %v1220
    %1456 = vmatpush2.bf16.msra.mxu0 %v1219
    %1457 = vmatprep.subr.bf16.mxu0 %v1216
    %1458 = vmatpush2.bf16.msra.mxu0 %v1215
    %1459 = vmatprep.subr.bf16.mxu0 %v1212
    %1460 = vmatpush2.bf16.msra.mxu0 %v1211
    %1461 = vmatprep.subr.bf16.mxu0 %v1208
    %1462 = vmatpush2.bf16.msra.mxu0 %v1207
    %1463 = vmatprep.mubr.bf16.mxu0 %v788
    %1464 = vmatmul.mubr.bf16.gmra.mxu0 %v787
    %v1465 = vpop.f32.mrf.mxu0
    %v1466 = vadd.f32 0.0, %v1465
    %v1467 = vpop.f32.mrf.mxu0
    %v1468 = vadd.f32 0.0, %v1467
    %v1469 = vpop.f32.mrf.mxu0
    %v1470 = vadd.f32 0.0, %v1469
    %v1471 = vpop.f32.mrf.mxu0
    %v1472 = vadd.f32 0.0, %v1471
    %1473 = vdwg.mxu0
    %1474 = vmatprep.subr.bf16.mxu0 %v1268
    %1475 = vmatpush1.bf16.msra.mxu0 %v1267
    %1476 = vmatprep.subr.bf16.mxu0 %v1264
    %1477 = vmatpush1.bf16.msra.mxu0 %v1263
    %1478 = vmatprep.subr.bf16.mxu0 %v1260
    %1479 = vmatpush1.bf16.msra.mxu0 %v1259
    %1480 = vmatprep.subr.bf16.mxu0 %v1256
    %1481 = vmatpush1.bf16.msra.mxu0 %v1255
    %1482 = vmatprep.subr.bf16.mxu0 %v1252
    %1483 = vmatpush1.bf16.msra.mxu0 %v1251
    %1484 = vmatprep.subr.bf16.mxu0 %v1248
    %1485 = vmatpush1.bf16.msra.mxu0 %v1247
    %1486 = vmatprep.subr.bf16.mxu0 %v1244
    %1487 = vmatpush1.bf16.msra.mxu0 %v1243
    %1488 = vmatprep.subr.bf16.mxu0 %v1240
    %1489 = vmatpush1.bf16.msra.mxu0 %v1239
    %1490 = vmatprep.subr.bf16.mxu0 %v1300
    %1491 = vmatpush2.bf16.msra.mxu0 %v1299
    %1492 = vmatprep.subr.bf16.mxu0 %v1296
    %1493 = vmatpush2.bf16.msra.mxu0 %v1295
    %1494 = vmatprep.subr.bf16.mxu0 %v1292
    %1495 = vmatpush2.bf16.msra.mxu0 %v1291
    %1496 = vmatprep.subr.bf16.mxu0 %v1288
    %1497 = vmatpush2.bf16.msra.mxu0 %v1287
    %1498 = vmatprep.subr.bf16.mxu0 %v1284
    %1499 = vmatpush2.bf16.msra.mxu0 %v1283
    %1500 = vmatprep.subr.bf16.mxu0 %v1280
    %1501 = vmatpush2.bf16.msra.mxu0 %v1279
    %1502 = vmatprep.subr.bf16.mxu0 %v1276
    %1503 = vmatpush2.bf16.msra.mxu0 %v1275
    %1504 = vmatprep.subr.bf16.mxu0 %v1272
    %1505 = vmatpush2.bf16.msra.mxu0 %v1271
    %1506 = vmatprep.mubr.bf16.mxu0 %v790
    %1507 = vmatmul.mubr.bf16.gmra.mxu0 %v789
    %v1508 = vpop.f32.mrf.mxu0
    %v1509 = vadd.f32 %v1466, %v1508
    %v1510 = vpop.f32.mrf.mxu0
    %v1511 = vadd.f32 %v1468, %v1510
    %v1512 = vpop.f32.mrf.mxu0
    %v1513 = vadd.f32 %v1470, %v1512
    %v1514 = vpop.f32.mrf.mxu0
    %v1515 = vadd.f32 %v1472, %v1514
    %1516 = vdwg.mxu0
    %1517 = vmatprep.subr.bf16.mxu0 %v1206
    %1518 = vmatpush1.bf16.msra.mxu0 %v1205
    %1519 = vmatprep.subr.bf16.mxu0 %v1202
    %1520 = vmatpush1.bf16.msra.mxu0 %v1201
    %1521 = vmatprep.subr.bf16.mxu0 %v1198
    %1522 = vmatpush1.bf16.msra.mxu0 %v1197
    %1523 = vmatprep.subr.bf16.mxu0 %v1194
    %1524 = vmatpush1.bf16.msra.mxu0 %v1193
    %1525 = vmatprep.subr.bf16.mxu0 %v1190
    %1526 = vmatpush1.bf16.msra.mxu0 %v1189
    %1527 = vmatprep.subr.bf16.mxu0 %v1186
    %1528 = vmatpush1.bf16.msra.mxu0 %v1185
    %1529 = vmatprep.subr.bf16.mxu0 %v1182
    %1530 = vmatpush1.bf16.msra.mxu0 %v1181
    %1531 = vmatprep.subr.bf16.mxu0 %v1178
    %1532 = vmatpush1.bf16.msra.mxu0 %v1177
    %1533 = vmatprep.subr.bf16.mxu0 %v1238
    %1534 = vmatpush2.bf16.msra.mxu0 %v1237
    %1535 = vmatprep.subr.bf16.mxu0 %v1234
    %1536 = vmatpush2.bf16.msra.mxu0 %v1233
    %1537 = vmatprep.subr.bf16.mxu0 %v1230
    %1538 = vmatpush2.bf16.msra.mxu0 %v1229
    %1539 = vmatprep.subr.bf16.mxu0 %v1226
    %1540 = vmatpush2.bf16.msra.mxu0 %v1225
    %1541 = vmatprep.subr.bf16.mxu0 %v1222
    %1542 = vmatpush2.bf16.msra.mxu0 %v1221
    %1543 = vmatprep.subr.bf16.mxu0 %v1218
    %1544 = vmatpush2.bf16.msra.mxu0 %v1217
    %1545 = vmatprep.subr.bf16.mxu0 %v1214
    %1546 = vmatpush2.bf16.msra.mxu0 %v1213
    %1547 = vmatprep.subr.bf16.mxu0 %v1210
    %1548 = vmatpush2.bf16.msra.mxu0 %v1209
    %1549 = vmatprep.mubr.bf16.mxu0 %v788
    %1550 = vmatmul.mubr.bf16.gmra.mxu0 %v787
    %v1551 = vpop.f32.mrf.mxu0
    %v1552 = vadd.f32 0.0, %v1551
    %v1553 = vpop.f32.mrf.mxu0
    %v1554 = vadd.f32 0.0, %v1553
    %v1555 = vpop.f32.mrf.mxu0
    %v1556 = vadd.f32 0.0, %v1555
    %v1557 = vpop.f32.mrf.mxu0
    %v1558 = vadd.f32 0.0, %v1557
    %1559 = vdwg.mxu0
    %1560 = vmatprep.subr.bf16.mxu0 %v1270
    %1561 = vmatpush1.bf16.msra.mxu0 %v1269
    %1562 = vmatprep.subr.bf16.mxu0 %v1266
    %1563 = vmatpush1.bf16.msra.mxu0 %v1265
    %1564 = vmatprep.subr.bf16.mxu0 %v1262
    %1565 = vmatpush1.bf16.msra.mxu0 %v1261
    %1566 = vmatprep.subr.bf16.mxu0 %v1258
    %1567 = vmatpush1.bf16.msra.mxu0 %v1257
    %1568 = vmatprep.subr.bf16.mxu0 %v1254
    %1569 = vmatpush1.bf16.msra.mxu0 %v1253
    %1570 = vmatprep.subr.bf16.mxu0 %v1250
    %1571 = vmatpush1.bf16.msra.mxu0 %v1249
    %1572 = vmatprep.subr.bf16.mxu0 %v1246
    %1573 = vmatpush1.bf16.msra.mxu0 %v1245
    %1574 = vmatprep.subr.bf16.mxu0 %v1242
    %1575 = vmatpush1.bf16.msra.mxu0 %v1241
    %1576 = vmatprep.subr.bf16.mxu0 %v1302
    %1577 = vmatpush2.bf16.msra.mxu0 %v1301
    %1578 = vmatprep.subr.bf16.mxu0 %v1298
    %1579 = vmatpush2.bf16.msra.mxu0 %v1297
    %1580 = vmatprep.subr.bf16.mxu0 %v1294
    %1581 = vmatpush2.bf16.msra.mxu0 %v1293
    %1582 = vmatprep.subr.bf16.mxu0 %v1290
    %1583 = vmatpush2.bf16.msra.mxu0 %v1289
    %1584 = vmatprep.subr.bf16.mxu0 %v1286
    %1585 = vmatpush2.bf16.msra.mxu0 %v1285
    %1586 = vmatprep.subr.bf16.mxu0 %v1282
    %1587 = vmatpush2.bf16.msra.mxu0 %v1281
    %1588 = vmatprep.subr.bf16.mxu0 %v1278
    %1589 = vmatpush2.bf16.msra.mxu0 %v1277
    %1590 = vmatprep.subr.bf16.mxu0 %v1274
    %1591 = vmatpush2.bf16.msra.mxu0 %v1273
    %1592 = vmatprep.mubr.bf16.mxu0 %v790
    %1593 = vmatmul.mubr.bf16.gmra.mxu0 %v789
    %v1594 = vpop.f32.mrf.mxu0
    %v1595 = vadd.f32 %v1552, %v1594
    %v1596 = vpop.f32.mrf.mxu0
    %v1597 = vadd.f32 %v1554, %v1596
    %v1598 = vpop.f32.mrf.mxu0
    %v1599 = vadd.f32 %v1556, %v1598
    %v1600 = vpop.f32.mrf.mxu0
    %v1601 = vadd.f32 %v1558, %v1600
    %1602 = vdwg.mxu0
    %v1603 = vld [vmem:[#allocation13] sm:$0xff]
    %v1604 = vld [vmem:[#allocation13 + $0x8] sm:$0xff]
    %v1605 = vld [vmem:[#allocation13 + $0x10] sm:$0xff]
    %v1606 = vld [vmem:[#allocation13 + $0x18] sm:$0xff]
    %v1607 = vld [vmem:[#allocation12] sm:$0xf]
    %v1608 = vld [vmem:[#allocation12 + $0x4] sm:$0xf]
    %v1609 = vld [vmem:[#allocation12 + $0x8] sm:$0xf]
    %v1610 = vld [vmem:[#allocation12 + $0xc] sm:$0xf]
    %v1611 = vpack.c.bf16 %v1513, %v1509
    %v1616 = vunpack.c.l.b16 %v1607
    %v1617 = vunpack.c.l.b16 %v1608
    %v1618 = vunpack.c.l.b16 %v1609
    %v1619 = vunpack.c.l.b16 %v1610
    %v1620 = vpack.c.b16 %v1617, %v1616
    %v1621 = vpack.c.b16 %v1619, %v1618
    %vm1622 = vcmask 130048
    %v1624 = vsel %vm1622, %v1620, 0
    %v1627 = vsel %vm1622, %v1621, 0
    %1629 = vmatprep.subr.bf16.mxu0 0
    %1630 = vmatpush1.bf16.msra.mxu0 0
    %1631 = vmatprep.subr.bf16.mxu0 0
    %1632 = vmatpush1.bf16.msra.mxu0 0
    %1633 = vmatprep.subr.bf16.mxu0 0
    %1634 = vmatpush1.bf16.msra.mxu0 0
    %1635 = vmatprep.subr.bf16.mxu0 0
    %1636 = vmatpush1.bf16.msra.mxu0 0
    %1637 = vmatprep.subr.bf16.mxu0 0
    %1638 = vmatpush1.bf16.msra.mxu0 0
    %1639 = vmatprep.subr.bf16.mxu0 0
    %1640 = vmatpush1.bf16.msra.mxu0 0
    %1641 = vmatprep.subr.bf16.mxu0 0
    %1642 = vmatpush1.bf16.msra.mxu0 0
    %1643 = vmatprep.subr.bf16.mxu0 0
    %1644 = vmatpush1.bf16.msra.mxu0 %v1611
    %1645 = vmatprep.subr.bf16.mxu0 0
    %1646 = vmatpush2.bf16.msra.mxu0 0
    %1647 = vmatprep.subr.bf16.mxu0 0
    %1648 = vmatpush2.bf16.msra.mxu0 0
    %1649 = vmatprep.subr.bf16.mxu0 0
    %1650 = vmatpush2.bf16.msra.mxu0 0
    %1651 = vmatprep.subr.bf16.mxu0 0
    %1652 = vmatpush2.bf16.msra.mxu0 0
    %1653 = vmatprep.subr.bf16.mxu0 0
    %1654 = vmatpush2.bf16.msra.mxu0 0
    %1655 = vmatprep.subr.bf16.mxu0 0
    %1656 = vmatpush2.bf16.msra.mxu0 0
    %1657 = vmatprep.subr.bf16.mxu0 0
    %1658 = vmatpush2.bf16.msra.mxu0 0
    %1659 = vmatprep.subr.bf16.mxu0 0
    %1660 = vmatpush2.bf16.msra.mxu0 0
    %1661 = vmatprep.mubr.bf16.mxu0 0
    %1662 = vmatmul.mubr.bf16.gmra.mxu0 %v1624
    %v1663 = vpop.f32.mrf.mxu0
    %v1664 = vadd.f32 0.0, %v1663
    %v1665 = vpop.f32.mrf.mxu0
    %v1666 = vpop.f32.mrf.mxu0
    %v1667 = vadd.f32 0.0, %v1666
    %v1668 = vpop.f32.mrf.mxu0
    %1669 = vmatprep.mubr.bf16.mxu0 0
    %1670 = vmatmul.mubr.bf16.gmra.mxu0 %v1627
    %v1671 = vpop.f32.mrf.mxu0
    %v1672 = vadd.f32 0.0, %v1671
    %v1673 = vpop.f32.mrf.mxu0
    %v1674 = vpop.f32.mrf.mxu0
    %v1675 = vadd.f32 0.0, %v1674
    %v1676 = vpop.f32.mrf.mxu0
    %1677 = vdwg.mxu0
    %1679 = vset.pattern.permute.xlu0 0
    %1680 = vperm.xlu0 %1679, %v1603
    %v1681 = vpop.permute.xlu0 %1680
    %1684 = vset.pattern.permute.xlu0 0
    %1685 = vperm.xlu0 %1684, %v1604
    %v1686 = vpop.permute.xlu0 %1685
    %1689 = vset.pattern.permute.xlu0 0
    %1690 = vperm.xlu0 %1689, %v1605
    %v1691 = vpop.permute.xlu0 %1690
    %1694 = vset.pattern.permute.xlu0 0
    %1695 = vperm.xlu0 %1694, %v1606
    %v1696 = vpop.permute.xlu0 %1695
    %v1698 = vadd.f32 %v1681, %v1664
    %v1699 = vadd.f32 %v1686, %v1667
    %v1700 = vadd.f32 %v1691, %v1672
    %v1701 = vadd.f32 %v1696, %v1675
    %s1702 = scalar_lea.vmem [#allocation12], 16
    %v1703 = vld [vmem:[%s1702] sm:$0xf]
    %v1704 = vld [vmem:[%s1702 + $0x4] sm:$0xf]
    %v1705 = vld [vmem:[%s1702 + $0x8] sm:$0xf]
    %v1706 = vld [vmem:[%s1702 + $0xc] sm:$0xf]
    %v1707 = vpack.c.bf16 %v1515, %v1511
    %v1712 = vunpack.c.l.b16 %v1703
    %v1713 = vunpack.c.l.b16 %v1704
    %v1714 = vunpack.c.l.b16 %v1705
    %v1715 = vunpack.c.l.b16 %v1706
    %v1716 = vpack.c.b16 %v1713, %v1712
    %v1717 = vpack.c.b16 %v1715, %v1714
    %v1719 = vsel %vm1622, %v1716, 0
    %v1722 = vsel %vm1622, %v1717, 0
    %1724 = vmatprep.subr.bf16.mxu0 0
    %1725 = vmatpush1.bf16.msra.mxu0 0
    %1726 = vmatprep.subr.bf16.mxu0 0
    %1727 = vmatpush1.bf16.msra.mxu0 0
    %1728 = vmatprep.subr.bf16.mxu0 0
    %1729 = vmatpush1.bf16.msra.mxu0 0
    %1730 = vmatprep.subr.bf16.mxu0 0
    %1731 = vmatpush1.bf16.msra.mxu0 0
    %1732 = vmatprep.subr.bf16.mxu0 0
    %1733 = vmatpush1.bf16.msra.mxu0 0
    %1734 = vmatprep.subr.bf16.mxu0 0
    %1735 = vmatpush1.bf16.msra.mxu0 0
    %1736 = vmatprep.subr.bf16.mxu0 0
    %1737 = vmatpush1.bf16.msra.mxu0 0
    %1738 = vmatprep.subr.bf16.mxu0 0
    %1739 = vmatpush1.bf16.msra.mxu0 %v1707
    %1740 = vmatprep.subr.bf16.mxu0 0
    %1741 = vmatpush2.bf16.msra.mxu0 0
    %1742 = vmatprep.subr.bf16.mxu0 0
    %1743 = vmatpush2.bf16.msra.mxu0 0
    %1744 = vmatprep.subr.bf16.mxu0 0
    %1745 = vmatpush2.bf16.msra.mxu0 0
    %1746 = vmatprep.subr.bf16.mxu0 0
    %1747 = vmatpush2.bf16.msra.mxu0 0
    %1748 = vmatprep.subr.bf16.mxu0 0
    %1749 = vmatpush2.bf16.msra.mxu0 0
    %1750 = vmatprep.subr.bf16.mxu0 0
    %1751 = vmatpush2.bf16.msra.mxu0 0
    %1752 = vmatprep.subr.bf16.mxu0 0
    %1753 = vmatpush2.bf16.msra.mxu0 0
    %1754 = vmatprep.subr.bf16.mxu0 0
    %1755 = vmatpush2.bf16.msra.mxu0 0
    %1756 = vmatprep.mubr.bf16.mxu0 0
    %1757 = vmatmul.mubr.bf16.gmra.mxu0 %v1719
    %v1758 = vpop.f32.mrf.mxu0
    %v1759 = vadd.f32 0.0, %v1758
    %v1760 = vpop.f32.mrf.mxu0
    %v1761 = vpop.f32.mrf.mxu0
    %v1762 = vadd.f32 0.0, %v1761
    %v1763 = vpop.f32.mrf.mxu0
    %1764 = vmatprep.mubr.bf16.mxu0 0
    %1765 = vmatmul.mubr.bf16.gmra.mxu0 %v1722
    %v1766 = vpop.f32.mrf.mxu0
    %v1767 = vadd.f32 0.0, %v1766
    %v1768 = vpop.f32.mrf.mxu0
    %v1769 = vpop.f32.mrf.mxu0
    %v1770 = vadd.f32 0.0, %v1769
    %v1771 = vpop.f32.mrf.mxu0
    %1772 = vdwg.mxu0
    %v1773 = vadd.f32 %v1698, %v1759
    %v1774 = vadd.f32 %v1699, %v1762
    %v1775 = vadd.f32 %v1700, %v1767
    %v1776 = vadd.f32 %v1701, %v1770
    %s1777 = scalar_lea.vmem [#allocation12], 32
    %v1778 = vld [vmem:[%s1777] sm:$0xf]
    %v1779 = vld [vmem:[%s1777 + $0x4] sm:$0xf]
    %v1780 = vld [vmem:[%s1777 + $0x8] sm:$0xf]
    %v1781 = vld [vmem:[%s1777 + $0xc] sm:$0xf]
    %v1782 = vpack.c.bf16 %v1599, %v1595
    %v1787 = vunpack.c.l.b16 %v1778
    %v1788 = vunpack.c.l.b16 %v1779
    %v1789 = vunpack.c.l.b16 %v1780
    %v1790 = vunpack.c.l.b16 %v1781
    %v1791 = vpack.c.b16 %v1788, %v1787
    %v1792 = vpack.c.b16 %v1790, %v1789
    %v1794 = vsel %vm1622, %v1791, 0
    %v1797 = vsel %vm1622, %v1792, 0
    %1799 = vmatprep.subr.bf16.mxu0 0
    %1800 = vmatpush1.bf16.msra.mxu0 0
    %1801 = vmatprep.subr.bf16.mxu0 0
    %1802 = vmatpush1.bf16.msra.mxu0 0
    %1803 = vmatprep.subr.bf16.mxu0 0
    %1804 = vmatpush1.bf16.msra.mxu0 0
    %1805 = vmatprep.subr.bf16.mxu0 0
    %1806 = vmatpush1.bf16.msra.mxu0 0
    %1807 = vmatprep.subr.bf16.mxu0 0
    %1808 = vmatpush1.bf16.msra.mxu0 0
    %1809 = vmatprep.subr.bf16.mxu0 0
    %1810 = vmatpush1.bf16.msra.mxu0 0
    %1811 = vmatprep.subr.bf16.mxu0 0
    %1812 = vmatpush1.bf16.msra.mxu0 0
    %1813 = vmatprep.subr.bf16.mxu0 0
    %1814 = vmatpush1.bf16.msra.mxu0 %v1782
    %1815 = vmatprep.subr.bf16.mxu0 0
    %1816 = vmatpush2.bf16.msra.mxu0 0
    %1817 = vmatprep.subr.bf16.mxu0 0
    %1818 = vmatpush2.bf16.msra.mxu0 0
    %1819 = vmatprep.subr.bf16.mxu0 0
    %1820 = vmatpush2.bf16.msra.mxu0 0
    %1821 = vmatprep.subr.bf16.mxu0 0
    %1822 = vmatpush2.bf16.msra.mxu0 0
    %1823 = vmatprep.subr.bf16.mxu0 0
    %1824 = vmatpush2.bf16.msra.mxu0 0
    %1825 = vmatprep.subr.bf16.mxu0 0
    %1826 = vmatpush2.bf16.msra.mxu0 0
    %1827 = vmatprep.subr.bf16.mxu0 0
    %1828 = vmatpush2.bf16.msra.mxu0 0
    %1829 = vmatprep.subr.bf16.mxu0 0
    %1830 = vmatpush2.bf16.msra.mxu0 0
    %1831 = vmatprep.mubr.bf16.mxu0 0
    %1832 = vmatmul.mubr.bf16.gmra.mxu0 %v1794
    %v1833 = vpop.f32.mrf.mxu0
    %v1834 = vadd.f32 0.0, %v1833
    %v1835 = vpop.f32.mrf.mxu0
    %v1836 = vpop.f32.mrf.mxu0
    %v1837 = vadd.f32 0.0, %v1836
    %v1838 = vpop.f32.mrf.mxu0
    %1839 = vmatprep.mubr.bf16.mxu0 0
    %1840 = vmatmul.mubr.bf16.gmra.mxu0 %v1797
    %v1841 = vpop.f32.mrf.mxu0
    %v1842 = vadd.f32 0.0, %v1841
    %v1843 = vpop.f32.mrf.mxu0
    %v1844 = vpop.f32.mrf.mxu0
    %v1845 = vadd.f32 0.0, %v1844
    %v1846 = vpop.f32.mrf.mxu0
    %1847 = vdwg.mxu0
    %v1848 = vadd.f32 %v1773, %v1834
    %v1849 = vadd.f32 %v1774, %v1837
    %v1850 = vadd.f32 %v1775, %v1842
    %v1851 = vadd.f32 %v1776, %v1845
    %s1852 = scalar_lea.vmem [#allocation12], 48
    %v1853 = vld [vmem:[%s1852] sm:$0xf]
    %v1854 = vld [vmem:[%s1852 + $0x4] sm:$0xf]
    %v1855 = vld [vmem:[%s1852 + $0x8] sm:$0xf]
    %v1856 = vld [vmem:[%s1852 + $0xc] sm:$0xf]
    %v1857 = vpack.c.bf16 %v1601, %v1597
    %v1862 = vunpack.c.l.b16 %v1853
    %v1863 = vunpack.c.l.b16 %v1854
    %v1864 = vunpack.c.l.b16 %v1855
    %v1865 = vunpack.c.l.b16 %v1856
    %v1866 = vpack.c.b16 %v1863, %v1862
    %v1867 = vpack.c.b16 %v1865, %v1864
    %v1869 = vsel %vm1622, %v1866, 0
    %v1872 = vsel %vm1622, %v1867, 0
    %1874 = vmatprep.subr.bf16.mxu0 0
    %1875 = vmatpush1.bf16.msra.mxu0 0
    %1876 = vmatprep.subr.bf16.mxu0 0
    %1877 = vmatpush1.bf16.msra.mxu0 0
    %1878 = vmatprep.subr.bf16.mxu0 0
    %1879 = vmatpush1.bf16.msra.mxu0 0
    %1880 = vmatprep.subr.bf16.mxu0 0
    %1881 = vmatpush1.bf16.msra.mxu0 0
    %1882 = vmatprep.subr.bf16.mxu0 0
    %1883 = vmatpush1.bf16.msra.mxu0 0
    %1884 = vmatprep.subr.bf16.mxu0 0
    %1885 = vmatpush1.bf16.msra.mxu0 0
    %1886 = vmatprep.subr.bf16.mxu0 0
    %1887 = vmatpush1.bf16.msra.mxu0 0
    %1888 = vmatprep.subr.bf16.mxu0 0
    %1889 = vmatpush1.bf16.msra.mxu0 %v1857
    %1890 = vmatprep.subr.bf16.mxu0 0
    %1891 = vmatpush2.bf16.msra.mxu0 0
    %1892 = vmatprep.subr.bf16.mxu0 0
    %1893 = vmatpush2.bf16.msra.mxu0 0
    %1894 = vmatprep.subr.bf16.mxu0 0
    %1895 = vmatpush2.bf16.msra.mxu0 0
    %1896 = vmatprep.subr.bf16.mxu0 0
    %1897 = vmatpush2.bf16.msra.mxu0 0
    %1898 = vmatprep.subr.bf16.mxu0 0
    %1899 = vmatpush2.bf16.msra.mxu0 0
    %1900 = vmatprep.subr.bf16.mxu0 0
    %1901 = vmatpush2.bf16.msra.mxu0 0
    %1902 = vmatprep.subr.bf16.mxu0 0
    %1903 = vmatpush2.bf16.msra.mxu0 0
    %1904 = vmatprep.subr.bf16.mxu0 0
    %1905 = vmatpush2.bf16.msra.mxu0 0
    %1906 = vmatprep.mubr.bf16.mxu0 0
    %1907 = vmatmul.mubr.bf16.gmra.mxu0 %v1869
    %v1908 = vpop.f32.mrf.mxu0
    %v1909 = vadd.f32 0.0, %v1908
    %v1910 = vpop.f32.mrf.mxu0
    %v1911 = vpop.f32.mrf.mxu0
    %v1912 = vadd.f32 0.0, %v1911
    %v1913 = vpop.f32.mrf.mxu0
    %1914 = vmatprep.mubr.bf16.mxu0 0
    %1915 = vmatmul.mubr.bf16.gmra.mxu0 %v1872
    %v1916 = vpop.f32.mrf.mxu0
    %v1917 = vadd.f32 0.0, %v1916
    %v1918 = vpop.f32.mrf.mxu0
    %v1919 = vpop.f32.mrf.mxu0
    %v1920 = vadd.f32 0.0, %v1919
    %v1921 = vpop.f32.mrf.mxu0
    %1922 = vdwg.mxu0
    %v1923 = vadd.f32 %v1848, %v1909
    %v1924 = vadd.f32 %v1849, %v1912
    %v1925 = vadd.f32 %v1850, %v1917
    %v1926 = vadd.f32 %v1851, %v1920
    %1927 = vxpose.xlu0.b32.start [1/16] %v1923, 128
    %1928 = vxpose.xlu0.b32.cont [2/16] %v1924, 128
    %1929 = vxpose.xlu0.b32.cont [3/16] %v1925, 128
    %1930 = vxpose.xlu0.b32.cont [4/16] %v1926, 128
    %1931 = vxpose.xlu0.b32.cont [5/16] 0.0, 128
    %1932 = vxpose.xlu0.b32.cont [6/16] 0.0, 128
    %1933 = vxpose.xlu0.b32.cont [7/16] 0.0, 128
    %1934 = vxpose.xlu0.b32.cont [8/16] 0.0, 128
    %1935 = vxpose.xlu0.b32.cont [9/16] 0.0, 128
    %1936 = vxpose.xlu0.b32.cont [10/16] 0.0, 128
    %1937 = vxpose.xlu0.b32.cont [11/16] 0.0, 128
    %1938 = vxpose.xlu0.b32.cont [12/16] 0.0, 128
    %1939 = vxpose.xlu0.b32.cont [13/16] 0.0, 128
    %1940 = vxpose.xlu0.b32.cont [14/16] 0.0, 128
    %1941 = vxpose.xlu0.b32.cont [15/16] 0.0, 128
    %1942 = vxpose.xlu0.b32.end [16/16] 0.0, 128
    %v1943 = vpop.trf.xlu0
    %v1944 = vpop.trf.xlu0
    %v1945 = vpop.trf.xlu0
    %v1946 = vpop.trf.xlu0
    %v1947 = vpop.trf.xlu0
    %v1948 = vpop.trf.xlu0
    %v1949 = vpop.trf.xlu0
    %v1950 = vpop.trf.xlu0
    %v1951 = vpop.trf.xlu0
    %v1952 = vpop.trf.xlu0
    %v1953 = vpop.trf.xlu0
    %v1954 = vpop.trf.xlu0
    %v1955 = vpop.trf.xlu0
    %v1956 = vpop.trf.xlu0
    %v1957 = vpop.trf.xlu0
    %v1958 = vpop.trf.xlu0
    %v1974 = vrot.slane %v1943, 7
    %v1975 = vrot.slane %v1944, 7
    %v1976 = vsel %vm550, %v1974, %v1975
    %v1977 = vrot.slane %v1945, 7
    %v1978 = vsel %vm550, %v1975, %v1977
    %v1979 = vrot.slane %v1946, 7
    %v1980 = vsel %vm550, %v1977, %v1979
    %v1981 = vrot.slane %v1947, 7
    %v1982 = vsel %vm550, %v1979, %v1981
    %v1983 = vrot.slane %v1948, 7
    %v1984 = vsel %vm550, %v1981, %v1983
    %v1985 = vrot.slane %v1949, 7
    %v1986 = vsel %vm550, %v1983, %v1985
    %v1987 = vrot.slane %v1950, 7
    %v1988 = vsel %vm550, %v1985, %v1987
    %v1989 = vrot.slane %v1951, 7
    %v1990 = vsel %vm550, %v1987, %v1989
    %v1991 = vrot.slane %v1952, 7
    %v1992 = vsel %vm550, %v1989, %v1991
    %v1993 = vrot.slane %v1953, 7
    %v1994 = vsel %vm550, %v1991, %v1993
    %v1995 = vrot.slane %v1954, 7
    %v1996 = vsel %vm550, %v1993, %v1995
    %v1997 = vrot.slane %v1955, 7
    %v1998 = vsel %vm550, %v1995, %v1997
    %v1999 = vrot.slane %v1956, 7
    %v2000 = vsel %vm550, %v1997, %v1999
    %v2001 = vrot.slane %v1957, 7
    %v2002 = vsel %vm550, %v1999, %v2001
    %v2018 = vsel %vm550, 0.0, %v1974
    %v2019 = vld [vmem:[%s23] sm:$0xff]
    %v2020 = vld [vmem:[%s23 + $0x8] sm:$0xff]
    %v2021 = vld [vmem:[%s23 + $0x10] sm:$0xff]
    %v2022 = vld [vmem:[%s23 + $0x18] sm:$0xff]
    %v2023 = vld [vmem:[%s23 + $0x20] sm:$0xff]
    %v2024 = vld [vmem:[%s23 + $0x28] sm:$0xff]
    %v2025 = vld [vmem:[%s23 + $0x30] sm:$0xff]
    %v2026 = vld [vmem:[%s23 + $0x38] sm:$0xff]
    %v2027 = vld [vmem:[%s23 + $0x40] sm:$0xff]
    %v2028 = vld [vmem:[%s23 + $0x48] sm:$0xff]
    %v2029 = vld [vmem:[%s23 + $0x50] sm:$0xff]
    %v2030 = vld [vmem:[%s23 + $0x58] sm:$0xff]
    %v2031 = vld [vmem:[%s23 + $0x60] sm:$0xff]
    %v2032 = vld [vmem:[%s23 + $0x68] sm:$0xff]
    %v2033 = vld [vmem:[%s23 + $0x70] sm:$0xff]
    %v2034 = vld [vmem:[%s23 + $0x78] sm:$0xff]
    %2036 = vset.pattern.permute.xlu0 0
    %2037 = vperm.xlu0 %2036, %v2019
    %v2038 = vpop.permute.xlu0 %2037
    %2041 = vset.pattern.permute.xlu0 0
    %2042 = vperm.xlu0 %2041, %v2020
    %v2043 = vpop.permute.xlu0 %2042
    %2046 = vset.pattern.permute.xlu0 0
    %2047 = vperm.xlu0 %2046, %v2021
    %v2048 = vpop.permute.xlu0 %2047
    %2051 = vset.pattern.permute.xlu0 0
    %2052 = vperm.xlu0 %2051, %v2022
    %v2053 = vpop.permute.xlu0 %2052
    %2056 = vset.pattern.permute.xlu0 0
    %2057 = vperm.xlu0 %2056, %v2023
    %v2058 = vpop.permute.xlu0 %2057
    %2061 = vset.pattern.permute.xlu0 0
    %2062 = vperm.xlu0 %2061, %v2024
    %v2063 = vpop.permute.xlu0 %2062
    %2066 = vset.pattern.permute.xlu0 0
    %2067 = vperm.xlu0 %2066, %v2025
    %v2068 = vpop.permute.xlu0 %2067
    %2071 = vset.pattern.permute.xlu0 0
    %2072 = vperm.xlu0 %2071, %v2026
    %v2073 = vpop.permute.xlu0 %2072
    %2076 = vset.pattern.permute.xlu0 0
    %2077 = vperm.xlu0 %2076, %v2027
    %v2078 = vpop.permute.xlu0 %2077
    %2081 = vset.pattern.permute.xlu0 0
    %2082 = vperm.xlu0 %2081, %v2028
    %v2083 = vpop.permute.xlu0 %2082
    %2086 = vset.pattern.permute.xlu0 0
    %2087 = vperm.xlu0 %2086, %v2029
    %v2088 = vpop.permute.xlu0 %2087
    %2091 = vset.pattern.permute.xlu0 0
    %2092 = vperm.xlu0 %2091, %v2030
    %v2093 = vpop.permute.xlu0 %2092
    %2096 = vset.pattern.permute.xlu0 0
    %2097 = vperm.xlu0 %2096, %v2031
    %v2098 = vpop.permute.xlu0 %2097
    %2101 = vset.pattern.permute.xlu0 0
    %2102 = vperm.xlu0 %2101, %v2032
    %v2103 = vpop.permute.xlu0 %2102
    %2106 = vset.pattern.permute.xlu0 0
    %2107 = vperm.xlu0 %2106, %v2033
    %v2108 = vpop.permute.xlu0 %2107
    %2111 = vset.pattern.permute.xlu0 0
    %2112 = vperm.xlu0 %2111, %v2034
    %v2113 = vpop.permute.xlu0 %2112
    %v2115 = vmul.f32 %v2038, 0.0
    %v2116 = vmul.f32 %v2018, %v2043
    %v2117 = vmul.f32 %v1976, %v2048
    %v2118 = vmul.f32 %v1978, %v2053
    %v2119 = vmul.f32 %v1980, %v2058
    %v2120 = vmul.f32 %v1982, %v2063
    %v2121 = vmul.f32 %v1984, %v2068
    %v2122 = vmul.f32 %v1986, %v2073
    %v2123 = vmul.f32 %v1988, %v2078
    %v2124 = vmul.f32 %v1990, %v2083
    %v2125 = vmul.f32 %v1992, %v2088
    %v2126 = vmul.f32 %v1994, %v2093
    %v2127 = vmul.f32 %v1996, %v2098
    %v2128 = vmul.f32 %v1998, %v2103
    %v2129 = vmul.f32 %v2000, %v2108
    %v2130 = vmul.f32 %v2002, %v2113
    %2131 = vset.pattern.permute.xlu0 1
    %2132 = vperm.xlu0 %2131, %v2019
    %v2133 = vpop.permute.xlu0 %2132
    %2135 = vset.pattern.permute.xlu0 1
    %2136 = vperm.xlu0 %2135, %v2020
    %v2137 = vpop.permute.xlu0 %2136
    %2139 = vset.pattern.permute.xlu0 1
    %2140 = vperm.xlu0 %2139, %v2021
    %v2141 = vpop.permute.xlu0 %2140
    %2143 = vset.pattern.permute.xlu0 1
    %2144 = vperm.xlu0 %2143, %v2022
    %v2145 = vpop.permute.xlu0 %2144
    %2147 = vset.pattern.permute.xlu0 1
    %2148 = vperm.xlu0 %2147, %v2023
    %v2149 = vpop.permute.xlu0 %2148
    %2151 = vset.pattern.permute.xlu0 1
    %2152 = vperm.xlu0 %2151, %v2024
    %v2153 = vpop.permute.xlu0 %2152
    %2155 = vset.pattern.permute.xlu0 1
    %2156 = vperm.xlu0 %2155, %v2025
    %v2157 = vpop.permute.xlu0 %2156
    %2159 = vset.pattern.permute.xlu0 1
    %2160 = vperm.xlu0 %2159, %v2026
    %v2161 = vpop.permute.xlu0 %2160
    %2163 = vset.pattern.permute.xlu0 1
    %2164 = vperm.xlu0 %2163, %v2027
    %v2165 = vpop.permute.xlu0 %2164
    %2167 = vset.pattern.permute.xlu0 1
    %2168 = vperm.xlu0 %2167, %v2028
    %v2169 = vpop.permute.xlu0 %2168
    %2171 = vset.pattern.permute.xlu0 1
    %2172 = vperm.xlu0 %2171, %v2029
    %v2173 = vpop.permute.xlu0 %2172
    %2175 = vset.pattern.permute.xlu0 1
    %2176 = vperm.xlu0 %2175, %v2030
    %v2177 = vpop.permute.xlu0 %2176
    %2179 = vset.pattern.permute.xlu0 1
    %2180 = vperm.xlu0 %2179, %v2031
    %v2181 = vpop.permute.xlu0 %2180
    %2183 = vset.pattern.permute.xlu0 1
    %2184 = vperm.xlu0 %2183, %v2032
    %v2185 = vpop.permute.xlu0 %2184
    %2187 = vset.pattern.permute.xlu0 1
    %2188 = vperm.xlu0 %2187, %v2033
    %v2189 = vpop.permute.xlu0 %2188
    %2191 = vset.pattern.permute.xlu0 1
    %2192 = vperm.xlu0 %2191, %v2034
    %v2193 = vpop.permute.xlu0 %2192
    %v2195 = vmul.f32 %v2133, 0.0
    %v2196 = vmul.f32 %v1943, %v2137
    %v2197 = vmul.f32 %v1944, %v2141
    %v2198 = vmul.f32 %v1945, %v2145
    %v2199 = vmul.f32 %v1946, %v2149
    %v2200 = vmul.f32 %v1947, %v2153
    %v2201 = vmul.f32 %v1948, %v2157
    %v2202 = vmul.f32 %v1949, %v2161
    %v2203 = vmul.f32 %v1950, %v2165
    %v2204 = vmul.f32 %v1951, %v2169
    %v2205 = vmul.f32 %v1952, %v2173
    %v2206 = vmul.f32 %v1953, %v2177
    %v2207 = vmul.f32 %v1954, %v2181
    %v2208 = vmul.f32 %v1955, %v2185
    %v2209 = vmul.f32 %v1956, %v2189
    %v2210 = vmul.f32 %v1957, %v2193
    %vm2212 = vcmask 1046528
    %v2213 = vrot.slane %v1943, 1
    %v2214 = vrot.slane %v1944, 1
    %v2215 = vsel %vm2212, %v2213, %v2214
    %v2216 = vrot.slane %v1945, 1
    %v2217 = vsel %vm2212, %v2214, %v2216
    %v2218 = vrot.slane %v1946, 1
    %v2219 = vsel %vm2212, %v2216, %v2218
    %v2220 = vrot.slane %v1947, 1
    %v2221 = vsel %vm2212, %v2218, %v2220
    %v2222 = vrot.slane %v1948, 1
    %v2223 = vsel %vm2212, %v2220, %v2222
    %v2224 = vrot.slane %v1949, 1
    %v2225 = vsel %vm2212, %v2222, %v2224
    %v2226 = vrot.slane %v1950, 1
    %v2227 = vsel %vm2212, %v2224, %v2226
    %v2228 = vrot.slane %v1951, 1
    %v2229 = vsel %vm2212, %v2226, %v2228
    %v2230 = vrot.slane %v1952, 1
    %v2231 = vsel %vm2212, %v2228, %v2230
    %v2232 = vrot.slane %v1953, 1
    %v2233 = vsel %vm2212, %v2230, %v2232
    %v2234 = vrot.slane %v1954, 1
    %v2235 = vsel %vm2212, %v2232, %v2234
    %v2236 = vrot.slane %v1955, 1
    %v2237 = vsel %vm2212, %v2234, %v2236
    %v2238 = vrot.slane %v1956, 1
    %v2239 = vsel %vm2212, %v2236, %v2238
    %v2240 = vrot.slane %v1957, 1
    %v2241 = vsel %vm2212, %v2238, %v2240
    %v2242 = vrot.slane %v1958, 1
    %v2243 = vsel %vm2212, %v2240, %v2242
    %v2260 = vsel %vm2212, 0.0, %v2213
    %2261 = vset.pattern.permute.xlu0 2
    %2262 = vperm.xlu0 %2261, %v2019
    %v2263 = vpop.permute.xlu0 %2262
    %2265 = vset.pattern.permute.xlu0 2
    %2266 = vperm.xlu0 %2265, %v2020
    %v2267 = vpop.permute.xlu0 %2266
    %2269 = vset.pattern.permute.xlu0 2
    %2270 = vperm.xlu0 %2269, %v2021
    %v2271 = vpop.permute.xlu0 %2270
    %2273 = vset.pattern.permute.xlu0 2
    %2274 = vperm.xlu0 %2273, %v2022
    %v2275 = vpop.permute.xlu0 %2274
    %2277 = vset.pattern.permute.xlu0 2
    %2278 = vperm.xlu0 %2277, %v2023
    %v2279 = vpop.permute.xlu0 %2278
    %2281 = vset.pattern.permute.xlu0 2
    %2282 = vperm.xlu0 %2281, %v2024
    %v2283 = vpop.permute.xlu0 %2282
    %2285 = vset.pattern.permute.xlu0 2
    %2286 = vperm.xlu0 %2285, %v2025
    %v2287 = vpop.permute.xlu0 %2286
    %2289 = vset.pattern.permute.xlu0 2
    %2290 = vperm.xlu0 %2289, %v2026
    %v2291 = vpop.permute.xlu0 %2290
    %2293 = vset.pattern.permute.xlu0 2
    %2294 = vperm.xlu0 %2293, %v2027
    %v2295 = vpop.permute.xlu0 %2294
    %2297 = vset.pattern.permute.xlu0 2
    %2298 = vperm.xlu0 %2297, %v2028
    %v2299 = vpop.permute.xlu0 %2298
    %2301 = vset.pattern.permute.xlu0 2
    %2302 = vperm.xlu0 %2301, %v2029
    %v2303 = vpop.permute.xlu0 %2302
    %2305 = vset.pattern.permute.xlu0 2
    %2306 = vperm.xlu0 %2305, %v2030
    %v2307 = vpop.permute.xlu0 %2306
    %2309 = vset.pattern.permute.xlu0 2
    %2310 = vperm.xlu0 %2309, %v2031
    %v2311 = vpop.permute.xlu0 %2310
    %2313 = vset.pattern.permute.xlu0 2
    %2314 = vperm.xlu0 %2313, %v2032
    %v2315 = vpop.permute.xlu0 %2314
    %2317 = vset.pattern.permute.xlu0 2
    %2318 = vperm.xlu0 %2317, %v2033
    %v2319 = vpop.permute.xlu0 %2318
    %2321 = vset.pattern.permute.xlu0 2
    %2322 = vperm.xlu0 %2321, %v2034
    %v2323 = vpop.permute.xlu0 %2322
    %v2325 = vmul.f32 %v2260, %v2263
    %v2326 = vmul.f32 %v2215, %v2267
    %v2327 = vmul.f32 %v2217, %v2271
    %v2328 = vmul.f32 %v2219, %v2275
    %v2329 = vmul.f32 %v2221, %v2279
    %v2330 = vmul.f32 %v2223, %v2283
    %v2331 = vmul.f32 %v2225, %v2287
    %v2332 = vmul.f32 %v2227, %v2291
    %v2333 = vmul.f32 %v2229, %v2295
    %v2334 = vmul.f32 %v2231, %v2299
    %v2335 = vmul.f32 %v2233, %v2303
    %v2336 = vmul.f32 %v2235, %v2307
    %v2337 = vmul.f32 %v2237, %v2311
    %v2338 = vmul.f32 %v2239, %v2315
    %v2339 = vmul.f32 %v2241, %v2319
    %v2340 = vmul.f32 %v2243, %v2323
    %2357 = vrot.lane.b32.xlu0 %v2195, 32
    %v2358 = vpop.permute.xlu0 %2357
    %2359 = vrot.lane.b32.xlu0 %v2196, 32
    %v2360 = vpop.permute.xlu0 %2359
    %2361 = vrot.lane.b32.xlu0 %v2197, 32
    %v2362 = vpop.permute.xlu0 %2361
    %2363 = vrot.lane.b32.xlu0 %v2198, 32
    %v2364 = vpop.permute.xlu0 %2363
    %2365 = vrot.lane.b32.xlu0 %v2199, 32
    %v2366 = vpop.permute.xlu0 %2365
    %2367 = vrot.lane.b32.xlu0 %v2200, 32
    %v2368 = vpop.permute.xlu0 %2367
    %2369 = vrot.lane.b32.xlu0 %v2201, 32
    %v2370 = vpop.permute.xlu0 %2369
    %2371 = vrot.lane.b32.xlu0 %v2202, 32
    %v2372 = vpop.permute.xlu0 %2371
    %2373 = vrot.lane.b32.xlu0 %v2203, 32
    %v2374 = vpop.permute.xlu0 %2373
    %2375 = vrot.lane.b32.xlu0 %v2204, 32
    %v2376 = vpop.permute.xlu0 %2375
    %2377 = vrot.lane.b32.xlu0 %v2205, 32
    %v2378 = vpop.permute.xlu0 %2377
    %2379 = vrot.lane.b32.xlu0 %v2206, 32
    %v2380 = vpop.permute.xlu0 %2379
    %2381 = vrot.lane.b32.xlu0 %v2207, 32
    %v2382 = vpop.permute.xlu0 %2381
    %2383 = vrot.lane.b32.xlu0 %v2208, 32
    %v2384 = vpop.permute.xlu0 %2383
    %2385 = vrot.lane.b32.xlu0 %v2209, 32
    %v2386 = vpop.permute.xlu0 %2385
    %2387 = vrot.lane.b32.xlu0 %v2210, 32
    %v2388 = vpop.permute.xlu0 %2387
    %2421 = vrot.lane.b32.xlu0 %v2325, 64
    %v2422 = vpop.permute.xlu0 %2421
    %2423 = vrot.lane.b32.xlu0 %v2326, 64
    %v2424 = vpop.permute.xlu0 %2423
    %2425 = vrot.lane.b32.xlu0 %v2327, 64
    %v2426 = vpop.permute.xlu0 %2425
    %2427 = vrot.lane.b32.xlu0 %v2328, 64
    %v2428 = vpop.permute.xlu0 %2427
    %2429 = vrot.lane.b32.xlu0 %v2329, 64
    %v2430 = vpop.permute.xlu0 %2429
    %2431 = vrot.lane.b32.xlu0 %v2330, 64
    %v2432 = vpop.permute.xlu0 %2431
    %2433 = vrot.lane.b32.xlu0 %v2331, 64
    %v2434 = vpop.permute.xlu0 %2433
    %2435 = vrot.lane.b32.xlu0 %v2332, 64
    %v2436 = vpop.permute.xlu0 %2435
    %2437 = vrot.lane.b32.xlu0 %v2333, 64
    %v2438 = vpop.permute.xlu0 %2437
    %2439 = vrot.lane.b32.xlu0 %v2334, 64
    %v2440 = vpop.permute.xlu0 %2439
    %2441 = vrot.lane.b32.xlu0 %v2335, 64
    %v2442 = vpop.permute.xlu0 %2441
    %2443 = vrot.lane.b32.xlu0 %v2336, 64
    %v2444 = vpop.permute.xlu0 %2443
    %2445 = vrot.lane.b32.xlu0 %v2337, 64
    %v2446 = vpop.permute.xlu0 %2445
    %2447 = vrot.lane.b32.xlu0 %v2338, 64
    %v2448 = vpop.permute.xlu0 %2447
    %2449 = vrot.lane.b32.xlu0 %v2339, 64
    %v2450 = vpop.permute.xlu0 %2449
    %2451 = vrot.lane.b32.xlu0 %v2340, 64
    %v2452 = vpop.permute.xlu0 %2451
    %vm2469 = vcmask 261120
    %v2470 = vsel %vm2469, %v2115, %v2358
    %v2471 = vsel %vm2469, %v2116, %v2360
    %v2472 = vsel %vm2469, %v2117, %v2362
    %v2473 = vsel %vm2469, %v2118, %v2364
    %v2474 = vsel %vm2469, %v2119, %v2366
    %v2475 = vsel %vm2469, %v2120, %v2368
    %v2476 = vsel %vm2469, %v2121, %v2370
    %v2477 = vsel %vm2469, %v2122, %v2372
    %v2478 = vsel %vm2469, %v2123, %v2374
    %v2479 = vsel %vm2469, %v2124, %v2376
    %v2480 = vsel %vm2469, %v2125, %v2378
    %v2481 = vsel %vm2469, %v2126, %v2380
    %v2482 = vsel %vm2469, %v2127, %v2382
    %v2483 = vsel %vm2469, %v2128, %v2384
    %v2484 = vsel %vm2469, %v2129, %v2386
    %v2485 = vsel %vm2469, %v2130, %v2388
    %vm2486 = vcmask 523264
    %v2487 = vsel %vm2486, %v2470, %v2422
    %v2488 = vsel %vm2486, %v2471, %v2424
    %v2489 = vsel %vm2486, %v2472, %v2426
    %v2490 = vsel %vm2486, %v2473, %v2428
    %v2491 = vsel %vm2486, %v2474, %v2430
    %v2492 = vsel %vm2486, %v2475, %v2432
    %v2493 = vsel %vm2486, %v2476, %v2434
    %v2494 = vsel %vm2486, %v2477, %v2436
    %v2495 = vsel %vm2486, %v2478, %v2438
    %v2496 = vsel %vm2486, %v2479, %v2440
    %v2497 = vsel %vm2486, %v2480, %v2442
    %v2498 = vsel %vm2486, %v2481, %v2444
    %v2499 = vsel %vm2486, %v2482, %v2446
    %v2500 = vsel %vm2486, %v2483, %v2448
    %v2501 = vsel %vm2486, %v2484, %v2450
    %v2502 = vsel %vm2486, %v2485, %v2452
    %v2503 = vld [vmem:[%s19] sm:$0xf]
    %v2504 = vld [vmem:[%s19 + $0x4] sm:$0xf]
    %v2505 = vld [vmem:[%s19 + $0x8] sm:$0xf]
    %v2506 = vld [vmem:[%s19 + $0xc] sm:$0xf]
    %v2507 = vld [vmem:[%s19 + $0x10] sm:$0xf]
    %v2508 = vld [vmem:[%s19 + $0x14] sm:$0xf]
    %v2509 = vld [vmem:[%s19 + $0x18] sm:$0xf]
    %v2510 = vld [vmem:[%s19 + $0x1c] sm:$0xf]
    %v2511 = vld [vmem:[%s19 + $0x20] sm:$0xf]
    %v2512 = vld [vmem:[%s19 + $0x24] sm:$0xf]
    %v2513 = vld [vmem:[%s19 + $0x28] sm:$0xf]
    %v2514 = vld [vmem:[%s19 + $0x2c] sm:$0xf]
    %v2515 = vpack.c.bf16 %v2488, %v2487
    %v2516 = vpack.c.bf16 %v2490, %v2489
    %v2517 = vpack.c.bf16 %v2492, %v2491
    %v2518 = vpack.c.bf16 %v2494, %v2493
    %v2519 = vpack.c.bf16 %v2496, %v2495
    %v2520 = vpack.c.bf16 %v2498, %v2497
    %v2521 = vpack.c.bf16 %v2500, %v2499
    %v2522 = vpack.c.bf16 %v2502, %v2501
    %v2523 = vrot.slane %v1958, 7
    %v2524 = vsel %vm550, %v2001, %v2523
    %2526 = vset.pattern.permute.xlu0 3
    %2527 = vperm.xlu0 %2526, %v2019
    %v2528 = vpop.permute.xlu0 %2527
    %2530 = vset.pattern.permute.xlu0 3
    %2531 = vperm.xlu0 %2530, %v2020
    %v2532 = vpop.permute.xlu0 %2531
    %2534 = vset.pattern.permute.xlu0 3
    %2535 = vperm.xlu0 %2534, %v2021
    %v2536 = vpop.permute.xlu0 %2535
    %2538 = vset.pattern.permute.xlu0 3
    %2539 = vperm.xlu0 %2538, %v2022
    %v2540 = vpop.permute.xlu0 %2539
    %2542 = vset.pattern.permute.xlu0 3
    %2543 = vperm.xlu0 %2542, %v2023
    %v2544 = vpop.permute.xlu0 %2543
    %2546 = vset.pattern.permute.xlu0 3
    %2547 = vperm.xlu0 %2546, %v2024
    %v2548 = vpop.permute.xlu0 %2547
    %2550 = vset.pattern.permute.xlu0 3
    %2551 = vperm.xlu0 %2550, %v2025
    %v2552 = vpop.permute.xlu0 %2551
    %2554 = vset.pattern.permute.xlu0 3
    %2555 = vperm.xlu0 %2554, %v2026
    %v2556 = vpop.permute.xlu0 %2555
    %2558 = vset.pattern.permute.xlu0 3
    %2559 = vperm.xlu0 %2558, %v2027
    %v2560 = vpop.permute.xlu0 %2559
    %2562 = vset.pattern.permute.xlu0 3
    %2563 = vperm.xlu0 %2562, %v2028
    %v2564 = vpop.permute.xlu0 %2563
    %2566 = vset.pattern.permute.xlu0 3
    %2567 = vperm.xlu0 %2566, %v2029
    %v2568 = vpop.permute.xlu0 %2567
    %2570 = vset.pattern.permute.xlu0 3
    %2571 = vperm.xlu0 %2570, %v2030
    %v2572 = vpop.permute.xlu0 %2571
    %2574 = vset.pattern.permute.xlu0 3
    %2575 = vperm.xlu0 %2574, %v2031
    %v2576 = vpop.permute.xlu0 %2575
    %2578 = vset.pattern.permute.xlu0 3
    %2579 = vperm.xlu0 %2578, %v2032
    %v2580 = vpop.permute.xlu0 %2579
    %2582 = vset.pattern.permute.xlu0 3
    %2583 = vperm.xlu0 %2582, %v2033
    %v2584 = vpop.permute.xlu0 %2583
    %2586 = vset.pattern.permute.xlu0 3
    %2587 = vperm.xlu0 %2586, %v2034
    %v2588 = vpop.permute.xlu0 %2587
    %v2590 = vmul.f32 %v2018, %v2528
    %v2591 = vmul.f32 %v1976, %v2532
    %v2592 = vmul.f32 %v1978, %v2536
    %v2593 = vmul.f32 %v1980, %v2540
    %v2594 = vmul.f32 %v1982, %v2544
    %v2595 = vmul.f32 %v1984, %v2548
    %v2596 = vmul.f32 %v1986, %v2552
    %v2597 = vmul.f32 %v1988, %v2556
    %v2598 = vmul.f32 %v1990, %v2560
    %v2599 = vmul.f32 %v1992, %v2564
    %v2600 = vmul.f32 %v1994, %v2568
    %v2601 = vmul.f32 %v1996, %v2572
    %v2602 = vmul.f32 %v1998, %v2576
    %v2603 = vmul.f32 %v2000, %v2580
    %v2604 = vmul.f32 %v2002, %v2584
    %v2605 = vmul.f32 %v2524, %v2588
    %2606 = vset.pattern.permute.xlu0 4
    %2607 = vperm.xlu0 %2606, %v2019
    %v2608 = vpop.permute.xlu0 %2607
    %2610 = vset.pattern.permute.xlu0 4
    %2611 = vperm.xlu0 %2610, %v2020
    %v2612 = vpop.permute.xlu0 %2611
    %2614 = vset.pattern.permute.xlu0 4
    %2615 = vperm.xlu0 %2614, %v2021
    %v2616 = vpop.permute.xlu0 %2615
    %2618 = vset.pattern.permute.xlu0 4
    %2619 = vperm.xlu0 %2618, %v2022
    %v2620 = vpop.permute.xlu0 %2619
    %2622 = vset.pattern.permute.xlu0 4
    %2623 = vperm.xlu0 %2622, %v2023
    %v2624 = vpop.permute.xlu0 %2623
    %2626 = vset.pattern.permute.xlu0 4
    %2627 = vperm.xlu0 %2626, %v2024
    %v2628 = vpop.permute.xlu0 %2627
    %2630 = vset.pattern.permute.xlu0 4
    %2631 = vperm.xlu0 %2630, %v2025
    %v2632 = vpop.permute.xlu0 %2631
    %2634 = vset.pattern.permute.xlu0 4
    %2635 = vperm.xlu0 %2634, %v2026
    %v2636 = vpop.permute.xlu0 %2635
    %2638 = vset.pattern.permute.xlu0 4
    %2639 = vperm.xlu0 %2638, %v2027
    %v2640 = vpop.permute.xlu0 %2639
    %2642 = vset.pattern.permute.xlu0 4
    %2643 = vperm.xlu0 %2642, %v2028
    %v2644 = vpop.permute.xlu0 %2643
    %2646 = vset.pattern.permute.xlu0 4
    %2647 = vperm.xlu0 %2646, %v2029
    %v2648 = vpop.permute.xlu0 %2647
    %2650 = vset.pattern.permute.xlu0 4
    %2651 = vperm.xlu0 %2650, %v2030
    %v2652 = vpop.permute.xlu0 %2651
    %2654 = vset.pattern.permute.xlu0 4
    %2655 = vperm.xlu0 %2654, %v2031
    %v2656 = vpop.permute.xlu0 %2655
    %2658 = vset.pattern.permute.xlu0 4
    %2659 = vperm.xlu0 %2658, %v2032
    %v2660 = vpop.permute.xlu0 %2659
    %2662 = vset.pattern.permute.xlu0 4
    %2663 = vperm.xlu0 %2662, %v2033
    %v2664 = vpop.permute.xlu0 %2663
    %2666 = vset.pattern.permute.xlu0 4
    %2667 = vperm.xlu0 %2666, %v2034
    %v2668 = vpop.permute.xlu0 %2667
    %v2670 = vmul.f32 %v1943, %v2608
    %v2671 = vmul.f32 %v1944, %v2612
    %v2672 = vmul.f32 %v1945, %v2616
    %v2673 = vmul.f32 %v1946, %v2620
    %v2674 = vmul.f32 %v1947, %v2624
    %v2675 = vmul.f32 %v1948, %v2628
    %v2676 = vmul.f32 %v1949, %v2632
    %v2677 = vmul.f32 %v1950, %v2636
    %v2678 = vmul.f32 %v1951, %v2640
    %v2679 = vmul.f32 %v1952, %v2644
    %v2680 = vmul.f32 %v1953, %v2648
    %v2681 = vmul.f32 %v1954, %v2652
    %v2682 = vmul.f32 %v1955, %v2656
    %v2683 = vmul.f32 %v1956, %v2660
    %v2684 = vmul.f32 %v1957, %v2664
    %v2685 = vmul.f32 %v1958, %v2668
    %v2687 = vsel %vm2212, %v2242, 0.0
    %2688 = vset.pattern.permute.xlu0 5
    %2689 = vperm.xlu0 %2688, %v2019
    %v2690 = vpop.permute.xlu0 %2689
    %2692 = vset.pattern.permute.xlu0 5
    %2693 = vperm.xlu0 %2692, %v2020
    %v2694 = vpop.permute.xlu0 %2693
    %2696 = vset.pattern.permute.xlu0 5
    %2697 = vperm.xlu0 %2696, %v2021
    %v2698 = vpop.permute.xlu0 %2697
    %2700 = vset.pattern.permute.xlu0 5
    %2701 = vperm.xlu0 %2700, %v2022
    %v2702 = vpop.permute.xlu0 %2701
    %2704 = vset.pattern.permute.xlu0 5
    %2705 = vperm.xlu0 %2704, %v2023
    %v2706 = vpop.permute.xlu0 %2705
    %2708 = vset.pattern.permute.xlu0 5
    %2709 = vperm.xlu0 %2708, %v2024
    %v2710 = vpop.permute.xlu0 %2709
    %2712 = vset.pattern.permute.xlu0 5
    %2713 = vperm.xlu0 %2712, %v2025
    %v2714 = vpop.permute.xlu0 %2713
    %2716 = vset.pattern.permute.xlu0 5
    %2717 = vperm.xlu0 %2716, %v2026
    %v2718 = vpop.permute.xlu0 %2717
    %2720 = vset.pattern.permute.xlu0 5
    %2721 = vperm.xlu0 %2720, %v2027
    %v2722 = vpop.permute.xlu0 %2721
    %2724 = vset.pattern.permute.xlu0 5
    %2725 = vperm.xlu0 %2724, %v2028
    %v2726 = vpop.permute.xlu0 %2725
    %2728 = vset.pattern.permute.xlu0 5
    %2729 = vperm.xlu0 %2728, %v2029
    %v2730 = vpop.permute.xlu0 %2729
    %2732 = vset.pattern.permute.xlu0 5
    %2733 = vperm.xlu0 %2732, %v2030
    %v2734 = vpop.permute.xlu0 %2733
    %2736 = vset.pattern.permute.xlu0 5
    %2737 = vperm.xlu0 %2736, %v2031
    %v2738 = vpop.permute.xlu0 %2737
    %2740 = vset.pattern.permute.xlu0 5
    %2741 = vperm.xlu0 %2740, %v2032
    %v2742 = vpop.permute.xlu0 %2741
    %2744 = vset.pattern.permute.xlu0 5
    %2745 = vperm.xlu0 %2744, %v2033
    %v2746 = vpop.permute.xlu0 %2745
    %2748 = vset.pattern.permute.xlu0 5
    %2749 = vperm.xlu0 %2748, %v2034
    %v2750 = vpop.permute.xlu0 %2749
    %v2752 = vmul.f32 %v2215, %v2690
    %v2753 = vmul.f32 %v2217, %v2694
    %v2754 = vmul.f32 %v2219, %v2698
    %v2755 = vmul.f32 %v2221, %v2702
    %v2756 = vmul.f32 %v2223, %v2706
    %v2757 = vmul.f32 %v2225, %v2710
    %v2758 = vmul.f32 %v2227, %v2714
    %v2759 = vmul.f32 %v2229, %v2718
    %v2760 = vmul.f32 %v2231, %v2722
    %v2761 = vmul.f32 %v2233, %v2726
    %v2762 = vmul.f32 %v2235, %v2730
    %v2763 = vmul.f32 %v2237, %v2734
    %v2764 = vmul.f32 %v2239, %v2738
    %v2765 = vmul.f32 %v2241, %v2742
    %v2766 = vmul.f32 %v2243, %v2746
    %v2767 = vmul.f32 %v2687, %v2750
    %2784 = vrot.lane.b32.xlu0 %v2670, 32
    %v2785 = vpop.permute.xlu0 %2784
    %2786 = vrot.lane.b32.xlu0 %v2671, 32
    %v2787 = vpop.permute.xlu0 %2786
    %2788 = vrot.lane.b32.xlu0 %v2672, 32
    %v2789 = vpop.permute.xlu0 %2788
    %2790 = vrot.lane.b32.xlu0 %v2673, 32
    %v2791 = vpop.permute.xlu0 %2790
    %2792 = vrot.lane.b32.xlu0 %v2674, 32
    %v2793 = vpop.permute.xlu0 %2792
    %2794 = vrot.lane.b32.xlu0 %v2675, 32
    %v2795 = vpop.permute.xlu0 %2794
    %2796 = vrot.lane.b32.xlu0 %v2676, 32
    %v2797 = vpop.permute.xlu0 %2796
    %2798 = vrot.lane.b32.xlu0 %v2677, 32
    %v2799 = vpop.permute.xlu0 %2798
    %2800 = vrot.lane.b32.xlu0 %v2678, 32
    %v2801 = vpop.permute.xlu0 %2800
    %2802 = vrot.lane.b32.xlu0 %v2679, 32
    %v2803 = vpop.permute.xlu0 %2802
    %2804 = vrot.lane.b32.xlu0 %v2680, 32
    %v2805 = vpop.permute.xlu0 %2804
    %2806 = vrot.lane.b32.xlu0 %v2681, 32
    %v2807 = vpop.permute.xlu0 %2806
    %2808 = vrot.lane.b32.xlu0 %v2682, 32
    %v2809 = vpop.permute.xlu0 %2808
    %2810 = vrot.lane.b32.xlu0 %v2683, 32
    %v2811 = vpop.permute.xlu0 %2810
    %2812 = vrot.lane.b32.xlu0 %v2684, 32
    %v2813 = vpop.permute.xlu0 %2812
    %2814 = vrot.lane.b32.xlu0 %v2685, 32
    %v2815 = vpop.permute.xlu0 %2814
    %2848 = vrot.lane.b32.xlu0 %v2752, 64
    %v2849 = vpop.permute.xlu0 %2848
    %2850 = vrot.lane.b32.xlu0 %v2753, 64
    %v2851 = vpop.permute.xlu0 %2850
    %2852 = vrot.lane.b32.xlu0 %v2754, 64
    %v2853 = vpop.permute.xlu0 %2852
    %2854 = vrot.lane.b32.xlu0 %v2755, 64
    %v2855 = vpop.permute.xlu0 %2854
    %2856 = vrot.lane.b32.xlu0 %v2756, 64
    %v2857 = vpop.permute.xlu0 %2856
    %2858 = vrot.lane.b32.xlu0 %v2757, 64
    %v2859 = vpop.permute.xlu0 %2858
    %2860 = vrot.lane.b32.xlu0 %v2758, 64
    %v2861 = vpop.permute.xlu0 %2860
    %2862 = vrot.lane.b32.xlu0 %v2759, 64
    %v2863 = vpop.permute.xlu0 %2862
    %2864 = vrot.lane.b32.xlu0 %v2760, 64
    %v2865 = vpop.permute.xlu0 %2864
    %2866 = vrot.lane.b32.xlu0 %v2761, 64
    %v2867 = vpop.permute.xlu0 %2866
    %2868 = vrot.lane.b32.xlu0 %v2762, 64
    %v2869 = vpop.permute.xlu0 %2868
    %2870 = vrot.lane.b32.xlu0 %v2763, 64
    %v2871 = vpop.permute.xlu0 %2870
    %2872 = vrot.lane.b32.xlu0 %v2764, 64
    %v2873 = vpop.permute.xlu0 %2872
    %2874 = vrot.lane.b32.xlu0 %v2765, 64
    %v2875 = vpop.permute.xlu0 %2874
    %2876 = vrot.lane.b32.xlu0 %v2766, 64
    %v2877 = vpop.permute.xlu0 %2876
    %2878 = vrot.lane.b32.xlu0 %v2767, 64
    %v2879 = vpop.permute.xlu0 %2878
    %v2896 = vsel %vm2469, %v2590, %v2785
    %v2897 = vsel %vm2469, %v2591, %v2787
    %v2898 = vsel %vm2469, %v2592, %v2789
    %v2899 = vsel %vm2469, %v2593, %v2791
    %v2900 = vsel %vm2469, %v2594, %v2793
    %v2901 = vsel %vm2469, %v2595, %v2795
    %v2902 = vsel %vm2469, %v2596, %v2797
    %v2903 = vsel %vm2469, %v2597, %v2799
    %v2904 = vsel %vm2469, %v2598, %v2801
    %v2905 = vsel %vm2469, %v2599, %v2803
    %v2906 = vsel %vm2469, %v2600, %v2805
    %v2907 = vsel %vm2469, %v2601, %v2807
    %v2908 = vsel %vm2469, %v2602, %v2809
    %v2909 = vsel %vm2469, %v2603, %v2811
    %v2910 = vsel %vm2469, %v2604, %v2813
    %v2911 = vsel %vm2469, %v2605, %v2815
    %v2912 = vsel %vm2486, %v2896, %v2849
    %v2913 = vsel %vm2486, %v2897, %v2851
    %v2914 = vsel %vm2486, %v2898, %v2853
    %v2915 = vsel %vm2486, %v2899, %v2855
    %v2916 = vsel %vm2486, %v2900, %v2857
    %v2917 = vsel %vm2486, %v2901, %v2859
    %v2918 = vsel %vm2486, %v2902, %v2861
    %v2919 = vsel %vm2486, %v2903, %v2863
    %v2920 = vsel %vm2486, %v2904, %v2865
    %v2921 = vsel %vm2486, %v2905, %v2867
    %v2922 = vsel %vm2486, %v2906, %v2869
    %v2923 = vsel %vm2486, %v2907, %v2871
    %v2924 = vsel %vm2486, %v2908, %v2873
    %v2925 = vsel %vm2486, %v2909, %v2875
    %v2926 = vsel %vm2486, %v2910, %v2877
    %v2927 = vsel %vm2486, %v2911, %v2879
    %s2928 = scalar_lea.vmem %s19, 48
    %v2929 = vld [vmem:[%s2928] sm:$0xf]
    %v2930 = vld [vmem:[%s2928 + $0x4] sm:$0xf]
    %v2931 = vld [vmem:[%s2928 + $0x8] sm:$0xf]
    %v2932 = vld [vmem:[%s2928 + $0xc] sm:$0xf]
    %v2933 = vld [vmem:[%s2928 + $0x10] sm:$0xf]
    %v2934 = vld [vmem:[%s2928 + $0x14] sm:$0xf]
    %v2935 = vld [vmem:[%s2928 + $0x18] sm:$0xf]
    %v2936 = vld [vmem:[%s2928 + $0x1c] sm:$0xf]
    %v2937 = vld [vmem:[%s2928 + $0x20] sm:$0xf]
    %v2938 = vld [vmem:[%s2928 + $0x24] sm:$0xf]
    %v2939 = vld [vmem:[%s2928 + $0x28] sm:$0xf]
    %v2940 = vld [vmem:[%s2928 + $0x2c] sm:$0xf]
    %v2941 = vpack.c.bf16 %v2913, %v2912
    %v2942 = vpack.c.bf16 %v2915, %v2914
    %v2943 = vpack.c.bf16 %v2917, %v2916
    %v2944 = vpack.c.bf16 %v2919, %v2918
    %v2945 = vpack.c.bf16 %v2921, %v2920
    %v2946 = vpack.c.bf16 %v2923, %v2922
    %v2947 = vpack.c.bf16 %v2925, %v2924
    %v2948 = vpack.c.bf16 %v2927, %v2926
    %v2961 = vunpack.c.l.b16 %v2929
    %v2962 = vunpack.c.l.b16 %v2930
    %v2963 = vunpack.c.l.b16 %v2931
    %v2964 = vunpack.c.l.b16 %v2932
    %v2965 = vunpack.c.l.b16 %v2933
    %v2966 = vunpack.c.l.b16 %v2934
    %v2967 = vunpack.c.l.b16 %v2935
    %v2968 = vunpack.c.l.b16 %v2936
    %v2969 = vunpack.c.l.b16 %v2937
    %v2970 = vunpack.c.l.b16 %v2938
    %v2971 = vunpack.c.l.b16 %v2939
    %v2972 = vunpack.c.l.b16 %v2940
    %v2973 = vpack.c.b16 %v2962, %v2961
    %v2974 = vpack.c.b16 %v2964, %v2963
    %v2975 = vpack.c.b16 %v2966, %v2965
    %v2976 = vpack.c.b16 %v2968, %v2967
    %v2977 = vpack.c.b16 %v2970, %v2969
    %v2978 = vpack.c.b16 %v2972, %v2971
    %vm2985 = vcmask 785408
    %v2987 = vsel %vm2985, %v2941, 0
    %v2990 = vsel %vm2985, %v2942, 0
    %v2993 = vsel %vm2985, %v2943, 0
    %v2996 = vsel %vm2985, %v2944, 0
    %v2999 = vsel %vm2985, %v2945, 0
    %v3002 = vsel %vm2985, %v2946, 0
    %v3005 = vsel %vm2985, %v2947, 0
    %v3008 = vsel %vm2985, %v2948, 0
    %3010 = vmatprep.subr.bf16.mxu0 0
    %3011 = vmatpush1.bf16.msra.mxu0 0
    %3012 = vmatprep.subr.bf16.mxu0 0
    %3013 = vmatpush1.bf16.msra.mxu0 0
    %3014 = vmatprep.subr.bf16.mxu0 0
    %3015 = vmatpush1.bf16.msra.mxu0 %v2978
    %3016 = vmatprep.subr.bf16.mxu0 0
    %3017 = vmatpush1.bf16.msra.mxu0 %v2977
    %3018 = vmatprep.subr.bf16.mxu0 0
    %3019 = vmatpush1.bf16.msra.mxu0 %v2976
    %3020 = vmatprep.subr.bf16.mxu0 0
    %3021 = vmatpush1.bf16.msra.mxu0 %v2975
    %3022 = vmatprep.subr.bf16.mxu0 0
    %3023 = vmatpush1.bf16.msra.mxu0 %v2974
    %3024 = vmatprep.subr.bf16.mxu0 0
    %3025 = vmatpush1.bf16.msra.mxu0 %v2973
    %3026 = vmatprep.subr.bf16.mxu0 0
    %3027 = vmatpush2.bf16.msra.mxu0 0
    %3028 = vmatprep.subr.bf16.mxu0 0
    %3029 = vmatpush2.bf16.msra.mxu0 0
    %3030 = vmatprep.subr.bf16.mxu0 0
    %3031 = vmatpush2.bf16.msra.mxu0 0
    %3032 = vmatprep.subr.bf16.mxu0 0
    %3033 = vmatpush2.bf16.msra.mxu0 0
    %3034 = vmatprep.subr.bf16.mxu0 0
    %3035 = vmatpush2.bf16.msra.mxu0 0
    %3036 = vmatprep.subr.bf16.mxu0 0
    %3037 = vmatpush2.bf16.msra.mxu0 0
    %3038 = vmatprep.subr.bf16.mxu0 0
    %3039 = vmatpush2.bf16.msra.mxu0 0
    %3040 = vmatprep.subr.bf16.mxu0 0
    %3041 = vmatpush2.bf16.msra.mxu0 0
    %3042 = vmatprep.mubr.bf16.mxu0 0
    %3043 = vmatmul.mubr.bf16.gmra.mxu0 %v2987
    %v3044 = vpop.f32.mrf.mxu0
    %v3045 = vadd.f32 0.0, %v3044
    %v3046 = vpop.f32.mrf.mxu0
    %v3047 = vpop.f32.mrf.mxu0
    %v3048 = vadd.f32 0.0, %v3047
    %v3049 = vpop.f32.mrf.mxu0
    %3050 = vmatprep.mubr.bf16.mxu0 0
    %3051 = vmatmul.mubr.bf16.gmra.mxu0 %v2990
    %v3052 = vpop.f32.mrf.mxu0
    %v3053 = vadd.f32 0.0, %v3052
    %v3054 = vpop.f32.mrf.mxu0
    %v3055 = vpop.f32.mrf.mxu0
    %v3056 = vadd.f32 0.0, %v3055
    %v3057 = vpop.f32.mrf.mxu0
    %3058 = vmatprep.mubr.bf16.mxu0 0
    %3059 = vmatmul.mubr.bf16.gmra.mxu0 %v2993
    %v3060 = vpop.f32.mrf.mxu0
    %v3061 = vadd.f32 0.0, %v3060
    %v3062 = vpop.f32.mrf.mxu0
    %v3063 = vpop.f32.mrf.mxu0
    %v3064 = vadd.f32 0.0, %v3063
    %v3065 = vpop.f32.mrf.mxu0
    %3066 = vmatprep.mubr.bf16.mxu0 0
    %3067 = vmatmul.mubr.bf16.gmra.mxu0 %v2996
    %v3068 = vpop.f32.mrf.mxu0
    %v3069 = vadd.f32 0.0, %v3068
    %v3070 = vpop.f32.mrf.mxu0
    %v3071 = vpop.f32.mrf.mxu0
    %v3072 = vadd.f32 0.0, %v3071
    %v3073 = vpop.f32.mrf.mxu0
    %3074 = vmatprep.mubr.bf16.mxu0 0
    %3075 = vmatmul.mubr.bf16.gmra.mxu0 %v2999
    %v3076 = vpop.f32.mrf.mxu0
    %v3077 = vadd.f32 0.0, %v3076
    %v3078 = vpop.f32.mrf.mxu0
    %v3079 = vpop.f32.mrf.mxu0
    %v3080 = vadd.f32 0.0, %v3079
    %v3081 = vpop.f32.mrf.mxu0
    %3082 = vmatprep.mubr.bf16.mxu0 0
    %3083 = vmatmul.mubr.bf16.gmra.mxu0 %v3002
    %v3084 = vpop.f32.mrf.mxu0
    %v3085 = vadd.f32 0.0, %v3084
    %v3086 = vpop.f32.mrf.mxu0
    %v3087 = vpop.f32.mrf.mxu0
    %v3088 = vadd.f32 0.0, %v3087
    %v3089 = vpop.f32.mrf.mxu0
    %3090 = vmatprep.mubr.bf16.mxu0 0
    %3091 = vmatmul.mubr.bf16.gmra.mxu0 %v3005
    %v3092 = vpop.f32.mrf.mxu0
    %v3093 = vadd.f32 0.0, %v3092
    %v3094 = vpop.f32.mrf.mxu0
    %v3095 = vpop.f32.mrf.mxu0
    %v3096 = vadd.f32 0.0, %v3095
    %v3097 = vpop.f32.mrf.mxu0
    %3098 = vmatprep.mubr.bf16.mxu0 0
    %3099 = vmatmul.mubr.bf16.gmra.mxu0 %v3008
    %v3100 = vpop.f32.mrf.mxu0
    %v3101 = vadd.f32 0.0, %v3100
    %v3102 = vpop.f32.mrf.mxu0
    %v3103 = vpop.f32.mrf.mxu0
    %v3104 = vadd.f32 0.0, %v3103
    %v3105 = vpop.f32.mrf.mxu0
    %3106 = vdwg.mxu0
    %v3119 = vunpack.c.l.b16 %v2503
    %v3120 = vunpack.c.l.b16 %v2504
    %v3121 = vunpack.c.l.b16 %v2505
    %v3122 = vunpack.c.l.b16 %v2506
    %v3123 = vunpack.c.l.b16 %v2507
    %v3124 = vunpack.c.l.b16 %v2508
    %v3125 = vunpack.c.l.b16 %v2509
    %v3126 = vunpack.c.l.b16 %v2510
    %v3127 = vunpack.c.l.b16 %v2511
    %v3128 = vunpack.c.l.b16 %v2512
    %v3129 = vunpack.c.l.b16 %v2513
    %v3130 = vunpack.c.l.b16 %v2514
    %v3131 = vpack.c.b16 %v3120, %v3119
    %v3132 = vpack.c.b16 %v3122, %v3121
    %v3133 = vpack.c.b16 %v3124, %v3123
    %v3134 = vpack.c.b16 %v3126, %v3125
    %v3135 = vpack.c.b16 %v3128, %v3127
    %v3136 = vpack.c.b16 %v3130, %v3129
    %v3144 = vsel %vm2985, %v2515, 0
    %v3147 = vsel %vm2985, %v2516, 0
    %v3150 = vsel %vm2985, %v2517, 0
    %v3153 = vsel %vm2985, %v2518, 0
    %v3156 = vsel %vm2985, %v2519, 0
    %v3159 = vsel %vm2985, %v2520, 0
    %v3162 = vsel %vm2985, %v2521, 0
    %v3165 = vsel %vm2985, %v2522, 0
    %3167 = vmatprep.subr.bf16.mxu0 0
    %3168 = vmatpush1.bf16.msra.mxu0 0
    %3169 = vmatprep.subr.bf16.mxu0 0
    %3170 = vmatpush1.bf16.msra.mxu0 0
    %3171 = vmatprep.subr.bf16.mxu0 0
    %3172 = vmatpush1.bf16.msra.mxu0 %v3136
    %3173 = vmatprep.subr.bf16.mxu0 0
    %3174 = vmatpush1.bf16.msra.mxu0 %v3135
    %3175 = vmatprep.subr.bf16.mxu0 0
    %3176 = vmatpush1.bf16.msra.mxu0 %v3134
    %3177 = vmatprep.subr.bf16.mxu0 0
    %3178 = vmatpush1.bf16.msra.mxu0 %v3133
    %3179 = vmatprep.subr.bf16.mxu0 0
    %3180 = vmatpush1.bf16.msra.mxu0 %v3132
    %3181 = vmatprep.subr.bf16.mxu0 0
    %3182 = vmatpush1.bf16.msra.mxu0 %v3131
    %3183 = vmatprep.subr.bf16.mxu0 0
    %3184 = vmatpush2.bf16.msra.mxu0 0
    %3185 = vmatprep.subr.bf16.mxu0 0
    %3186 = vmatpush2.bf16.msra.mxu0 0
    %3187 = vmatprep.subr.bf16.mxu0 0
    %3188 = vmatpush2.bf16.msra.mxu0 0
    %3189 = vmatprep.subr.bf16.mxu0 0
    %3190 = vmatpush2.bf16.msra.mxu0 0
    %3191 = vmatprep.subr.bf16.mxu0 0
    %3192 = vmatpush2.bf16.msra.mxu0 0
    %3193 = vmatprep.subr.bf16.mxu0 0
    %3194 = vmatpush2.bf16.msra.mxu0 0
    %3195 = vmatprep.subr.bf16.mxu0 0
    %3196 = vmatpush2.bf16.msra.mxu0 0
    %3197 = vmatprep.subr.bf16.mxu0 0
    %3198 = vmatpush2.bf16.msra.mxu0 0
    %3199 = vmatprep.mubr.bf16.mxu0 0
    %3200 = vmatmul.mubr.bf16.gmra.mxu0 %v3144
    %v3201 = vpop.f32.mrf.mxu0
    %v3202 = vadd.f32 %v3045, %v3201
    %v3203 = vpop.f32.mrf.mxu0
    %v3204 = vpop.f32.mrf.mxu0
    %v3205 = vadd.f32 %v3048, %v3204
    %v3206 = vpop.f32.mrf.mxu0
    %3207 = vmatprep.mubr.bf16.mxu0 0
    %3208 = vmatmul.mubr.bf16.gmra.mxu0 %v3147
    %v3209 = vpop.f32.mrf.mxu0
    %v3210 = vadd.f32 %v3053, %v3209
    %v3211 = vpop.f32.mrf.mxu0
    %v3212 = vpop.f32.mrf.mxu0
    %v3213 = vadd.f32 %v3056, %v3212
    %v3214 = vpop.f32.mrf.mxu0
    %3215 = vmatprep.mubr.bf16.mxu0 0
    %3216 = vmatmul.mubr.bf16.gmra.mxu0 %v3150
    %v3217 = vpop.f32.mrf.mxu0
    %v3218 = vadd.f32 %v3061, %v3217
    %v3219 = vpop.f32.mrf.mxu0
    %v3220 = vpop.f32.mrf.mxu0
    %v3221 = vadd.f32 %v3064, %v3220
    %v3222 = vpop.f32.mrf.mxu0
    %3223 = vmatprep.mubr.bf16.mxu0 0
    %3224 = vmatmul.mubr.bf16.gmra.mxu0 %v3153
    %v3225 = vpop.f32.mrf.mxu0
    %v3226 = vadd.f32 %v3069, %v3225
    %v3227 = vpop.f32.mrf.mxu0
    %v3228 = vpop.f32.mrf.mxu0
    %v3229 = vadd.f32 %v3072, %v3228
    %v3230 = vpop.f32.mrf.mxu0
    %3231 = vmatprep.mubr.bf16.mxu0 0
    %3232 = vmatmul.mubr.bf16.gmra.mxu0 %v3156
    %v3233 = vpop.f32.mrf.mxu0
    %v3234 = vadd.f32 %v3077, %v3233
    %v3235 = vpop.f32.mrf.mxu0
    %v3236 = vpop.f32.mrf.mxu0
    %v3237 = vadd.f32 %v3080, %v3236
    %v3238 = vpop.f32.mrf.mxu0
    %3239 = vmatprep.mubr.bf16.mxu0 0
    %3240 = vmatmul.mubr.bf16.gmra.mxu0 %v3159
    %v3241 = vpop.f32.mrf.mxu0
    %v3242 = vadd.f32 %v3085, %v3241
    %v3243 = vpop.f32.mrf.mxu0
    %v3244 = vpop.f32.mrf.mxu0
    %v3245 = vadd.f32 %v3088, %v3244
    %v3246 = vpop.f32.mrf.mxu0
    %3247 = vmatprep.mubr.bf16.mxu0 0
    %3248 = vmatmul.mubr.bf16.gmra.mxu0 %v3162
    %v3249 = vpop.f32.mrf.mxu0
    %v3250 = vadd.f32 %v3093, %v3249
    %v3251 = vpop.f32.mrf.mxu0
    %v3252 = vpop.f32.mrf.mxu0
    %v3253 = vadd.f32 %v3096, %v3252
    %v3254 = vpop.f32.mrf.mxu0
    %3255 = vmatprep.mubr.bf16.mxu0 0
    %3256 = vmatmul.mubr.bf16.gmra.mxu0 %v3165
    %v3257 = vpop.f32.mrf.mxu0
    %v3258 = vadd.f32 %v3101, %v3257
    %v3259 = vpop.f32.mrf.mxu0
    %v3260 = vpop.f32.mrf.mxu0
    %v3261 = vadd.f32 %v3104, %v3260
    %v3262 = vpop.f32.mrf.mxu0
    %3263 = vdwg.mxu0
    %v3265 = vsel %vm550, %v2523, 0.0
    %3266 = vset.pattern.permute.xlu0 6
    %3267 = vperm.xlu0 %3266, %v2019
    %v3268 = vpop.permute.xlu0 %3267
    %3270 = vset.pattern.permute.xlu0 6
    %3271 = vperm.xlu0 %3270, %v2020
    %v3272 = vpop.permute.xlu0 %3271
    %3274 = vset.pattern.permute.xlu0 6
    %3275 = vperm.xlu0 %3274, %v2021
    %v3276 = vpop.permute.xlu0 %3275
    %3278 = vset.pattern.permute.xlu0 6
    %3279 = vperm.xlu0 %3278, %v2022
    %v3280 = vpop.permute.xlu0 %3279
    %3282 = vset.pattern.permute.xlu0 6
    %3283 = vperm.xlu0 %3282, %v2023
    %v3284 = vpop.permute.xlu0 %3283
    %3286 = vset.pattern.permute.xlu0 6
    %3287 = vperm.xlu0 %3286, %v2024
    %v3288 = vpop.permute.xlu0 %3287
    %3290 = vset.pattern.permute.xlu0 6
    %3291 = vperm.xlu0 %3290, %v2025
    %v3292 = vpop.permute.xlu0 %3291
    %3294 = vset.pattern.permute.xlu0 6
    %3295 = vperm.xlu0 %3294, %v2026
    %v3296 = vpop.permute.xlu0 %3295
    %3298 = vset.pattern.permute.xlu0 6
    %3299 = vperm.xlu0 %3298, %v2027
    %v3300 = vpop.permute.xlu0 %3299
    %3302 = vset.pattern.permute.xlu0 6
    %3303 = vperm.xlu0 %3302, %v2028
    %v3304 = vpop.permute.xlu0 %3303
    %3306 = vset.pattern.permute.xlu0 6
    %3307 = vperm.xlu0 %3306, %v2029
    %v3308 = vpop.permute.xlu0 %3307
    %3310 = vset.pattern.permute.xlu0 6
    %3311 = vperm.xlu0 %3310, %v2030
    %v3312 = vpop.permute.xlu0 %3311
    %3314 = vset.pattern.permute.xlu0 6
    %3315 = vperm.xlu0 %3314, %v2031
    %v3316 = vpop.permute.xlu0 %3315
    %3318 = vset.pattern.permute.xlu0 6
    %3319 = vperm.xlu0 %3318, %v2032
    %v3320 = vpop.permute.xlu0 %3319
    %3322 = vset.pattern.permute.xlu0 6
    %3323 = vperm.xlu0 %3322, %v2033
    %v3324 = vpop.permute.xlu0 %3323
    %3326 = vset.pattern.permute.xlu0 6
    %3327 = vperm.xlu0 %3326, %v2034
    %v3328 = vpop.permute.xlu0 %3327
    %v3330 = vmul.f32 %v1976, %v3268
    %v3331 = vmul.f32 %v1978, %v3272
    %v3332 = vmul.f32 %v1980, %v3276
    %v3333 = vmul.f32 %v1982, %v3280
    %v3334 = vmul.f32 %v1984, %v3284
    %v3335 = vmul.f32 %v1986, %v3288
    %v3336 = vmul.f32 %v1988, %v3292
    %v3337 = vmul.f32 %v1990, %v3296
    %v3338 = vmul.f32 %v1992, %v3300
    %v3339 = vmul.f32 %v1994, %v3304
    %v3340 = vmul.f32 %v1996, %v3308
    %v3341 = vmul.f32 %v1998, %v3312
    %v3342 = vmul.f32 %v2000, %v3316
    %v3343 = vmul.f32 %v2002, %v3320
    %v3344 = vmul.f32 %v2524, %v3324
    %v3345 = vmul.f32 %v3265, %v3328
    %3346 = vset.pattern.permute.xlu0 7
    %3347 = vperm.xlu0 %3346, %v2019
    %v3348 = vpop.permute.xlu0 %3347
    %3350 = vset.pattern.permute.xlu0 7
    %3351 = vperm.xlu0 %3350, %v2020
    %v3352 = vpop.permute.xlu0 %3351
    %3354 = vset.pattern.permute.xlu0 7
    %3355 = vperm.xlu0 %3354, %v2021
    %v3356 = vpop.permute.xlu0 %3355
    %3358 = vset.pattern.permute.xlu0 7
    %3359 = vperm.xlu0 %3358, %v2022
    %v3360 = vpop.permute.xlu0 %3359
    %3362 = vset.pattern.permute.xlu0 7
    %3363 = vperm.xlu0 %3362, %v2023
    %v3364 = vpop.permute.xlu0 %3363
    %3366 = vset.pattern.permute.xlu0 7
    %3367 = vperm.xlu0 %3366, %v2024
    %v3368 = vpop.permute.xlu0 %3367
    %3370 = vset.pattern.permute.xlu0 7
    %3371 = vperm.xlu0 %3370, %v2025
    %v3372 = vpop.permute.xlu0 %3371
    %3374 = vset.pattern.permute.xlu0 7
    %3375 = vperm.xlu0 %3374, %v2026
    %v3376 = vpop.permute.xlu0 %3375
    %3378 = vset.pattern.permute.xlu0 7
    %3379 = vperm.xlu0 %3378, %v2027
    %v3380 = vpop.permute.xlu0 %3379
    %3382 = vset.pattern.permute.xlu0 7
    %3383 = vperm.xlu0 %3382, %v2028
    %v3384 = vpop.permute.xlu0 %3383
    %3386 = vset.pattern.permute.xlu0 7
    %3387 = vperm.xlu0 %3386, %v2029
    %v3388 = vpop.permute.xlu0 %3387
    %3390 = vset.pattern.permute.xlu0 7
    %3391 = vperm.xlu0 %3390, %v2030
    %v3392 = vpop.permute.xlu0 %3391
    %3394 = vset.pattern.permute.xlu0 7
    %3395 = vperm.xlu0 %3394, %v2031
    %v3396 = vpop.permute.xlu0 %3395
    %3398 = vset.pattern.permute.xlu0 7
    %3399 = vperm.xlu0 %3398, %v2032
    %v3400 = vpop.permute.xlu0 %3399
    %3402 = vset.pattern.permute.xlu0 7
    %3403 = vperm.xlu0 %3402, %v2033
    %v3404 = vpop.permute.xlu0 %3403
    %3406 = vset.pattern.permute.xlu0 7
    %3407 = vperm.xlu0 %3406, %v2034
    %v3408 = vpop.permute.xlu0 %3407
    %v3410 = vmul.f32 %v1944, %v3348
    %v3411 = vmul.f32 %v1945, %v3352
    %v3412 = vmul.f32 %v1946, %v3356
    %v3413 = vmul.f32 %v1947, %v3360
    %v3414 = vmul.f32 %v1948, %v3364
    %v3415 = vmul.f32 %v1949, %v3368
    %v3416 = vmul.f32 %v1950, %v3372
    %v3417 = vmul.f32 %v1951, %v3376
    %v3418 = vmul.f32 %v1952, %v3380
    %v3419 = vmul.f32 %v1953, %v3384
    %v3420 = vmul.f32 %v1954, %v3388
    %v3421 = vmul.f32 %v1955, %v3392
    %v3422 = vmul.f32 %v1956, %v3396
    %v3423 = vmul.f32 %v1957, %v3400
    %v3424 = vmul.f32 %v1958, %v3404
    %v3425 = vmul.f32 %v3408, 0.0
    %3426 = vset.pattern.permute.xlu0 8
    %3427 = vperm.xlu0 %3426, %v2019
    %v3428 = vpop.permute.xlu0 %3427
    %3430 = vset.pattern.permute.xlu0 8
    %3431 = vperm.xlu0 %3430, %v2020
    %v3432 = vpop.permute.xlu0 %3431
    %3434 = vset.pattern.permute.xlu0 8
    %3435 = vperm.xlu0 %3434, %v2021
    %v3436 = vpop.permute.xlu0 %3435
    %3438 = vset.pattern.permute.xlu0 8
    %3439 = vperm.xlu0 %3438, %v2022
    %v3440 = vpop.permute.xlu0 %3439
    %3442 = vset.pattern.permute.xlu0 8
    %3443 = vperm.xlu0 %3442, %v2023
    %v3444 = vpop.permute.xlu0 %3443
    %3446 = vset.pattern.permute.xlu0 8
    %3447 = vperm.xlu0 %3446, %v2024
    %v3448 = vpop.permute.xlu0 %3447
    %3450 = vset.pattern.permute.xlu0 8
    %3451 = vperm.xlu0 %3450, %v2025
    %v3452 = vpop.permute.xlu0 %3451
    %3454 = vset.pattern.permute.xlu0 8
    %3455 = vperm.xlu0 %3454, %v2026
    %v3456 = vpop.permute.xlu0 %3455
    %3458 = vset.pattern.permute.xlu0 8
    %3459 = vperm.xlu0 %3458, %v2027
    %v3460 = vpop.permute.xlu0 %3459
    %3462 = vset.pattern.permute.xlu0 8
    %3463 = vperm.xlu0 %3462, %v2028
    %v3464 = vpop.permute.xlu0 %3463
    %3466 = vset.pattern.permute.xlu0 8
    %3467 = vperm.xlu0 %3466, %v2029
    %v3468 = vpop.permute.xlu0 %3467
    %3470 = vset.pattern.permute.xlu0 8
    %3471 = vperm.xlu0 %3470, %v2030
    %v3472 = vpop.permute.xlu0 %3471
    %3474 = vset.pattern.permute.xlu0 8
    %3475 = vperm.xlu0 %3474, %v2031
    %v3476 = vpop.permute.xlu0 %3475
    %3478 = vset.pattern.permute.xlu0 8
    %3479 = vperm.xlu0 %3478, %v2032
    %v3480 = vpop.permute.xlu0 %3479
    %3482 = vset.pattern.permute.xlu0 8
    %3483 = vperm.xlu0 %3482, %v2033
    %v3484 = vpop.permute.xlu0 %3483
    %3486 = vset.pattern.permute.xlu0 8
    %3487 = vperm.xlu0 %3486, %v2034
    %v3488 = vpop.permute.xlu0 %3487
    %v3490 = vmul.f32 %v2217, %v3428
    %v3491 = vmul.f32 %v2219, %v3432
    %v3492 = vmul.f32 %v2221, %v3436
    %v3493 = vmul.f32 %v2223, %v3440
    %v3494 = vmul.f32 %v2225, %v3444
    %v3495 = vmul.f32 %v2227, %v3448
    %v3496 = vmul.f32 %v2229, %v3452
    %v3497 = vmul.f32 %v2231, %v3456
    %v3498 = vmul.f32 %v2233, %v3460
    %v3499 = vmul.f32 %v2235, %v3464
    %v3500 = vmul.f32 %v2237, %v3468
    %v3501 = vmul.f32 %v2239, %v3472
    %v3502 = vmul.f32 %v2241, %v3476
    %v3503 = vmul.f32 %v2243, %v3480
    %v3504 = vmul.f32 %v2687, %v3484
    %v3505 = vmul.f32 %v3488, 0.0
    %3522 = vrot.lane.b32.xlu0 %v3410, 32
    %v3523 = vpop.permute.xlu0 %3522
    %3524 = vrot.lane.b32.xlu0 %v3411, 32
    %v3525 = vpop.permute.xlu0 %3524
    %3526 = vrot.lane.b32.xlu0 %v3412, 32
    %v3527 = vpop.permute.xlu0 %3526
    %3528 = vrot.lane.b32.xlu0 %v3413, 32
    %v3529 = vpop.permute.xlu0 %3528
    %3530 = vrot.lane.b32.xlu0 %v3414, 32
    %v3531 = vpop.permute.xlu0 %3530
    %3532 = vrot.lane.b32.xlu0 %v3415, 32
    %v3533 = vpop.permute.xlu0 %3532
    %3534 = vrot.lane.b32.xlu0 %v3416, 32
    %v3535 = vpop.permute.xlu0 %3534
    %3536 = vrot.lane.b32.xlu0 %v3417, 32
    %v3537 = vpop.permute.xlu0 %3536
    %3538 = vrot.lane.b32.xlu0 %v3418, 32
    %v3539 = vpop.permute.xlu0 %3538
    %3540 = vrot.lane.b32.xlu0 %v3419, 32
    %v3541 = vpop.permute.xlu0 %3540
    %3542 = vrot.lane.b32.xlu0 %v3420, 32
    %v3543 = vpop.permute.xlu0 %3542
    %3544 = vrot.lane.b32.xlu0 %v3421, 32
    %v3545 = vpop.permute.xlu0 %3544
    %3546 = vrot.lane.b32.xlu0 %v3422, 32
    %v3547 = vpop.permute.xlu0 %3546
    %3548 = vrot.lane.b32.xlu0 %v3423, 32
    %v3549 = vpop.permute.xlu0 %3548
    %3550 = vrot.lane.b32.xlu0 %v3424, 32
    %v3551 = vpop.permute.xlu0 %3550
    %3552 = vrot.lane.b32.xlu0 %v3425, 32
    %v3553 = vpop.permute.xlu0 %3552
    %3586 = vrot.lane.b32.xlu0 %v3490, 64
    %v3587 = vpop.permute.xlu0 %3586
    %3588 = vrot.lane.b32.xlu0 %v3491, 64
    %v3589 = vpop.permute.xlu0 %3588
    %3590 = vrot.lane.b32.xlu0 %v3492, 64
    %v3591 = vpop.permute.xlu0 %3590
    %3592 = vrot.lane.b32.xlu0 %v3493, 64
    %v3593 = vpop.permute.xlu0 %3592
    %3594 = vrot.lane.b32.xlu0 %v3494, 64
    %v3595 = vpop.permute.xlu0 %3594
    %3596 = vrot.lane.b32.xlu0 %v3495, 64
    %v3597 = vpop.permute.xlu0 %3596
    %3598 = vrot.lane.b32.xlu0 %v3496, 64
    %v3599 = vpop.permute.xlu0 %3598
    %3600 = vrot.lane.b32.xlu0 %v3497, 64
    %v3601 = vpop.permute.xlu0 %3600
    %3602 = vrot.lane.b32.xlu0 %v3498, 64
    %v3603 = vpop.permute.xlu0 %3602
    %3604 = vrot.lane.b32.xlu0 %v3499, 64
    %v3605 = vpop.permute.xlu0 %3604
    %3606 = vrot.lane.b32.xlu0 %v3500, 64
    %v3607 = vpop.permute.xlu0 %3606
    %3608 = vrot.lane.b32.xlu0 %v3501, 64
    %v3609 = vpop.permute.xlu0 %3608
    %3610 = vrot.lane.b32.xlu0 %v3502, 64
    %v3611 = vpop.permute.xlu0 %3610
    %3612 = vrot.lane.b32.xlu0 %v3503, 64
    %v3613 = vpop.permute.xlu0 %3612
    %3614 = vrot.lane.b32.xlu0 %v3504, 64
    %v3615 = vpop.permute.xlu0 %3614
    %3616 = vrot.lane.b32.xlu0 %v3505, 64
    %v3617 = vpop.permute.xlu0 %3616
    %v3634 = vsel %vm2469, %v3330, %v3523
    %v3635 = vsel %vm2469, %v3331, %v3525
    %v3636 = vsel %vm2469, %v3332, %v3527
    %v3637 = vsel %vm2469, %v3333, %v3529
    %v3638 = vsel %vm2469, %v3334, %v3531
    %v3639 = vsel %vm2469, %v3335, %v3533
    %v3640 = vsel %vm2469, %v3336, %v3535
    %v3641 = vsel %vm2469, %v3337, %v3537
    %v3642 = vsel %vm2469, %v3338, %v3539
    %v3643 = vsel %vm2469, %v3339, %v3541
    %v3644 = vsel %vm2469, %v3340, %v3543
    %v3645 = vsel %vm2469, %v3341, %v3545
    %v3646 = vsel %vm2469, %v3342, %v3547
    %v3647 = vsel %vm2469, %v3343, %v3549
    %v3648 = vsel %vm2469, %v3344, %v3551
    %v3649 = vsel %vm2469, %v3345, %v3553
    %v3650 = vsel %vm2486, %v3634, %v3587
    %v3651 = vsel %vm2486, %v3635, %v3589
    %v3652 = vsel %vm2486, %v3636, %v3591
    %v3653 = vsel %vm2486, %v3637, %v3593
    %v3654 = vsel %vm2486, %v3638, %v3595
    %v3655 = vsel %vm2486, %v3639, %v3597
    %v3656 = vsel %vm2486, %v3640, %v3599
    %v3657 = vsel %vm2486, %v3641, %v3601
    %v3658 = vsel %vm2486, %v3642, %v3603
    %v3659 = vsel %vm2486, %v3643, %v3605
    %v3660 = vsel %vm2486, %v3644, %v3607
    %v3661 = vsel %vm2486, %v3645, %v3609
    %v3662 = vsel %vm2486, %v3646, %v3611
    %v3663 = vsel %vm2486, %v3647, %v3613
    %v3664 = vsel %vm2486, %v3648, %v3615
    %v3665 = vsel %vm2486, %v3649, %v3617
    %s3666 = scalar_lea.vmem %s19, 96
    %v3667 = vld [vmem:[%s3666] sm:$0xf]
    %v3668 = vld [vmem:[%s3666 + $0x4] sm:$0xf]
    %v3669 = vld [vmem:[%s3666 + $0x8] sm:$0xf]
    %v3670 = vld [vmem:[%s3666 + $0xc] sm:$0xf]
    %v3671 = vld [vmem:[%s3666 + $0x10] sm:$0xf]
    %v3672 = vld [vmem:[%s3666 + $0x14] sm:$0xf]
    %v3673 = vld [vmem:[%s3666 + $0x18] sm:$0xf]
    %v3674 = vld [vmem:[%s3666 + $0x1c] sm:$0xf]
    %v3675 = vld [vmem:[%s3666 + $0x20] sm:$0xf]
    %v3676 = vld [vmem:[%s3666 + $0x24] sm:$0xf]
    %v3677 = vld [vmem:[%s3666 + $0x28] sm:$0xf]
    %v3678 = vld [vmem:[%s3666 + $0x2c] sm:$0xf]
    %v3679 = vpack.c.bf16 %v3651, %v3650
    %v3680 = vpack.c.bf16 %v3653, %v3652
    %v3681 = vpack.c.bf16 %v3655, %v3654
    %v3682 = vpack.c.bf16 %v3657, %v3656
    %v3683 = vpack.c.bf16 %v3659, %v3658
    %v3684 = vpack.c.bf16 %v3661, %v3660
    %v3685 = vpack.c.bf16 %v3663, %v3662
    %v3686 = vpack.c.bf16 %v3665, %v3664
    %v3699 = vunpack.c.l.b16 %v3667
    %v3700 = vunpack.c.l.b16 %v3668
    %v3701 = vunpack.c.l.b16 %v3669
    %v3702 = vunpack.c.l.b16 %v3670
    %v3703 = vunpack.c.l.b16 %v3671
    %v3704 = vunpack.c.l.b16 %v3672
    %v3705 = vunpack.c.l.b16 %v3673
    %v3706 = vunpack.c.l.b16 %v3674
    %v3707 = vunpack.c.l.b16 %v3675
    %v3708 = vunpack.c.l.b16 %v3676
    %v3709 = vunpack.c.l.b16 %v3677
    %v3710 = vunpack.c.l.b16 %v3678
    %v3711 = vpack.c.b16 %v3700, %v3699
    %v3712 = vpack.c.b16 %v3702, %v3701
    %v3713 = vpack.c.b16 %v3704, %v3703
    %v3714 = vpack.c.b16 %v3706, %v3705
    %v3715 = vpack.c.b16 %v3708, %v3707
    %v3716 = vpack.c.b16 %v3710, %v3709
    %v3724 = vsel %vm2985, %v3679, 0
    %v3727 = vsel %vm2985, %v3680, 0
    %v3730 = vsel %vm2985, %v3681, 0
    %v3733 = vsel %vm2985, %v3682, 0
    %v3736 = vsel %vm2985, %v3683, 0
    %v3739 = vsel %vm2985, %v3684, 0
    %v3742 = vsel %vm2985, %v3685, 0
    %v3745 = vsel %vm2985, %v3686, 0
    %3747 = vmatprep.subr.bf16.mxu0 0
    %3748 = vmatpush1.bf16.msra.mxu0 0
    %3749 = vmatprep.subr.bf16.mxu0 0
    %3750 = vmatpush1.bf16.msra.mxu0 0
    %3751 = vmatprep.subr.bf16.mxu0 0
    %3752 = vmatpush1.bf16.msra.mxu0 %v3716
    %3753 = vmatprep.subr.bf16.mxu0 0
    %3754 = vmatpush1.bf16.msra.mxu0 %v3715
    %3755 = vmatprep.subr.bf16.mxu0 0
    %3756 = vmatpush1.bf16.msra.mxu0 %v3714
    %3757 = vmatprep.subr.bf16.mxu0 0
    %3758 = vmatpush1.bf16.msra.mxu0 %v3713
    %3759 = vmatprep.subr.bf16.mxu0 0
    %3760 = vmatpush1.bf16.msra.mxu0 %v3712
    %3761 = vmatprep.subr.bf16.mxu0 0
    %3762 = vmatpush1.bf16.msra.mxu0 %v3711
    %3763 = vmatprep.subr.bf16.mxu0 0
    %3764 = vmatpush2.bf16.msra.mxu0 0
    %3765 = vmatprep.subr.bf16.mxu0 0
    %3766 = vmatpush2.bf16.msra.mxu0 0
    %3767 = vmatprep.subr.bf16.mxu0 0
    %3768 = vmatpush2.bf16.msra.mxu0 0
    %3769 = vmatprep.subr.bf16.mxu0 0
    %3770 = vmatpush2.bf16.msra.mxu0 0
    %3771 = vmatprep.subr.bf16.mxu0 0
    %3772 = vmatpush2.bf16.msra.mxu0 0
    %3773 = vmatprep.subr.bf16.mxu0 0
    %3774 = vmatpush2.bf16.msra.mxu0 0
    %3775 = vmatprep.subr.bf16.mxu0 0
    %3776 = vmatpush2.bf16.msra.mxu0 0
    %3777 = vmatprep.subr.bf16.mxu0 0
    %3778 = vmatpush2.bf16.msra.mxu0 0
    %3779 = vmatprep.mubr.bf16.mxu0 0
    %3780 = vmatmul.mubr.bf16.gmra.mxu0 %v3724
    %v3781 = vpop.f32.mrf.mxu0
    %v3782 = vadd.f32 0.0, %v3781
    %v3783 = vpop.f32.mrf.mxu0
    %v3784 = vpop.f32.mrf.mxu0
    %v3785 = vadd.f32 0.0, %v3784
    %v3786 = vpop.f32.mrf.mxu0
    %3787 = vmatprep.mubr.bf16.mxu0 0
    %3788 = vmatmul.mubr.bf16.gmra.mxu0 %v3727
    %v3789 = vpop.f32.mrf.mxu0
    %v3790 = vadd.f32 0.0, %v3789
    %v3791 = vpop.f32.mrf.mxu0
    %v3792 = vpop.f32.mrf.mxu0
    %v3793 = vadd.f32 0.0, %v3792
    %v3794 = vpop.f32.mrf.mxu0
    %3795 = vmatprep.mubr.bf16.mxu0 0
    %3796 = vmatmul.mubr.bf16.gmra.mxu0 %v3730
    %v3797 = vpop.f32.mrf.mxu0
    %v3798 = vadd.f32 0.0, %v3797
    %v3799 = vpop.f32.mrf.mxu0
    %v3800 = vpop.f32.mrf.mxu0
    %v3801 = vadd.f32 0.0, %v3800
    %v3802 = vpop.f32.mrf.mxu0
    %3803 = vmatprep.mubr.bf16.mxu0 0
    %3804 = vmatmul.mubr.bf16.gmra.mxu0 %v3733
    %v3805 = vpop.f32.mrf.mxu0
    %v3806 = vadd.f32 0.0, %v3805
    %v3807 = vpop.f32.mrf.mxu0
    %v3808 = vpop.f32.mrf.mxu0
    %v3809 = vadd.f32 0.0, %v3808
    %v3810 = vpop.f32.mrf.mxu0
    %3811 = vmatprep.mubr.bf16.mxu0 0
    %3812 = vmatmul.mubr.bf16.gmra.mxu0 %v3736
    %v3813 = vpop.f32.mrf.mxu0
    %v3814 = vadd.f32 0.0, %v3813
    %v3815 = vpop.f32.mrf.mxu0
    %v3816 = vpop.f32.mrf.mxu0
    %v3817 = vadd.f32 0.0, %v3816
    %v3818 = vpop.f32.mrf.mxu0
    %3819 = vmatprep.mubr.bf16.mxu0 0
    %3820 = vmatmul.mubr.bf16.gmra.mxu0 %v3739
    %v3821 = vpop.f32.mrf.mxu0
    %v3822 = vadd.f32 0.0, %v3821
    %v3823 = vpop.f32.mrf.mxu0
    %v3824 = vpop.f32.mrf.mxu0
    %v3825 = vadd.f32 0.0, %v3824
    %v3826 = vpop.f32.mrf.mxu0
    %3827 = vmatprep.mubr.bf16.mxu0 0
    %3828 = vmatmul.mubr.bf16.gmra.mxu0 %v3742
    %v3829 = vpop.f32.mrf.mxu0
    %v3830 = vadd.f32 0.0, %v3829
    %v3831 = vpop.f32.mrf.mxu0
    %v3832 = vpop.f32.mrf.mxu0
    %v3833 = vadd.f32 0.0, %v3832
    %v3834 = vpop.f32.mrf.mxu0
    %3835 = vmatprep.mubr.bf16.mxu0 0
    %3836 = vmatmul.mubr.bf16.gmra.mxu0 %v3745
    %v3837 = vpop.f32.mrf.mxu0
    %v3838 = vadd.f32 0.0, %v3837
    %v3839 = vpop.f32.mrf.mxu0
    %v3840 = vpop.f32.mrf.mxu0
    %v3841 = vadd.f32 0.0, %v3840
    %v3842 = vpop.f32.mrf.mxu0
    %3843 = vdwg.mxu0
    %v3844 = vadd.f32 %v3202, %v3782
    %v3845 = vadd.f32 %v3205, %v3785
    %v3846 = vadd.f32 %v3210, %v3790
    %v3847 = vadd.f32 %v3213, %v3793
    %v3848 = vadd.f32 %v3218, %v3798
    %v3849 = vadd.f32 %v3221, %v3801
    %v3850 = vadd.f32 %v3226, %v3806
    %v3851 = vadd.f32 %v3229, %v3809
    %v3852 = vadd.f32 %v3234, %v3814
    %v3853 = vadd.f32 %v3237, %v3817
    %v3854 = vadd.f32 %v3242, %v3822
    %v3855 = vadd.f32 %v3245, %v3825
    %v3856 = vadd.f32 %v3250, %v3830
    %v3857 = vadd.f32 %v3253, %v3833
    %v3858 = vadd.f32 %v3258, %v3838
    %v3859 = vadd.f32 %v3261, %v3841
    %v3860 = vld [vmem:[%s21] sm:$0x1]
    %v3862 = vlaneseq
    %v3863 = vshrl.u32 %v3862, 7
    %v3864 = vsub.s32 0, %v3863
    %v3865 = vrot.slane %v3860, %v3864
    %v3867 = vadd.f32 %v3844, %v3865
    %v3868 = vadd.f32 %v3845, %v3865
    %v3869 = vadd.f32 %v3846, %v3865
    %v3870 = vadd.f32 %v3847, %v3865
    %v3871 = vadd.f32 %v3848, %v3865
    %v3872 = vadd.f32 %v3849, %v3865
    %v3873 = vadd.f32 %v3850, %v3865
    %v3874 = vadd.f32 %v3851, %v3865
    %v3875 = vadd.f32 %v3852, %v3865
    %v3876 = vadd.f32 %v3853, %v3865
    %v3877 = vadd.f32 %v3854, %v3865
    %v3878 = vadd.f32 %v3855, %v3865
    %v3879 = vadd.f32 %v3856, %v3865
    %v3880 = vadd.f32 %v3857, %v3865
    %v3881 = vadd.f32 %v3858, %v3865
    %v3882 = vadd.f32 %v3859, %v3865
    %v3883 = vmax.f32 %v3867, 0.0
    %v3884 = vmax.f32 %v3868, 0.0
    %v3885 = vmax.f32 %v3869, 0.0
    %v3886 = vmax.f32 %v3870, 0.0
    %v3887 = vmax.f32 %v3871, 0.0
    %v3888 = vmax.f32 %v3872, 0.0
    %v3889 = vmax.f32 %v3873, 0.0
    %v3890 = vmax.f32 %v3874, 0.0
    %v3891 = vmax.f32 %v3875, 0.0
    %v3892 = vmax.f32 %v3876, 0.0
    %v3893 = vmax.f32 %v3877, 0.0
    %v3894 = vmax.f32 %v3878, 0.0
    %v3895 = vmax.f32 %v3879, 0.0
    %v3896 = vmax.f32 %v3880, 0.0
    %v3897 = vmax.f32 %v3881, 0.0
    %v3898 = vmax.f32 %v3882, 0.0
    %v3915 = vrot.slane %v3883, 1
    %v3916 = vrot.slane %v3884, 1
    %v3917 = vsel %vm2212, %v3915, %v3916
    %v3918 = vrot.slane %v3885, 1
    %v3919 = vsel %vm2212, %v3916, %v3918
    %v3920 = vrot.slane %v3886, 1
    %v3921 = vsel %vm2212, %v3918, %v3920
    %v3922 = vrot.slane %v3887, 1
    %v3923 = vsel %vm2212, %v3920, %v3922
    %v3924 = vrot.slane %v3888, 1
    %v3925 = vsel %vm2212, %v3922, %v3924
    %v3926 = vrot.slane %v3889, 1
    %v3927 = vsel %vm2212, %v3924, %v3926
    %v3928 = vrot.slane %v3890, 1
    %v3929 = vsel %vm2212, %v3926, %v3928
    %v3930 = vrot.slane %v3891, 1
    %v3931 = vsel %vm2212, %v3928, %v3930
    %v3932 = vrot.slane %v3892, 1
    %v3933 = vsel %vm2212, %v3930, %v3932
    %v3934 = vrot.slane %v3893, 1
    %v3935 = vsel %vm2212, %v3932, %v3934
    %v3936 = vrot.slane %v3894, 1
    %v3937 = vsel %vm2212, %v3934, %v3936
    %v3938 = vrot.slane %v3895, 1
    %v3939 = vsel %vm2212, %v3936, %v3938
    %v3940 = vrot.slane %v3896, 1
    %v3941 = vsel %vm2212, %v3938, %v3940
    %v3942 = vrot.slane %v3897, 1
    %v3943 = vsel %vm2212, %v3940, %v3942
    %v3944 = vrot.slane %v3898, 1
    %v3945 = vsel %vm2212, %v3942, %v3944
    %v3962 = vsel %vm2212, %v3944, 0.0
    %v3963 = vmax.f32 %v3883, %v3917
    %v3964 = vmax.f32 %v3884, %v3919
    %v3965 = vmax.f32 %v3885, %v3921
    %v3966 = vmax.f32 %v3886, %v3923
    %v3967 = vmax.f32 %v3887, %v3925
    %v3968 = vmax.f32 %v3888, %v3927
    %v3969 = vmax.f32 %v3889, %v3929
    %v3970 = vmax.f32 %v3890, %v3931
    %v3971 = vmax.f32 %v3891, %v3933
    %v3972 = vmax.f32 %v3892, %v3935
    %v3973 = vmax.f32 %v3893, %v3937
    %v3974 = vmax.f32 %v3894, %v3939
    %v3975 = vmax.f32 %v3895, %v3941
    %v3976 = vmax.f32 %v3896, %v3943
    %v3977 = vmax.f32 %v3897, %v3945
    %v3978 = vmax.f32 %v3898, %v3962
    %v3979 = vmax.f32 %v3963, %v3964
    %v3980 = vmax.f32 %v3964, %v3965
    %v3981 = vmax.f32 %v3965, %v3966
    %v3982 = vmax.f32 %v3966, %v3967
    %v3983 = vmax.f32 %v3967, %v3968
    %v3984 = vmax.f32 %v3968, %v3969
    %v3985 = vmax.f32 %v3969, %v3970
    %v3986 = vmax.f32 %v3970, %v3971
    %v3987 = vmax.f32 %v3971, %v3972
    %v3988 = vmax.f32 %v3972, %v3973
    %v3989 = vmax.f32 %v3973, %v3974
    %v3990 = vmax.f32 %v3974, %v3975
    %v3991 = vmax.f32 %v3975, %v3976
    %v3992 = vmax.f32 %v3976, %v3977
    %v3993 = vmax.f32 %v3977, %v3978
    %v3994 = vmax.f32 %v3978, 0.0
    %v3995 = vld [vmem:[#allocation15] sm:$0xf]
    %v3996 = vld [vmem:[#allocation15 + $0x4] sm:$0xf]
    %v3997 = vld [vmem:[#allocation15 + $0x8] sm:$0xf]
    %v3998 = vld [vmem:[#allocation15 + $0xc] sm:$0xf]
    %v3999 = vpack.c.bf16 %v3980, %v3979
    %v4000 = vpack.c.bf16 %v3982, %v3981
    %v4001 = vpack.c.bf16 %v3984, %v3983
    %v4002 = vpack.c.bf16 %v3986, %v3985
    %v4003 = vpack.c.bf16 %v3988, %v3987
    %v4004 = vpack.c.bf16 %v3990, %v3989
    %v4005 = vpack.c.bf16 %v3992, %v3991
    %v4006 = vpack.c.bf16 %v3994, %v3993
    %v4011 = vunpack.c.l.b16 %v3995
    %v4012 = vunpack.c.l.b16 %v3996
    %v4013 = vunpack.c.l.b16 %v3997
    %v4014 = vunpack.c.l.b16 %v3998
    %v4015 = vpack.c.b16 %v4012, %v4011
    %v4016 = vpack.c.b16 %v4014, %v4013
    %4019 = vmatprep.subr.bf16.mxu0 0
    %4020 = vmatpush1.bf16.msra.mxu0 %v4006
    %4021 = vmatprep.subr.bf16.mxu0 0
    %4022 = vmatpush1.bf16.msra.mxu0 %v4005
    %4023 = vmatprep.subr.bf16.mxu0 0
    %4024 = vmatpush1.bf16.msra.mxu0 %v4004
    %4025 = vmatprep.subr.bf16.mxu0 0
    %4026 = vmatpush1.bf16.msra.mxu0 %v4003
    %4027 = vmatprep.subr.bf16.mxu0 0
    %4028 = vmatpush1.bf16.msra.mxu0 %v4002
    %4029 = vmatprep.subr.bf16.mxu0 0
    %4030 = vmatpush1.bf16.msra.mxu0 %v4001
    %4031 = vmatprep.subr.bf16.mxu0 0
    %4032 = vmatpush1.bf16.msra.mxu0 %v4000
    %4033 = vmatprep.subr.bf16.mxu0 0
    %4034 = vmatpush1.bf16.msra.mxu0 %v3999
    %4035 = vmatprep.subr.bf16.mxu0 0
    %4036 = vmatpush2.bf16.msra.mxu0 0
    %4037 = vmatprep.subr.bf16.mxu0 0
    %4038 = vmatpush2.bf16.msra.mxu0 0
    %4039 = vmatprep.subr.bf16.mxu0 0
    %4040 = vmatpush2.bf16.msra.mxu0 0
    %4041 = vmatprep.subr.bf16.mxu0 0
    %4042 = vmatpush2.bf16.msra.mxu0 0
    %4043 = vmatprep.subr.bf16.mxu0 0
    %4044 = vmatpush2.bf16.msra.mxu0 0
    %4045 = vmatprep.subr.bf16.mxu0 0
    %4046 = vmatpush2.bf16.msra.mxu0 0
    %4047 = vmatprep.subr.bf16.mxu0 0
    %4048 = vmatpush2.bf16.msra.mxu0 0
    %4049 = vmatprep.subr.bf16.mxu0 0
    %4050 = vmatpush2.bf16.msra.mxu0 0
    %4051 = vmatprep.mubr.bf16.mxu0 0
    %4052 = vmatmul.mubr.bf16.gmra.mxu0 %v4015
    %v4053 = vpop.f32.mrf.mxu0
    %v4054 = vadd.f32 0.0, %v4053
    %v4055 = vpop.f32.mrf.mxu0
    %v4056 = vpop.f32.mrf.mxu0
    %v4057 = vadd.f32 0.0, %v4056
    %v4058 = vpop.f32.mrf.mxu0
    %4059 = vmatprep.mubr.bf16.mxu0 0
    %4060 = vmatmul.mubr.bf16.gmra.mxu0 %v4016
    %v4061 = vpop.f32.mrf.mxu0
    %v4062 = vadd.f32 0.0, %v4061
    %v4063 = vpop.f32.mrf.mxu0
    %v4064 = vpop.f32.mrf.mxu0
    %v4065 = vadd.f32 0.0, %v4064
    %v4066 = vpop.f32.mrf.mxu0
    %4067 = vdwg.mxu0
    %v4068 = vsel %vm2486, %v4054, 0.0
    %v4069 = vsel %vm2486, %v4057, 0.0
    %v4070 = vadd.f32 %v4068, %v4069
    %v4071 = vrot.slane %v4070, 4
    %v4072 = vadd.f32 %v4070, %v4071
    %v4073 = vrot.slane %v4072, 2
    %v4074 = vadd.f32 %v4072, %v4073
    %v4075 = vrot.slane %v4074, 1
    %v4076 = vadd.f32 %v4074, %v4075
    %v4077 = vrcp.pop 16.0
    %v4078 = vmul.f32 %v4076, %v4077
    %v4079 = vsel %vm2486, %v4062, 0.0
    %v4080 = vsel %vm2486, %v4065, 0.0
    %v4081 = vadd.f32 %v4079, %v4080
    %v4082 = vrot.slane %v4081, 4
    %v4083 = vadd.f32 %v4081, %v4082
    %v4084 = vrot.slane %v4083, 2
    %v4085 = vadd.f32 %v4083, %v4084
    %v4086 = vrot.slane %v4085, 1
    %v4087 = vadd.f32 %v4085, %v4086
    %v4088 = vmul.f32 %v4087, %v4077
    %v4089 = vsel %vm550, %v4078, %v4088
    %v4090 = vld [vmem:[#allocation16] sm:$0xf]
    %v4091 = vld [vmem:[#allocation16 + $0x4] sm:$0xf]
    %v4092 = vld [vmem:[#allocation16 + $0x8] sm:$0xf]
    %v4093 = vld [vmem:[#allocation16 + $0xc] sm:$0xf]
    %v4094 = vld [vmem:[#allocation16 + $0x10] sm:$0xf]
    %v4095 = vld [vmem:[#allocation16 + $0x14] sm:$0xf]
    %v4096 = vld [vmem:[#allocation16 + $0x18] sm:$0xf]
    %v4097 = vld [vmem:[#allocation16 + $0x1c] sm:$0xf]
    %v4098 = vpack.c.bf16 %v4089, %v4089
    %v4099 = vld [vmem:[%s29] sm:$0x1]
    %v4101 = vlaneseq
    %v4102 = vshrl.u32 %v4101, 7
    %v4103 = vsub.s32 0, %v4102
    %v4104 = vrot.slane %v4099, %v4103
    %v4114 = vunpack.c.l.b16 %v4090
    %v4115 = vunpack.c.l.b16 %v4091
    %v4116 = vunpack.c.l.b16 %v4092
    %v4117 = vunpack.c.l.b16 %v4093
    %v4118 = vunpack.c.l.b16 %v4094
    %v4119 = vunpack.c.l.b16 %v4095
    %v4120 = vunpack.c.l.b16 %v4096
    %v4121 = vunpack.c.l.b16 %v4097
    %v4122 = vpack.c.b16 %v4115, %v4114
    %v4123 = vpack.c.b16 %v4117, %v4116
    %v4124 = vpack.c.b16 %v4119, %v4118
    %v4125 = vpack.c.b16 %v4121, %v4120
    %v4131 = vsel %vm2486, %v4098, 0
    %4133 = vmatprep.subr.bf16.mxu0 0
    %4134 = vmatpush1.bf16.msra.mxu0 0
    %4135 = vmatprep.subr.bf16.mxu0 0
    %4136 = vmatpush1.bf16.msra.mxu0 0
    %4137 = vmatprep.subr.bf16.mxu0 0
    %4138 = vmatpush1.bf16.msra.mxu0 0
    %4139 = vmatprep.subr.bf16.mxu0 0
    %4140 = vmatpush1.bf16.msra.mxu0 0
    %4141 = vmatprep.subr.bf16.mxu0 0
    %4142 = vmatpush1.bf16.msra.mxu0 %v4125
    %4143 = vmatprep.subr.bf16.mxu0 0
    %4144 = vmatpush1.bf16.msra.mxu0 %v4124
    %4145 = vmatprep.subr.bf16.mxu0 0
    %4146 = vmatpush1.bf16.msra.mxu0 %v4123
    %4147 = vmatprep.subr.bf16.mxu0 0
    %4148 = vmatpush1.bf16.msra.mxu0 %v4122
    %4149 = vmatprep.subr.bf16.mxu0 0
    %4150 = vmatpush2.bf16.msra.mxu0 0
    %4151 = vmatprep.subr.bf16.mxu0 0
    %4152 = vmatpush2.bf16.msra.mxu0 0
    %4153 = vmatprep.subr.bf16.mxu0 0
    %4154 = vmatpush2.bf16.msra.mxu0 0
    %4155 = vmatprep.subr.bf16.mxu0 0
    %4156 = vmatpush2.bf16.msra.mxu0 0
    %4157 = vmatprep.subr.bf16.mxu0 0
    %4158 = vmatpush2.bf16.msra.mxu0 0
    %4159 = vmatprep.subr.bf16.mxu0 0
    %4160 = vmatpush2.bf16.msra.mxu0 0
    %4161 = vmatprep.subr.bf16.mxu0 0
    %4162 = vmatpush2.bf16.msra.mxu0 0
    %4163 = vmatprep.subr.bf16.mxu0 0
    %4164 = vmatpush2.bf16.msra.mxu0 0
    %4165 = vmatprep.mubr.bf16.mxu0 0
    %4166 = vmatmul.mubr.bf16.gmra.mxu0 %v4131
    %v4167 = vpop.f32.mrf.mxu0
    %v4168 = vadd.f32 %v4104, %v4167
    %v4169 = vpop.f32.mrf.mxu0
    %v4170 = vpop.f32.mrf.mxu0
    %v4171 = vpop.f32.mrf.mxu0
    %4172 = vdwg.mxu0
    %v4173 = vmax.f32 %v4168, 0.0
    %v4174 = vld [vmem:[#allocation18] sm:$0xf]
    %v4175 = vld [vmem:[#allocation18 + $0x4] sm:$0xf]
    %v4176 = vpack.c.bf16 %v4173, %v4173
    %v4177 = vld [vmem:[%s33] sm:$0x1]
    %v4179 = vlaneseq
    %v4180 = vshrl.u32 %v4179, 7
    %v4181 = vsub.s32 0, %v4180
    %v4182 = vrot.slane %v4177, %v4181
    %v4186 = vunpack.c.l.b16 %v4174
    %v4187 = vunpack.c.l.b16 %v4175
    %v4188 = vpack.c.b16 %v4187, %v4186
    %v4191 = vsel %vm1622, %v4176, 0
    %4193 = vmatprep.subr.bf16.mxu0 0
    %4194 = vmatpush1.bf16.msra.mxu0 0
    %4195 = vmatprep.subr.bf16.mxu0 0
    %4196 = vmatpush1.bf16.msra.mxu0 0
    %4197 = vmatprep.subr.bf16.mxu0 0
    %4198 = vmatpush1.bf16.msra.mxu0 0
    %4199 = vmatprep.subr.bf16.mxu0 0
    %4200 = vmatpush1.bf16.msra.mxu0 0
    %4201 = vmatprep.subr.bf16.mxu0 0
    %4202 = vmatpush1.bf16.msra.mxu0 0
    %4203 = vmatprep.subr.bf16.mxu0 0
    %4204 = vmatpush1.bf16.msra.mxu0 0
    %4205 = vmatprep.subr.bf16.mxu0 0
    %4206 = vmatpush1.bf16.msra.mxu0 0
    %4207 = vmatprep.subr.bf16.mxu0 0
    %4208 = vmatpush1.bf16.msra.mxu0 %v4188
    %4209 = vmatprep.subr.bf16.mxu0 0
    %4210 = vmatpush2.bf16.msra.mxu0 0
    %4211 = vmatprep.subr.bf16.mxu0 0
    %4212 = vmatpush2.bf16.msra.mxu0 0
    %4213 = vmatprep.subr.bf16.mxu0 0
    %4214 = vmatpush2.bf16.msra.mxu0 0
    %4215 = vmatprep.subr.bf16.mxu0 0
    %4216 = vmatpush2.bf16.msra.mxu0 0
    %4217 = vmatprep.subr.bf16.mxu0 0
    %4218 = vmatpush2.bf16.msra.mxu0 0
    %4219 = vmatprep.subr.bf16.mxu0 0
    %4220 = vmatpush2.bf16.msra.mxu0 0
    %4221 = vmatprep.subr.bf16.mxu0 0
    %4222 = vmatpush2.bf16.msra.mxu0 0
    %4223 = vmatprep.subr.bf16.mxu0 0
    %4224 = vmatpush2.bf16.msra.mxu0 0
    %4225 = vmatprep.mubr.bf16.mxu0 0
    %4226 = vmatmul.mubr.bf16.gmra.mxu0 %v4191
    %v4227 = vpop.f32.mrf.mxu0
    %v4228 = vadd.f32 %v4182, %v4227
    %v4229 = vpop.f32.mrf.mxu0
    %v4230 = vpop.f32.mrf.mxu0
    %v4231 = vpop.f32.mrf.mxu0
    %4232 = vdwg.mxu0
    %v4233 = vxor.u32 %v4228, 2147483648
    %v4234 = vmul.f32 %v4233, 1.442695
    %v4235 = vpow.pop %v4234
    %v4236 = vadd.f32 %v4235, 1.0
    %v4237 = vrcp.pop %v4236
    %v4238 = vmul.f32 1.0, %v4237
    %v4239 = vlaneseq
    %v4240 = vshrl.u32 %v4239, 7
    %v4241 = vsub.s32 0, %v4240
    %v4242 = vrot.slane %v4238, %v4241
    %v4243 = vlaneseq
    %v4244 = vshrl.u32 %v4243, 7
    %v4245 = vsub.s32 1, %v4244
    %v4246 = vrot.slane %v4238, %v4245
    %v4247 = vmul.f32 %v4054, %v4242
    %v4248 = vmul.f32 %v4057, %v4242
    %v4249 = vmul.f32 %v4062, %v4246
    %v4250 = vmul.f32 %v4065, %v4246
    %v4251 = vld [vmem:[#allocation19] sm:$0xf]
    %v4252 = vld [vmem:[#allocation19 + $0x4] sm:$0xf]
    %v4253 = vld [vmem:[#allocation19 + $0x8] sm:$0xf]
    %v4254 = vld [vmem:[#allocation19 + $0xc] sm:$0xf]
    %v4255 = vld [vmem:[#allocation19 + $0x10] sm:$0xf]
    %v4256 = vld [vmem:[#allocation19 + $0x14] sm:$0xf]
    %v4257 = vld [vmem:[#allocation19 + $0x18] sm:$0xf]
    %v4258 = vld [vmem:[#allocation19 + $0x1c] sm:$0xf]
    %v4259 = vpack.c.bf16 %v4248, %v4247
    %v4260 = vpack.c.bf16 %v4250, %v4249
    %v4261 = vld [vmem:[%s37] sm:$0x1]
    %v4263 = vlaneseq
    %v4264 = vshrl.u32 %v4263, 7
    %v4265 = vsub.s32 0, %v4264
    %v4266 = vrot.slane %v4261, %v4265
    %v4276 = vunpack.c.l.b16 %v4251
    %v4277 = vunpack.c.l.b16 %v4252
    %v4278 = vunpack.c.l.b16 %v4253
    %v4279 = vunpack.c.l.b16 %v4254
    %v4280 = vunpack.c.l.b16 %v4255
    %v4281 = vunpack.c.l.b16 %v4256
    %v4282 = vunpack.c.l.b16 %v4257
    %v4283 = vunpack.c.l.b16 %v4258
    %v4284 = vpack.c.b16 %v4277, %v4276
    %v4285 = vpack.c.b16 %v4279, %v4278
    %v4286 = vpack.c.b16 %v4281, %v4280
    %v4287 = vpack.c.b16 %v4283, %v4282
    %v4293 = vsel %vm2486, %v4259, 0
    %v4296 = vsel %vm2486, %v4260, 0
    %4298 = vmatprep.subr.bf16.mxu0 0
    %4299 = vmatpush1.bf16.msra.mxu0 0
    %4300 = vmatprep.subr.bf16.mxu0 0
    %4301 = vmatpush1.bf16.msra.mxu0 0
    %4302 = vmatprep.subr.bf16.mxu0 0
    %4303 = vmatpush1.bf16.msra.mxu0 0
    %4304 = vmatprep.subr.bf16.mxu0 0
    %4305 = vmatpush1.bf16.msra.mxu0 0
    %4306 = vmatprep.subr.bf16.mxu0 0
    %4307 = vmatpush1.bf16.msra.mxu0 %v4287
    %4308 = vmatprep.subr.bf16.mxu0 0
    %4309 = vmatpush1.bf16.msra.mxu0 %v4286
    %4310 = vmatprep.subr.bf16.mxu0 0
    %4311 = vmatpush1.bf16.msra.mxu0 %v4285
    %4312 = vmatprep.subr.bf16.mxu0 0
    %4313 = vmatpush1.bf16.msra.mxu0 %v4284
    %4314 = vmatprep.subr.bf16.mxu0 0
    %4315 = vmatpush2.bf16.msra.mxu0 0
    %4316 = vmatprep.subr.bf16.mxu0 0
    %4317 = vmatpush2.bf16.msra.mxu0 0
    %4318 = vmatprep.subr.bf16.mxu0 0
    %4319 = vmatpush2.bf16.msra.mxu0 0
    %4320 = vmatprep.subr.bf16.mxu0 0
    %4321 = vmatpush2.bf16.msra.mxu0 0
    %4322 = vmatprep.subr.bf16.mxu0 0
    %4323 = vmatpush2.bf16.msra.mxu0 0
    %4324 = vmatprep.subr.bf16.mxu0 0
    %4325 = vmatpush2.bf16.msra.mxu0 0
    %4326 = vmatprep.subr.bf16.mxu0 0
    %4327 = vmatpush2.bf16.msra.mxu0 0
    %4328 = vmatprep.subr.bf16.mxu0 0
    %4329 = vmatpush2.bf16.msra.mxu0 0
    %4330 = vmatprep.mubr.bf16.mxu0 0
    %4331 = vmatmul.mubr.bf16.gmra.mxu0 %v4293
    %v4332 = vpop.f32.mrf.mxu0
    %v4333 = vadd.f32 %v4266, %v4332
    %v4334 = vpop.f32.mrf.mxu0
    %v4335 = vpop.f32.mrf.mxu0
    %v4336 = vadd.f32 %v4266, %v4335
    %v4337 = vpop.f32.mrf.mxu0
    %4338 = vmatprep.mubr.bf16.mxu0 0
    %4339 = vmatmul.mubr.bf16.gmra.mxu0 %v4296
    %v4340 = vpop.f32.mrf.mxu0
    %v4341 = vadd.f32 %v4266, %v4340
    %v4342 = vpop.f32.mrf.mxu0
    %v4343 = vpop.f32.mrf.mxu0
    %v4344 = vadd.f32 %v4266, %v4343
    %v4345 = vpop.f32.mrf.mxu0
    %4346 = vdwg.mxu0
    %v4347 = vmax.f32 %v4333, 0.0
    %v4348 = vmax.f32 %v4336, 0.0
    %v4349 = vmax.f32 %v4341, 0.0
    %v4350 = vmax.f32 %v4344, 0.0
    %v4351 = vld [vmem:[#allocation21] sm:$0x1]
    %v4353 = vlaneseq
    %v4354 = vshrl.u32 %v4353, 7
    %v4355 = vsub.s32 0, %v4354
    %v4356 = vrot.slane %v4351, %v4355
    %v4358 = vmul.f32 %v4347, %v4356
    %v4359 = vmul.f32 %v4348, %v4356
    %v4360 = vmul.f32 %v4349, %v4356
    %v4361 = vmul.f32 %v4350, %v4356
    %v4362 = vsel %vm1622, %v4358, 0.0
    %4363 = vadd.xlane.f32.xlu0 %v4362
    %v4364 = vpop.xlane.xlu0 %4363
    %v4365 = vsel %vm1622, %v4359, 0.0
    %4366 = vadd.xlane.f32.xlu0 %v4365
    %v4367 = vpop.xlane.xlu0 %4366
    %v4368 = vsel %vm1622, %v4360, 0.0
    %4369 = vadd.xlane.f32.xlu0 %v4368
    %v4370 = vpop.xlane.xlu0 %4369
    %v4371 = vsel %vm1622, %v4361, 0.0
    %4372 = vadd.xlane.f32.xlu0 %v4371
    %v4373 = vpop.xlane.xlu0 %4372
    %v4374 = vld [vmem:[#allocation2] sm:$0x1]
    %v4376 = vlaneseq
    %v4377 = vshrl.u32 %v4376, 7
    %v4378 = vsub.s32 0, %v4377
    %v4379 = vrot.slane %v4374, %v4378
    %v4381 = vadd.f32 %v4364, %v4379
    %v4382 = vadd.f32 %v4367, %v4379
    %v4383 = vadd.f32 %v4370, %v4379
    %v4384 = vadd.f32 %v4373, %v4379
    %v4385 = vxor.u32 %v4381, 2147483648
    %v4386 = vxor.u32 %v4382, 2147483648
    %v4387 = vxor.u32 %v4383, 2147483648
    %v4388 = vxor.u32 %v4384, 2147483648
    %v4389 = vmul.f32 %v4385, 1.442695
    %v4390 = vpow.pop %v4389
    %v4391 = vmul.f32 %v4386, 1.442695
    %v4392 = vpow.pop %v4391
    %v4393 = vmul.f32 %v4387, 1.442695
    %v4394 = vpow.pop %v4393
    %v4395 = vmul.f32 %v4388, 1.442695
    %v4396 = vpow.pop %v4395
    %v4397 = vadd.f32 %v4390, 1.0
    %v4398 = vadd.f32 %v4392, 1.0
    %v4399 = vadd.f32 %v4394, 1.0
    %v4400 = vadd.f32 %v4396, 1.0
    %v4401 = vrcp.pop %v4397
    %v4402 = vmul.f32 1.0, %v4401
    %v4403 = vrcp.pop %v4398
    %v4404 = vmul.f32 1.0, %v4403
    %v4405 = vrcp.pop %v4399
    %v4406 = vmul.f32 1.0, %v4405
    %v4407 = vrcp.pop %v4400
    %v4408 = vmul.f32 1.0, %v4407
    %4410 = vset.pattern.permute.xlu0 0
    %4411 = vperm.xlu0 %4410, %v4402
    %v4412 = vpop.permute.xlu0 %4411
    %4415 = vset.pattern.permute.xlu0 0
    %4416 = vperm.xlu0 %4415, %v4404
    %v4417 = vpop.permute.xlu0 %4416
    %4420 = vset.pattern.permute.xlu0 0
    %4421 = vperm.xlu0 %4420, %v4406
    %v4422 = vpop.permute.xlu0 %4421
    %4425 = vset.pattern.permute.xlu0 0
    %4426 = vperm.xlu0 %4425, %v4408
    %v4427 = vpop.permute.xlu0 %4426
    %v4429 = vmul.f32 %v4247, %v4412
    %v4430 = vmul.f32 %v4248, %v4417
    %v4431 = vmul.f32 %v4249, %v4422
    %v4432 = vmul.f32 %v4250, %v4427
    %v4434 = vrot.slane %v4429, 1
    %4435 = vrot.lane.b32.xlu0 %v4434, 64
    %v4436 = vpop.permute.xlu0 %4435
    %v4438 = vrot.slane %v4429, 2
    %v4440 = vrot.slane %v4429, 3
    %4441 = vrot.lane.b32.xlu0 %v4440, 64
    %v4442 = vpop.permute.xlu0 %4441
    %v4444 = vrot.slane %v4429, 4
    %v4446 = vrot.slane %v4429, 5
    %4447 = vrot.lane.b32.xlu0 %v4446, 64
    %v4448 = vpop.permute.xlu0 %4447
    %v4450 = vrot.slane %v4429, 6
    %v4452 = vrot.slane %v4429, 7
    %4453 = vrot.lane.b32.xlu0 %v4452, 64
    %v4454 = vpop.permute.xlu0 %4453
    %v4457 = vrot.slane %v4430, 1
    %4458 = vrot.lane.b32.xlu0 %v4457, 64
    %v4459 = vpop.permute.xlu0 %4458
    %v4461 = vrot.slane %v4430, 2
    %v4463 = vrot.slane %v4430, 3
    %4464 = vrot.lane.b32.xlu0 %v4463, 64
    %v4465 = vpop.permute.xlu0 %4464
    %v4467 = vrot.slane %v4430, 4
    %v4469 = vrot.slane %v4430, 5
    %4470 = vrot.lane.b32.xlu0 %v4469, 64
    %v4471 = vpop.permute.xlu0 %4470
    %v4473 = vrot.slane %v4430, 6
    %v4475 = vrot.slane %v4430, 7
    %4476 = vrot.lane.b32.xlu0 %v4475, 64
    %v4477 = vpop.permute.xlu0 %4476
    %v4479 = vsel %vm2486, %v4429, %v4436
    %v4480 = vsel %vm2486, %v4438, %v4442
    %v4481 = vsel %vm2486, %v4444, %v4448
    %v4482 = vsel %vm2486, %v4450, %v4454
    %v4483 = vsel %vm2486, %v4430, %v4459
    %v4484 = vsel %vm2486, %v4461, %v4465
    %v4485 = vsel %vm2486, %v4467, %v4471
    %v4486 = vsel %vm2486, %v4473, %v4477
    %v4488 = vrot.slane %v4431, 1
    %4489 = vrot.lane.b32.xlu0 %v4488, 64
    %v4490 = vpop.permute.xlu0 %4489
    %v4492 = vrot.slane %v4431, 2
    %v4494 = vrot.slane %v4431, 3
    %4495 = vrot.lane.b32.xlu0 %v4494, 64
    %v4496 = vpop.permute.xlu0 %4495
    %v4498 = vrot.slane %v4431, 4
    %v4500 = vrot.slane %v4431, 5
    %4501 = vrot.lane.b32.xlu0 %v4500, 64
    %v4502 = vpop.permute.xlu0 %4501
    %v4504 = vrot.slane %v4431, 6
    %v4506 = vrot.slane %v4431, 7
    %4507 = vrot.lane.b32.xlu0 %v4506, 64
    %v4508 = vpop.permute.xlu0 %4507
    %v4511 = vrot.slane %v4432, 1
    %4512 = vrot.lane.b32.xlu0 %v4511, 64
    %v4513 = vpop.permute.xlu0 %4512
    %v4515 = vrot.slane %v4432, 2
    %v4517 = vrot.slane %v4432, 3
    %4518 = vrot.lane.b32.xlu0 %v4517, 64
    %v4519 = vpop.permute.xlu0 %4518
    %v4521 = vrot.slane %v4432, 4
    %v4523 = vrot.slane %v4432, 5
    %4524 = vrot.lane.b32.xlu0 %v4523, 64
    %v4525 = vpop.permute.xlu0 %4524
    %v4527 = vrot.slane %v4432, 6
    %v4529 = vrot.slane %v4432, 7
    %4530 = vrot.lane.b32.xlu0 %v4529, 64
    %v4531 = vpop.permute.xlu0 %4530
    %v4533 = vsel %vm2486, %v4431, %v4490
    %v4534 = vsel %vm2486, %v4492, %v4496
    %v4535 = vsel %vm2486, %v4498, %v4502
    %v4536 = vsel %vm2486, %v4504, %v4508
    %v4537 = vsel %vm2486, %v4432, %v4513
    %v4538 = vsel %vm2486, %v4515, %v4519
    %v4539 = vsel %vm2486, %v4521, %v4525
    %v4540 = vsel %vm2486, %v4527, %v4531
    %v4549 = vrot.slane %v4533, 7
    %v4550 = vrot.slane %v4534, 7
    %v4551 = vrot.slane %v4535, 7
    %v4552 = vrot.slane %v4536, 7
    %v4553 = vrot.slane %v4537, 7
    %v4554 = vrot.slane %v4538, 7
    %v4555 = vrot.slane %v4539, 7
    %v4556 = vrot.slane %v4540, 7
    %v4565 = vsel %vm550, %v4479, %v4549
    %v4566 = vsel %vm550, %v4480, %v4550
    %v4567 = vsel %vm550, %v4481, %v4551
    %v4568 = vsel %vm550, %v4482, %v4552
    %v4569 = vsel %vm550, %v4483, %v4553
    %v4570 = vsel %vm550, %v4484, %v4554
    %v4571 = vsel %vm550, %v4485, %v4555
    %v4572 = vsel %vm550, %v4486, %v4556
    %v4573 = vld [vmem:[#allocation22] sm:$0xff]
    %v4574 = vld [vmem:[#allocation22 + $0x8] sm:$0xff]
    %v4575 = vld [vmem:[#allocation22 + $0x10] sm:$0xff]
    %v4576 = vld [vmem:[#allocation22 + $0x18] sm:$0xff]
    %v4577 = vld [vmem:[#allocation22 + $0x20] sm:$0xff]
    %v4578 = vld [vmem:[#allocation22 + $0x28] sm:$0xff]
    %v4579 = vld [vmem:[#allocation22 + $0x30] sm:$0xff]
    %v4580 = vld [vmem:[#allocation22 + $0x38] sm:$0xff]
    %v4581 = vld [vmem:[#allocation22 + $0x40] sm:$0xff]
    %v4582 = vld [vmem:[#allocation22 + $0x48] sm:$0xff]
    %v4583 = vld [vmem:[#allocation22 + $0x50] sm:$0xff]
    %v4584 = vld [vmem:[#allocation22 + $0x58] sm:$0xff]
    %v4585 = vld [vmem:[#allocation22 + $0x60] sm:$0xff]
    %v4586 = vld [vmem:[#allocation22 + $0x68] sm:$0xff]
    %v4587 = vld [vmem:[#allocation22 + $0x70] sm:$0xff]
    %v4588 = vld [vmem:[#allocation22 + $0x78] sm:$0xff]
    %v4589 = vld [vmem:[#allocation22 + $0x80] sm:$0xff]
    %v4590 = vld [vmem:[#allocation22 + $0x88] sm:$0xff]
    %v4591 = vld [vmem:[#allocation22 + $0x90] sm:$0xff]
    %v4592 = vld [vmem:[#allocation22 + $0x98] sm:$0xff]
    %v4593 = vld [vmem:[#allocation22 + $0xa0] sm:$0xff]
    %v4594 = vld [vmem:[#allocation22 + $0xa8] sm:$0xff]
    %v4595 = vld [vmem:[#allocation22 + $0xb0] sm:$0xff]
    %v4596 = vld [vmem:[#allocation22 + $0xb8] sm:$0xff]
    %v4597 = vld [vmem:[#allocation22 + $0xc0] sm:$0xff]
    %v4598 = vld [vmem:[#allocation22 + $0xc8] sm:$0xff]
    %v4599 = vld [vmem:[#allocation22 + $0xd0] sm:$0xff]
    %v4600 = vld [vmem:[#allocation22 + $0xd8] sm:$0xff]
    %v4601 = vld [vmem:[#allocation22 + $0xe0] sm:$0xff]
    %v4602 = vld [vmem:[#allocation22 + $0xe8] sm:$0xff]
    %v4603 = vld [vmem:[#allocation22 + $0xf0] sm:$0xff]
    %v4604 = vld [vmem:[#allocation22 + $0xf8] sm:$0xff]
    %v4605 = vld [vmem:[#allocation22 + $0x100] sm:$0xff]
    %v4606 = vld [vmem:[#allocation22 + $0x108] sm:$0xff]
    %v4607 = vld [vmem:[#allocation22 + $0x110] sm:$0xff]
    %v4608 = vld [vmem:[#allocation22 + $0x118] sm:$0xff]
    %v4609 = vld [vmem:[#allocation22 + $0x120] sm:$0xff]
    %v4610 = vld [vmem:[#allocation22 + $0x128] sm:$0xff]
    %v4611 = vld [vmem:[#allocation22 + $0x130] sm:$0xff]
    %v4612 = vld [vmem:[#allocation22 + $0x138] sm:$0xff]
    %v4613 = vld [vmem:[#allocation22 + $0x140] sm:$0xff]
    %v4614 = vld [vmem:[#allocation22 + $0x148] sm:$0xff]
    %v4615 = vld [vmem:[#allocation22 + $0x150] sm:$0xff]
    %v4616 = vld [vmem:[#allocation22 + $0x158] sm:$0xff]
    %v4617 = vld [vmem:[#allocation22 + $0x160] sm:$0xff]
    %v4618 = vld [vmem:[#allocation22 + $0x168] sm:$0xff]
    %v4619 = vld [vmem:[#allocation22 + $0x170] sm:$0xff]
    %v4620 = vld [vmem:[#allocation22 + $0x178] sm:$0xff]
    %v4621 = vld [vmem:[#allocation22 + $0x180] sm:$0xff]
    %v4622 = vld [vmem:[#allocation22 + $0x188] sm:$0xff]
    %v4623 = vld [vmem:[#allocation22 + $0x190] sm:$0xff]
    %v4624 = vld [vmem:[#allocation22 + $0x198] sm:$0xff]
    %v4625 = vld [vmem:[#allocation22 + $0x1a0] sm:$0xff]
    %v4626 = vld [vmem:[#allocation22 + $0x1a8] sm:$0xff]
    %v4627 = vld [vmem:[#allocation22 + $0x1b0] sm:$0xff]
    %v4628 = vld [vmem:[#allocation22 + $0x1b8] sm:$0xff]
    %v4629 = vld [vmem:[#allocation22 + $0x1c0] sm:$0xff]
    %v4630 = vld [vmem:[#allocation22 + $0x1c8] sm:$0xff]
    %v4631 = vld [vmem:[#allocation22 + $0x1d0] sm:$0xff]
    %v4632 = vld [vmem:[#allocation22 + $0x1d8] sm:$0xff]
    %v4633 = vld [vmem:[#allocation22 + $0x1e0] sm:$0xff]
    %v4634 = vld [vmem:[#allocation22 + $0x1e8] sm:$0xff]
    %v4635 = vld [vmem:[#allocation22 + $0x1f0] sm:$0xff]
    %v4636 = vld [vmem:[#allocation22 + $0x1f8] sm:$0xff]
    %v4637 = vld [vmem:[#allocation22 + $0x200] sm:$0xff]
    %v4638 = vld [vmem:[#allocation22 + $0x208] sm:$0xff]
    %v4639 = vld [vmem:[#allocation22 + $0x210] sm:$0xff]
    %v4640 = vld [vmem:[#allocation22 + $0x218] sm:$0xff]
    %v4641 = vld [vmem:[#allocation22 + $0x220] sm:$0xff]
    %v4642 = vld [vmem:[#allocation22 + $0x228] sm:$0xff]
    %v4643 = vld [vmem:[#allocation22 + $0x230] sm:$0xff]
    %v4644 = vld [vmem:[#allocation22 + $0x238] sm:$0xff]
    %v4645 = vld [vmem:[#allocation22 + $0x240] sm:$0xff]
    %v4646 = vld [vmem:[#allocation22 + $0x248] sm:$0xff]
    %v4647 = vld [vmem:[#allocation22 + $0x250] sm:$0xff]
    %v4648 = vld [vmem:[#allocation22 + $0x258] sm:$0xff]
    %v4649 = vld [vmem:[#allocation22 + $0x260] sm:$0xff]
    %v4650 = vld [vmem:[#allocation22 + $0x268] sm:$0xff]
    %v4651 = vld [vmem:[#allocation22 + $0x270] sm:$0xff]
    %v4652 = vld [vmem:[#allocation22 + $0x278] sm:$0xff]
    %v4653 = vld [vmem:[#allocation22 + $0x280] sm:$0xff]
    %v4654 = vld [vmem:[#allocation22 + $0x288] sm:$0xff]
    %v4655 = vld [vmem:[#allocation22 + $0x290] sm:$0xff]
    %v4656 = vld [vmem:[#allocation22 + $0x298] sm:$0xff]
    %v4657 = vld [vmem:[#allocation22 + $0x2a0] sm:$0xff]
    %v4658 = vld [vmem:[#allocation22 + $0x2a8] sm:$0xff]
    %v4659 = vld [vmem:[#allocation22 + $0x2b0] sm:$0xff]
    %v4660 = vld [vmem:[#allocation22 + $0x2b8] sm:$0xff]
    %v4661 = vld [vmem:[#allocation22 + $0x2c0] sm:$0xff]
    %v4662 = vld [vmem:[#allocation22 + $0x2c8] sm:$0xff]
    %v4663 = vld [vmem:[#allocation22 + $0x2d0] sm:$0xff]
    %v4664 = vld [vmem:[#allocation22 + $0x2d8] sm:$0xff]
    %v4665 = vld [vmem:[#allocation22 + $0x2e0] sm:$0xff]
    %v4666 = vld [vmem:[#allocation22 + $0x2e8] sm:$0xff]
    %v4667 = vld [vmem:[#allocation22 + $0x2f0] sm:$0xff]
    %v4668 = vld [vmem:[#allocation22 + $0x2f8] sm:$0xff]
    %v4669 = vld [vmem:[#allocation22 + $0x300] sm:$0xff]
    %v4670 = vld [vmem:[#allocation22 + $0x308] sm:$0xff]
    %v4671 = vld [vmem:[#allocation22 + $0x310] sm:$0xff]
    %v4672 = vld [vmem:[#allocation22 + $0x318] sm:$0xff]
    %v4673 = vld [vmem:[#allocation22 + $0x320] sm:$0xff]
    %v4674 = vld [vmem:[#allocation22 + $0x328] sm:$0xff]
    %v4675 = vld [vmem:[#allocation22 + $0x330] sm:$0xff]
    %v4676 = vld [vmem:[#allocation22 + $0x338] sm:$0xff]
    %v4677 = vld [vmem:[#allocation22 + $0x340] sm:$0xff]
    %v4678 = vld [vmem:[#allocation22 + $0x348] sm:$0xff]
    %v4679 = vld [vmem:[#allocation22 + $0x350] sm:$0xff]
    %v4680 = vld [vmem:[#allocation22 + $0x358] sm:$0xff]
    %v4681 = vld [vmem:[#allocation22 + $0x360] sm:$0xff]
    %v4682 = vld [vmem:[#allocation22 + $0x368] sm:$0xff]
    %v4683 = vld [vmem:[#allocation22 + $0x370] sm:$0xff]
    %v4684 = vld [vmem:[#allocation22 + $0x378] sm:$0xff]
    %v4685 = vld [vmem:[#allocation22 + $0x380] sm:$0xff]
    %v4686 = vld [vmem:[#allocation22 + $0x388] sm:$0xff]
    %v4687 = vld [vmem:[#allocation22 + $0x390] sm:$0xff]
    %v4688 = vld [vmem:[#allocation22 + $0x398] sm:$0xff]
    %v4689 = vld [vmem:[#allocation22 + $0x3a0] sm:$0xff]
    %v4690 = vld [vmem:[#allocation22 + $0x3a8] sm:$0xff]
    %v4691 = vld [vmem:[#allocation22 + $0x3b0] sm:$0xff]
    %v4692 = vld [vmem:[#allocation22 + $0x3b8] sm:$0xff]
    %v4693 = vld [vmem:[#allocation22 + $0x3c0] sm:$0xff]
    %v4694 = vld [vmem:[#allocation22 + $0x3c8] sm:$0xff]
    %v4695 = vld [vmem:[#allocation22 + $0x3d0] sm:$0xff]
    %v4696 = vld [vmem:[#allocation22 + $0x3d8] sm:$0xff]
    %v4697 = vld [vmem:[#allocation22 + $0x3e0] sm:$0xff]
    %v4698 = vld [vmem:[#allocation22 + $0x3e8] sm:$0xff]
    %v4699 = vld [vmem:[#allocation22 + $0x3f0] sm:$0xff]
    %v4700 = vld [vmem:[#allocation22 + $0x3f8] sm:$0xff]
    %v4701 = vpack.c.bf16 %v4565, %v4565
    %v4702 = vpack.c.bf16 %v4566, %v4566
    %v4703 = vpack.c.bf16 %v4567, %v4567
    %v4704 = vpack.c.bf16 %v4568, %v4568
    %v4705 = vpack.c.bf16 %v4569, %v4569
    %v4706 = vpack.c.bf16 %v4570, %v4570
    %v4707 = vpack.c.bf16 %v4571, %v4571
    %v4708 = vpack.c.bf16 %v4572, %v4572
    %v4709 = vld [vmem:[#allocation24] sm:$0x3]
    %v4711 = vlaneseq
    %v4712 = vshrl.u32 %v4711, 7
    %v4713 = vsub.s32 0, %v4712
    %v4714 = vrot.slane %v4709, %v4713
    %v4715 = vlaneseq
    %v4716 = vshrl.u32 %v4715, 7
    %v4717 = vsub.s32 1, %v4716
    %v4718 = vrot.slane %v4709, %v4717
    %v4849 = vunpack.c.l.b16 %v4573
    %v4850 = vunpack.c.h.b16 %v4573
    %v4851 = vunpack.c.l.b16 %v4574
    %v4852 = vunpack.c.h.b16 %v4574
    %v4853 = vunpack.c.l.b16 %v4575
    %v4854 = vunpack.c.h.b16 %v4575
    %v4855 = vunpack.c.l.b16 %v4576
    %v4856 = vunpack.c.h.b16 %v4576
    %v4857 = vunpack.c.l.b16 %v4577
    %v4858 = vunpack.c.h.b16 %v4577
    %v4859 = vunpack.c.l.b16 %v4578
    %v4860 = vunpack.c.h.b16 %v4578
    %v4861 = vunpack.c.l.b16 %v4579
    %v4862 = vunpack.c.h.b16 %v4579
    %v4863 = vunpack.c.l.b16 %v4580
    %v4864 = vunpack.c.h.b16 %v4580
    %v4865 = vunpack.c.l.b16 %v4581
    %v4866 = vunpack.c.h.b16 %v4581
    %v4867 = vunpack.c.l.b16 %v4582
    %v4868 = vunpack.c.h.b16 %v4582
    %v4869 = vunpack.c.l.b16 %v4583
    %v4870 = vunpack.c.h.b16 %v4583
    %v4871 = vunpack.c.l.b16 %v4584
    %v4872 = vunpack.c.h.b16 %v4584
    %v4873 = vunpack.c.l.b16 %v4585
    %v4874 = vunpack.c.h.b16 %v4585
    %v4875 = vunpack.c.l.b16 %v4586
    %v4876 = vunpack.c.h.b16 %v4586
    %v4877 = vunpack.c.l.b16 %v4587
    %v4878 = vunpack.c.h.b16 %v4587
    %v4879 = vunpack.c.l.b16 %v4588
    %v4880 = vunpack.c.h.b16 %v4588
    %v4881 = vunpack.c.l.b16 %v4589
    %v4882 = vunpack.c.h.b16 %v4589
    %v4883 = vunpack.c.l.b16 %v4590
    %v4884 = vunpack.c.h.b16 %v4590
    %v4885 = vunpack.c.l.b16 %v4591
    %v4886 = vunpack.c.h.b16 %v4591
    %v4887 = vunpack.c.l.b16 %v4592
    %v4888 = vunpack.c.h.b16 %v4592
    %v4889 = vunpack.c.l.b16 %v4593
    %v4890 = vunpack.c.h.b16 %v4593
    %v4891 = vunpack.c.l.b16 %v4594
    %v4892 = vunpack.c.h.b16 %v4594
    %v4893 = vunpack.c.l.b16 %v4595
    %v4894 = vunpack.c.h.b16 %v4595
    %v4895 = vunpack.c.l.b16 %v4596
    %v4896 = vunpack.c.h.b16 %v4596
    %v4897 = vunpack.c.l.b16 %v4597
    %v4898 = vunpack.c.h.b16 %v4597
    %v4899 = vunpack.c.l.b16 %v4598
    %v4900 = vunpack.c.h.b16 %v4598
    %v4901 = vunpack.c.l.b16 %v4599
    %v4902 = vunpack.c.h.b16 %v4599
    %v4903 = vunpack.c.l.b16 %v4600
    %v4904 = vunpack.c.h.b16 %v4600
    %v4905 = vunpack.c.l.b16 %v4601
    %v4906 = vunpack.c.h.b16 %v4601
    %v4907 = vunpack.c.l.b16 %v4602
    %v4908 = vunpack.c.h.b16 %v4602
    %v4909 = vunpack.c.l.b16 %v4603
    %v4910 = vunpack.c.h.b16 %v4603
    %v4911 = vunpack.c.l.b16 %v4604
    %v4912 = vunpack.c.h.b16 %v4604
    %v4913 = vunpack.c.l.b16 %v4605
    %v4914 = vunpack.c.h.b16 %v4605
    %v4915 = vunpack.c.l.b16 %v4606
    %v4916 = vunpack.c.h.b16 %v4606
    %v4917 = vunpack.c.l.b16 %v4607
    %v4918 = vunpack.c.h.b16 %v4607
    %v4919 = vunpack.c.l.b16 %v4608
    %v4920 = vunpack.c.h.b16 %v4608
    %v4921 = vunpack.c.l.b16 %v4609
    %v4922 = vunpack.c.h.b16 %v4609
    %v4923 = vunpack.c.l.b16 %v4610
    %v4924 = vunpack.c.h.b16 %v4610
    %v4925 = vunpack.c.l.b16 %v4611
    %v4926 = vunpack.c.h.b16 %v4611
    %v4927 = vunpack.c.l.b16 %v4612
    %v4928 = vunpack.c.h.b16 %v4612
    %v4929 = vunpack.c.l.b16 %v4613
    %v4930 = vunpack.c.h.b16 %v4613
    %v4931 = vunpack.c.l.b16 %v4614
    %v4932 = vunpack.c.h.b16 %v4614
    %v4933 = vunpack.c.l.b16 %v4615
    %v4934 = vunpack.c.h.b16 %v4615
    %v4935 = vunpack.c.l.b16 %v4616
    %v4936 = vunpack.c.h.b16 %v4616
    %v4937 = vunpack.c.l.b16 %v4617
    %v4938 = vunpack.c.h.b16 %v4617
    %v4939 = vunpack.c.l.b16 %v4618
    %v4940 = vunpack.c.h.b16 %v4618
    %v4941 = vunpack.c.l.b16 %v4619
    %v4942 = vunpack.c.h.b16 %v4619
    %v4943 = vunpack.c.l.b16 %v4620
    %v4944 = vunpack.c.h.b16 %v4620
    %v4945 = vunpack.c.l.b16 %v4621
    %v4946 = vunpack.c.h.b16 %v4621
    %v4947 = vunpack.c.l.b16 %v4622
    %v4948 = vunpack.c.h.b16 %v4622
    %v4949 = vunpack.c.l.b16 %v4623
    %v4950 = vunpack.c.h.b16 %v4623
    %v4951 = vunpack.c.l.b16 %v4624
    %v4952 = vunpack.c.h.b16 %v4624
    %v4953 = vunpack.c.l.b16 %v4625
    %v4954 = vunpack.c.h.b16 %v4625
    %v4955 = vunpack.c.l.b16 %v4626
    %v4956 = vunpack.c.h.b16 %v4626
    %v4957 = vunpack.c.l.b16 %v4627
    %v4958 = vunpack.c.h.b16 %v4627
    %v4959 = vunpack.c.l.b16 %v4628
    %v4960 = vunpack.c.h.b16 %v4628
    %v4961 = vunpack.c.l.b16 %v4629
    %v4962 = vunpack.c.h.b16 %v4629
    %v4963 = vunpack.c.l.b16 %v4630
    %v4964 = vunpack.c.h.b16 %v4630
    %v4965 = vunpack.c.l.b16 %v4631
    %v4966 = vunpack.c.h.b16 %v4631
    %v4967 = vunpack.c.l.b16 %v4632
    %v4968 = vunpack.c.h.b16 %v4632
    %v4969 = vunpack.c.l.b16 %v4633
    %v4970 = vunpack.c.h.b16 %v4633
    %v4971 = vunpack.c.l.b16 %v4634
    %v4972 = vunpack.c.h.b16 %v4634
    %v4973 = vunpack.c.l.b16 %v4635
    %v4974 = vunpack.c.h.b16 %v4635
    %v4975 = vunpack.c.l.b16 %v4636
    %v4976 = vunpack.c.h.b16 %v4636
    %v4977 = vunpack.c.l.b16 %v4637
    %v4978 = vunpack.c.h.b16 %v4637
    %v4979 = vunpack.c.l.b16 %v4638
    %v4980 = vunpack.c.h.b16 %v4638
    %v4981 = vunpack.c.l.b16 %v4639
    %v4982 = vunpack.c.h.b16 %v4639
    %v4983 = vunpack.c.l.b16 %v4640
    %v4984 = vunpack.c.h.b16 %v4640
    %v4985 = vunpack.c.l.b16 %v4641
    %v4986 = vunpack.c.h.b16 %v4641
    %v4987 = vunpack.c.l.b16 %v4642
    %v4988 = vunpack.c.h.b16 %v4642
    %v4989 = vunpack.c.l.b16 %v4643
    %v4990 = vunpack.c.h.b16 %v4643
    %v4991 = vunpack.c.l.b16 %v4644
    %v4992 = vunpack.c.h.b16 %v4644
    %v4993 = vunpack.c.l.b16 %v4645
    %v4994 = vunpack.c.h.b16 %v4645
    %v4995 = vunpack.c.l.b16 %v4646
    %v4996 = vunpack.c.h.b16 %v4646
    %v4997 = vunpack.c.l.b16 %v4647
    %v4998 = vunpack.c.h.b16 %v4647
    %v4999 = vunpack.c.l.b16 %v4648
    %v5000 = vunpack.c.h.b16 %v4648
    %v5001 = vunpack.c.l.b16 %v4649
    %v5002 = vunpack.c.h.b16 %v4649
    %v5003 = vunpack.c.l.b16 %v4650
    %v5004 = vunpack.c.h.b16 %v4650
    %v5005 = vunpack.c.l.b16 %v4651
    %v5006 = vunpack.c.h.b16 %v4651
    %v5007 = vunpack.c.l.b16 %v4652
    %v5008 = vunpack.c.h.b16 %v4652
    %v5009 = vunpack.c.l.b16 %v4653
    %v5010 = vunpack.c.h.b16 %v4653
    %v5011 = vunpack.c.l.b16 %v4654
    %v5012 = vunpack.c.h.b16 %v4654
    %v5013 = vunpack.c.l.b16 %v4655
    %v5014 = vunpack.c.h.b16 %v4655
    %v5015 = vunpack.c.l.b16 %v4656
    %v5016 = vunpack.c.h.b16 %v4656
    %v5017 = vunpack.c.l.b16 %v4657
    %v5018 = vunpack.c.h.b16 %v4657
    %v5019 = vunpack.c.l.b16 %v4658
    %v5020 = vunpack.c.h.b16 %v4658
    %v5021 = vunpack.c.l.b16 %v4659
    %v5022 = vunpack.c.h.b16 %v4659
    %v5023 = vunpack.c.l.b16 %v4660
    %v5024 = vunpack.c.h.b16 %v4660
    %v5025 = vunpack.c.l.b16 %v4661
    %v5026 = vunpack.c.h.b16 %v4661
    %v5027 = vunpack.c.l.b16 %v4662
    %v5028 = vunpack.c.h.b16 %v4662
    %v5029 = vunpack.c.l.b16 %v4663
    %v5030 = vunpack.c.h.b16 %v4663
    %v5031 = vunpack.c.l.b16 %v4664
    %v5032 = vunpack.c.h.b16 %v4664
    %v5033 = vunpack.c.l.b16 %v4665
    %v5034 = vunpack.c.h.b16 %v4665
    %v5035 = vunpack.c.l.b16 %v4666
    %v5036 = vunpack.c.h.b16 %v4666
    %v5037 = vunpack.c.l.b16 %v4667
    %v5038 = vunpack.c.h.b16 %v4667
    %v5039 = vunpack.c.l.b16 %v4668
    %v5040 = vunpack.c.h.b16 %v4668
    %v5041 = vunpack.c.l.b16 %v4669
    %v5042 = vunpack.c.h.b16 %v4669
    %v5043 = vunpack.c.l.b16 %v4670
    %v5044 = vunpack.c.h.b16 %v4670
    %v5045 = vunpack.c.l.b16 %v4671
    %v5046 = vunpack.c.h.b16 %v4671
    %v5047 = vunpack.c.l.b16 %v4672
    %v5048 = vunpack.c.h.b16 %v4672
    %v5049 = vunpack.c.l.b16 %v4673
    %v5050 = vunpack.c.h.b16 %v4673
    %v5051 = vunpack.c.l.b16 %v4674
    %v5052 = vunpack.c.h.b16 %v4674
    %v5053 = vunpack.c.l.b16 %v4675
    %v5054 = vunpack.c.h.b16 %v4675
    %v5055 = vunpack.c.l.b16 %v4676
    %v5056 = vunpack.c.h.b16 %v4676
    %v5057 = vunpack.c.l.b16 %v4677
    %v5058 = vunpack.c.h.b16 %v4677
    %v5059 = vunpack.c.l.b16 %v4678
    %v5060 = vunpack.c.h.b16 %v4678
    %v5061 = vunpack.c.l.b16 %v4679
    %v5062 = vunpack.c.h.b16 %v4679
    %v5063 = vunpack.c.l.b16 %v4680
    %v5064 = vunpack.c.h.b16 %v4680
    %v5065 = vunpack.c.l.b16 %v4681
    %v5066 = vunpack.c.h.b16 %v4681
    %v5067 = vunpack.c.l.b16 %v4682
    %v5068 = vunpack.c.h.b16 %v4682
    %v5069 = vunpack.c.l.b16 %v4683
    %v5070 = vunpack.c.h.b16 %v4683
    %v5071 = vunpack.c.l.b16 %v4684
    %v5072 = vunpack.c.h.b16 %v4684
    %v5073 = vunpack.c.l.b16 %v4685
    %v5074 = vunpack.c.h.b16 %v4685
    %v5075 = vunpack.c.l.b16 %v4686
    %v5076 = vunpack.c.h.b16 %v4686
    %v5077 = vunpack.c.l.b16 %v4687
    %v5078 = vunpack.c.h.b16 %v4687
    %v5079 = vunpack.c.l.b16 %v4688
    %v5080 = vunpack.c.h.b16 %v4688
    %v5081 = vunpack.c.l.b16 %v4689
    %v5082 = vunpack.c.h.b16 %v4689
    %v5083 = vunpack.c.l.b16 %v4690
    %v5084 = vunpack.c.h.b16 %v4690
    %v5085 = vunpack.c.l.b16 %v4691
    %v5086 = vunpack.c.h.b16 %v4691
    %v5087 = vunpack.c.l.b16 %v4692
    %v5088 = vunpack.c.h.b16 %v4692
    %v5089 = vunpack.c.l.b16 %v4693
    %v5090 = vunpack.c.h.b16 %v4693
    %v5091 = vunpack.c.l.b16 %v4694
    %v5092 = vunpack.c.h.b16 %v4694
    %v5093 = vunpack.c.l.b16 %v4695
    %v5094 = vunpack.c.h.b16 %v4695
    %v5095 = vunpack.c.l.b16 %v4696
    %v5096 = vunpack.c.h.b16 %v4696
    %v5097 = vunpack.c.l.b16 %v4697
    %v5098 = vunpack.c.h.b16 %v4697
    %v5099 = vunpack.c.l.b16 %v4698
    %v5100 = vunpack.c.h.b16 %v4698
    %v5101 = vunpack.c.l.b16 %v4699
    %v5102 = vunpack.c.h.b16 %v4699
    %v5103 = vunpack.c.l.b16 %v4700
    %v5104 = vunpack.c.h.b16 %v4700
    %v5105 = vpack.c.b16 %v4851, %v4849
    %v5106 = vpack.c.b16 %v4852, %v4850
    %v5107 = vpack.c.b16 %v4855, %v4853
    %v5108 = vpack.c.b16 %v4856, %v4854
    %v5109 = vpack.c.b16 %v4859, %v4857
    %v5110 = vpack.c.b16 %v4860, %v4858
    %v5111 = vpack.c.b16 %v4863, %v4861
    %v5112 = vpack.c.b16 %v4864, %v4862
    %v5113 = vpack.c.b16 %v4867, %v4865
    %v5114 = vpack.c.b16 %v4868, %v4866
    %v5115 = vpack.c.b16 %v4871, %v4869
    %v5116 = vpack.c.b16 %v4872, %v4870
    %v5117 = vpack.c.b16 %v4875, %v4873
    %v5118 = vpack.c.b16 %v4876, %v4874
    %v5119 = vpack.c.b16 %v4879, %v4877
    %v5120 = vpack.c.b16 %v4880, %v4878
    %v5121 = vpack.c.b16 %v4883, %v4881
    %v5122 = vpack.c.b16 %v4884, %v4882
    %v5123 = vpack.c.b16 %v4887, %v4885
    %v5124 = vpack.c.b16 %v4888, %v4886
    %v5125 = vpack.c.b16 %v4891, %v4889
    %v5126 = vpack.c.b16 %v4892, %v4890
    %v5127 = vpack.c.b16 %v4895, %v4893
    %v5128 = vpack.c.b16 %v4896, %v4894
    %v5129 = vpack.c.b16 %v4899, %v4897
    %v5130 = vpack.c.b16 %v4900, %v4898
    %v5131 = vpack.c.b16 %v4903, %v4901
    %v5132 = vpack.c.b16 %v4904, %v4902
    %v5133 = vpack.c.b16 %v4907, %v4905
    %v5134 = vpack.c.b16 %v4908, %v4906
    %v5135 = vpack.c.b16 %v4911, %v4909
    %v5136 = vpack.c.b16 %v4912, %v4910
    %v5137 = vpack.c.b16 %v4915, %v4913
    %v5138 = vpack.c.b16 %v4916, %v4914
    %v5139 = vpack.c.b16 %v4919, %v4917
    %v5140 = vpack.c.b16 %v4920, %v4918
    %v5141 = vpack.c.b16 %v4923, %v4921
    %v5142 = vpack.c.b16 %v4924, %v4922
    %v5143 = vpack.c.b16 %v4927, %v4925
    %v5144 = vpack.c.b16 %v4928, %v4926
    %v5145 = vpack.c.b16 %v4931, %v4929
    %v5146 = vpack.c.b16 %v4932, %v4930
    %v5147 = vpack.c.b16 %v4935, %v4933
    %v5148 = vpack.c.b16 %v4936, %v4934
    %v5149 = vpack.c.b16 %v4939, %v4937
    %v5150 = vpack.c.b16 %v4940, %v4938
    %v5151 = vpack.c.b16 %v4943, %v4941
    %v5152 = vpack.c.b16 %v4944, %v4942
    %v5153 = vpack.c.b16 %v4947, %v4945
    %v5154 = vpack.c.b16 %v4948, %v4946
    %v5155 = vpack.c.b16 %v4951, %v4949
    %v5156 = vpack.c.b16 %v4952, %v4950
    %v5157 = vpack.c.b16 %v4955, %v4953
    %v5158 = vpack.c.b16 %v4956, %v4954
    %v5159 = vpack.c.b16 %v4959, %v4957
    %v5160 = vpack.c.b16 %v4960, %v4958
    %v5161 = vpack.c.b16 %v4963, %v4961
    %v5162 = vpack.c.b16 %v4964, %v4962
    %v5163 = vpack.c.b16 %v4967, %v4965
    %v5164 = vpack.c.b16 %v4968, %v4966
    %v5165 = vpack.c.b16 %v4971, %v4969
    %v5166 = vpack.c.b16 %v4972, %v4970
    %v5167 = vpack.c.b16 %v4975, %v4973
    %v5168 = vpack.c.b16 %v4976, %v4974
    %v5169 = vpack.c.b16 %v4979, %v4977
    %v5170 = vpack.c.b16 %v4980, %v4978
    %v5171 = vpack.c.b16 %v4983, %v4981
    %v5172 = vpack.c.b16 %v4984, %v4982
    %v5173 = vpack.c.b16 %v4987, %v4985
    %v5174 = vpack.c.b16 %v4988, %v4986
    %v5175 = vpack.c.b16 %v4991, %v4989
    %v5176 = vpack.c.b16 %v4992, %v4990
    %v5177 = vpack.c.b16 %v4995, %v4993
    %v5178 = vpack.c.b16 %v4996, %v4994
    %v5179 = vpack.c.b16 %v4999, %v4997
    %v5180 = vpack.c.b16 %v5000, %v4998
    %v5181 = vpack.c.b16 %v5003, %v5001
    %v5182 = vpack.c.b16 %v5004, %v5002
    %v5183 = vpack.c.b16 %v5007, %v5005
    %v5184 = vpack.c.b16 %v5008, %v5006
    %v5185 = vpack.c.b16 %v5011, %v5009
    %v5186 = vpack.c.b16 %v5012, %v5010
    %v5187 = vpack.c.b16 %v5015, %v5013
    %v5188 = vpack.c.b16 %v5016, %v5014
    %v5189 = vpack.c.b16 %v5019, %v5017
    %v5190 = vpack.c.b16 %v5020, %v5018
    %v5191 = vpack.c.b16 %v5023, %v5021
    %v5192 = vpack.c.b16 %v5024, %v5022
    %v5193 = vpack.c.b16 %v5027, %v5025
    %v5194 = vpack.c.b16 %v5028, %v5026
    %v5195 = vpack.c.b16 %v5031, %v5029
    %v5196 = vpack.c.b16 %v5032, %v5030
    %v5197 = vpack.c.b16 %v5035, %v5033
    %v5198 = vpack.c.b16 %v5036, %v5034
    %v5199 = vpack.c.b16 %v5039, %v5037
    %v5200 = vpack.c.b16 %v5040, %v5038
    %v5201 = vpack.c.b16 %v5043, %v5041
    %v5202 = vpack.c.b16 %v5044, %v5042
    %v5203 = vpack.c.b16 %v5047, %v5045
    %v5204 = vpack.c.b16 %v5048, %v5046
    %v5205 = vpack.c.b16 %v5051, %v5049
    %v5206 = vpack.c.b16 %v5052, %v5050
    %v5207 = vpack.c.b16 %v5055, %v5053
    %v5208 = vpack.c.b16 %v5056, %v5054
    %v5209 = vpack.c.b16 %v5059, %v5057
    %v5210 = vpack.c.b16 %v5060, %v5058
    %v5211 = vpack.c.b16 %v5063, %v5061
    %v5212 = vpack.c.b16 %v5064, %v5062
    %v5213 = vpack.c.b16 %v5067, %v5065
    %v5214 = vpack.c.b16 %v5068, %v5066
    %v5215 = vpack.c.b16 %v5071, %v5069
    %v5216 = vpack.c.b16 %v5072, %v5070
    %v5217 = vpack.c.b16 %v5075, %v5073
    %v5218 = vpack.c.b16 %v5076, %v5074
    %v5219 = vpack.c.b16 %v5079, %v5077
    %v5220 = vpack.c.b16 %v5080, %v5078
    %v5221 = vpack.c.b16 %v5083, %v5081
    %v5222 = vpack.c.b16 %v5084, %v5082
    %v5223 = vpack.c.b16 %v5087, %v5085
    %v5224 = vpack.c.b16 %v5088, %v5086
    %v5225 = vpack.c.b16 %v5091, %v5089
    %v5226 = vpack.c.b16 %v5092, %v5090
    %v5227 = vpack.c.b16 %v5095, %v5093
    %v5228 = vpack.c.b16 %v5096, %v5094
    %v5229 = vpack.c.b16 %v5099, %v5097
    %v5230 = vpack.c.b16 %v5100, %v5098
    %v5231 = vpack.c.b16 %v5103, %v5101
    %v5232 = vpack.c.b16 %v5104, %v5102
    %5361 = vmatprep.subr.bf16.mxu0 %v5120
    %5362 = vmatpush1.bf16.msra.mxu0 %v5119
    %5363 = vmatprep.subr.bf16.mxu0 %v5118
    %5364 = vmatpush1.bf16.msra.mxu0 %v5117
    %5365 = vmatprep.subr.bf16.mxu0 %v5116
    %5366 = vmatpush1.bf16.msra.mxu0 %v5115
    %5367 = vmatprep.subr.bf16.mxu0 %v5114
    %5368 = vmatpush1.bf16.msra.mxu0 %v5113
    %5369 = vmatprep.subr.bf16.mxu0 %v5112
    %5370 = vmatpush1.bf16.msra.mxu0 %v5111
    %5371 = vmatprep.subr.bf16.mxu0 %v5110
    %5372 = vmatpush1.bf16.msra.mxu0 %v5109
    %5373 = vmatprep.subr.bf16.mxu0 %v5108
    %5374 = vmatpush1.bf16.msra.mxu0 %v5107
    %5375 = vmatprep.subr.bf16.mxu0 %v5106
    %5376 = vmatpush1.bf16.msra.mxu0 %v5105
    %5377 = vmatprep.subr.bf16.mxu0 %v5136
    %5378 = vmatpush2.bf16.msra.mxu0 %v5135
    %5379 = vmatprep.subr.bf16.mxu0 %v5134
    %5380 = vmatpush2.bf16.msra.mxu0 %v5133
    %5381 = vmatprep.subr.bf16.mxu0 %v5132
    %5382 = vmatpush2.bf16.msra.mxu0 %v5131
    %5383 = vmatprep.subr.bf16.mxu0 %v5130
    %5384 = vmatpush2.bf16.msra.mxu0 %v5129
    %5385 = vmatprep.subr.bf16.mxu0 %v5128
    %5386 = vmatpush2.bf16.msra.mxu0 %v5127
    %5387 = vmatprep.subr.bf16.mxu0 %v5126
    %5388 = vmatpush2.bf16.msra.mxu0 %v5125
    %5389 = vmatprep.subr.bf16.mxu0 %v5124
    %5390 = vmatpush2.bf16.msra.mxu0 %v5123
    %5391 = vmatprep.subr.bf16.mxu0 %v5122
    %5392 = vmatpush2.bf16.msra.mxu0 %v5121
    %5393 = vmatprep.mubr.bf16.mxu0 %v4702
    %5394 = vmatmul.mubr.bf16.gmra.mxu0 %v4701
    %v5395 = vpop.f32.mrf.mxu0
    %v5396 = vadd.f32 %v4714, %v5395
    %v5397 = vpop.f32.mrf.mxu0
    %v5398 = vadd.f32 %v4718, %v5397
    %v5399 = vpop.f32.mrf.mxu0
    %v5400 = vpop.f32.mrf.mxu0
    %5401 = vdwg.mxu0
    %5402 = vmatprep.subr.bf16.mxu0 %v5152
    %5403 = vmatpush1.bf16.msra.mxu0 %v5151
    %5404 = vmatprep.subr.bf16.mxu0 %v5150
    %5405 = vmatpush1.bf16.msra.mxu0 %v5149
    %5406 = vmatprep.subr.bf16.mxu0 %v5148
    %5407 = vmatpush1.bf16.msra.mxu0 %v5147
    %5408 = vmatprep.subr.bf16.mxu0 %v5146
    %5409 = vmatpush1.bf16.msra.mxu0 %v5145
    %5410 = vmatprep.subr.bf16.mxu0 %v5144
    %5411 = vmatpush1.bf16.msra.mxu0 %v5143
    %5412 = vmatprep.subr.bf16.mxu0 %v5142
    %5413 = vmatpush1.bf16.msra.mxu0 %v5141
    %5414 = vmatprep.subr.bf16.mxu0 %v5140
    %5415 = vmatpush1.bf16.msra.mxu0 %v5139
    %5416 = vmatprep.subr.bf16.mxu0 %v5138
    %5417 = vmatpush1.bf16.msra.mxu0 %v5137
    %5418 = vmatprep.subr.bf16.mxu0 %v5168
    %5419 = vmatpush2.bf16.msra.mxu0 %v5167
    %5420 = vmatprep.subr.bf16.mxu0 %v5166
    %5421 = vmatpush2.bf16.msra.mxu0 %v5165
    %5422 = vmatprep.subr.bf16.mxu0 %v5164
    %5423 = vmatpush2.bf16.msra.mxu0 %v5163
    %5424 = vmatprep.subr.bf16.mxu0 %v5162
    %5425 = vmatpush2.bf16.msra.mxu0 %v5161
    %5426 = vmatprep.subr.bf16.mxu0 %v5160
    %5427 = vmatpush2.bf16.msra.mxu0 %v5159
    %5428 = vmatprep.subr.bf16.mxu0 %v5158
    %5429 = vmatpush2.bf16.msra.mxu0 %v5157
    %5430 = vmatprep.subr.bf16.mxu0 %v5156
    %5431 = vmatpush2.bf16.msra.mxu0 %v5155
    %5432 = vmatprep.subr.bf16.mxu0 %v5154
    %5433 = vmatpush2.bf16.msra.mxu0 %v5153
    %5434 = vmatprep.mubr.bf16.mxu0 %v4704
    %5435 = vmatmul.mubr.bf16.gmra.mxu0 %v4703
    %v5436 = vpop.f32.mrf.mxu0
    %v5437 = vadd.f32 %v5396, %v5436
    %v5438 = vpop.f32.mrf.mxu0
    %v5439 = vadd.f32 %v5398, %v5438
    %v5440 = vpop.f32.mrf.mxu0
    %v5441 = vpop.f32.mrf.mxu0
    %5442 = vdwg.mxu0
    %5443 = vmatprep.subr.bf16.mxu0 %v5184
    %5444 = vmatpush1.bf16.msra.mxu0 %v5183
    %5445 = vmatprep.subr.bf16.mxu0 %v5182
    %5446 = vmatpush1.bf16.msra.mxu0 %v5181
    %5447 = vmatprep.subr.bf16.mxu0 %v5180
    %5448 = vmatpush1.bf16.msra.mxu0 %v5179
    %5449 = vmatprep.subr.bf16.mxu0 %v5178
    %5450 = vmatpush1.bf16.msra.mxu0 %v5177
    %5451 = vmatprep.subr.bf16.mxu0 %v5176
    %5452 = vmatpush1.bf16.msra.mxu0 %v5175
    %5453 = vmatprep.subr.bf16.mxu0 %v5174
    %5454 = vmatpush1.bf16.msra.mxu0 %v5173
    %5455 = vmatprep.subr.bf16.mxu0 %v5172
    %5456 = vmatpush1.bf16.msra.mxu0 %v5171
    %5457 = vmatprep.subr.bf16.mxu0 %v5170
    %5458 = vmatpush1.bf16.msra.mxu0 %v5169
    %5459 = vmatprep.subr.bf16.mxu0 %v5200
    %5460 = vmatpush2.bf16.msra.mxu0 %v5199
    %5461 = vmatprep.subr.bf16.mxu0 %v5198
    %5462 = vmatpush2.bf16.msra.mxu0 %v5197
    %5463 = vmatprep.subr.bf16.mxu0 %v5196
    %5464 = vmatpush2.bf16.msra.mxu0 %v5195
    %5465 = vmatprep.subr.bf16.mxu0 %v5194
    %5466 = vmatpush2.bf16.msra.mxu0 %v5193
    %5467 = vmatprep.subr.bf16.mxu0 %v5192
    %5468 = vmatpush2.bf16.msra.mxu0 %v5191
    %5469 = vmatprep.subr.bf16.mxu0 %v5190
    %5470 = vmatpush2.bf16.msra.mxu0 %v5189
    %5471 = vmatprep.subr.bf16.mxu0 %v5188
    %5472 = vmatpush2.bf16.msra.mxu0 %v5187
    %5473 = vmatprep.subr.bf16.mxu0 %v5186
    %5474 = vmatpush2.bf16.msra.mxu0 %v5185
    %5475 = vmatprep.mubr.bf16.mxu0 %v4706
    %5476 = vmatmul.mubr.bf16.gmra.mxu0 %v4705
    %v5477 = vpop.f32.mrf.mxu0
    %v5478 = vadd.f32 %v5437, %v5477
    %v5479 = vpop.f32.mrf.mxu0
    %v5480 = vadd.f32 %v5439, %v5479
    %v5481 = vpop.f32.mrf.mxu0
    %v5482 = vpop.f32.mrf.mxu0
    %5483 = vdwg.mxu0
    %5484 = vmatprep.subr.bf16.mxu0 %v5216
    %5485 = vmatpush1.bf16.msra.mxu0 %v5215
    %5486 = vmatprep.subr.bf16.mxu0 %v5214
    %5487 = vmatpush1.bf16.msra.mxu0 %v5213
    %5488 = vmatprep.subr.bf16.mxu0 %v5212
    %5489 = vmatpush1.bf16.msra.mxu0 %v5211
    %5490 = vmatprep.subr.bf16.mxu0 %v5210
    %5491 = vmatpush1.bf16.msra.mxu0 %v5209
    %5492 = vmatprep.subr.bf16.mxu0 %v5208
    %5493 = vmatpush1.bf16.msra.mxu0 %v5207
    %5494 = vmatprep.subr.bf16.mxu0 %v5206
    %5495 = vmatpush1.bf16.msra.mxu0 %v5205
    %5496 = vmatprep.subr.bf16.mxu0 %v5204
    %5497 = vmatpush1.bf16.msra.mxu0 %v5203
    %5498 = vmatprep.subr.bf16.mxu0 %v5202
    %5499 = vmatpush1.bf16.msra.mxu0 %v5201
    %5500 = vmatprep.subr.bf16.mxu0 %v5232
    %5501 = vmatpush2.bf16.msra.mxu0 %v5231
    %5502 = vmatprep.subr.bf16.mxu0 %v5230
    %5503 = vmatpush2.bf16.msra.mxu0 %v5229
    %5504 = vmatprep.subr.bf16.mxu0 %v5228
    %5505 = vmatpush2.bf16.msra.mxu0 %v5227
    %5506 = vmatprep.subr.bf16.mxu0 %v5226
    %5507 = vmatpush2.bf16.msra.mxu0 %v5225
    %5508 = vmatprep.subr.bf16.mxu0 %v5224
    %5509 = vmatpush2.bf16.msra.mxu0 %v5223
    %5510 = vmatprep.subr.bf16.mxu0 %v5222
    %5511 = vmatpush2.bf16.msra.mxu0 %v5221
    %5512 = vmatprep.subr.bf16.mxu0 %v5220
    %5513 = vmatpush2.bf16.msra.mxu0 %v5219
    %5514 = vmatprep.subr.bf16.mxu0 %v5218
    %5515 = vmatpush2.bf16.msra.mxu0 %v5217
    %5516 = vmatprep.mubr.bf16.mxu0 %v4708
    %5517 = vmatmul.mubr.bf16.gmra.mxu0 %v4707
    %v5518 = vpop.f32.mrf.mxu0
    %v5519 = vadd.f32 %v5478, %v5518
    %v5520 = vpop.f32.mrf.mxu0
    %v5521 = vadd.f32 %v5480, %v5520
    %v5522 = vpop.f32.mrf.mxu0
    %v5523 = vpop.f32.mrf.mxu0
    %5524 = vdwg.mxu0
    %v5525 = vxor.u32 %v5519, 2147483648
    %v5526 = vmul.f32 %v5525, 1.442695
    %v5527 = vpow.pop %v5526
    %v5528 = vadd.f32 %v5527, 1.0
    %v5529 = vrcp.pop %v5528
    %v5530 = vmul.f32 1.0, %v5529
    %v5531 = vtanh.pop %v5519
    %v5532 = vxor.u32 %v5521, 2147483648
    %v5533 = vmul.f32 %v5532, 1.442695
    %v5534 = vpow.pop %v5533
    %v5535 = vadd.f32 %v5534, 1.0
    %v5536 = vrcp.pop %v5535
    %v5537 = vmul.f32 1.0, %v5536
    %5539 = vrot.lane.b32.xlu0 %v5531, 64
    %v5540 = vpop.permute.xlu0 %5539
    %v5542 = vmul.f32 %v5530, %v5540
    %v5543 = vtanh.pop %v5542
    %v5544 = vmul.f32 %v5537, %v5543
    %v5545 = vld [vmem:[#allocation25] sm:$0xff]
    %v5546 = vld [vmem:[#allocation25 + $0x8] sm:$0xff]
    %v5547 = vld [vmem:[#allocation25 + $0x10] sm:$0xff]
    %v5548 = vld [vmem:[#allocation25 + $0x18] sm:$0xff]
    %v5549 = vld [vmem:[#allocation25 + $0x20] sm:$0xff]
    %v5550 = vld [vmem:[#allocation25 + $0x28] sm:$0xff]
    %v5551 = vld [vmem:[#allocation25 + $0x30] sm:$0xff]
    %v5552 = vld [vmem:[#allocation25 + $0x38] sm:$0xff]
    %v5553 = vpack.c.bf16 %v5544, %v5544
    %v5554 = vld [vmem:[#allocation27] sm:$0x3]
    %v5556 = vlaneseq
    %v5557 = vshrl.u32 %v5556, 7
    %v5558 = vsub.s32 0, %v5557
    %v5559 = vrot.slane %v5554, %v5558
    %v5560 = vlaneseq
    %v5561 = vshrl.u32 %v5560, 7
    %v5562 = vsub.s32 1, %v5561
    %v5563 = vrot.slane %v5554, %v5562
    %v5574 = vunpack.c.l.b16 %v5545
    %v5575 = vunpack.c.h.b16 %v5545
    %v5576 = vunpack.c.l.b16 %v5546
    %v5577 = vunpack.c.h.b16 %v5546
    %v5578 = vunpack.c.l.b16 %v5547
    %v5579 = vunpack.c.h.b16 %v5547
    %v5580 = vunpack.c.l.b16 %v5548
    %v5581 = vunpack.c.h.b16 %v5548
    %v5582 = vunpack.c.l.b16 %v5549
    %v5583 = vunpack.c.h.b16 %v5549
    %v5584 = vunpack.c.l.b16 %v5550
    %v5585 = vunpack.c.h.b16 %v5550
    %v5586 = vunpack.c.l.b16 %v5551
    %v5587 = vunpack.c.h.b16 %v5551
    %v5588 = vunpack.c.l.b16 %v5552
    %v5589 = vunpack.c.h.b16 %v5552
    %v5590 = vpack.c.b16 %v5576, %v5574
    %v5591 = vpack.c.b16 %v5577, %v5575
    %v5592 = vpack.c.b16 %v5580, %v5578
    %v5593 = vpack.c.b16 %v5581, %v5579
    %v5594 = vpack.c.b16 %v5584, %v5582
    %v5595 = vpack.c.b16 %v5585, %v5583
    %v5596 = vpack.c.b16 %v5588, %v5586
    %v5597 = vpack.c.b16 %v5589, %v5587
    %v5607 = vsel %vm2486, %v5553, 0
    %5609 = vmatprep.subr.bf16.mxu0 0
    %5610 = vmatpush1.bf16.msra.mxu0 0
    %5611 = vmatprep.subr.bf16.mxu0 0
    %5612 = vmatpush1.bf16.msra.mxu0 0
    %5613 = vmatprep.subr.bf16.mxu0 0
    %5614 = vmatpush1.bf16.msra.mxu0 0
    %5615 = vmatprep.subr.bf16.mxu0 0
    %5616 = vmatpush1.bf16.msra.mxu0 0
    %5617 = vmatprep.subr.bf16.mxu0 %v5597
    %5618 = vmatpush1.bf16.msra.mxu0 %v5596
    %5619 = vmatprep.subr.bf16.mxu0 %v5595
    %5620 = vmatpush1.bf16.msra.mxu0 %v5594
    %5621 = vmatprep.subr.bf16.mxu0 %v5593
    %5622 = vmatpush1.bf16.msra.mxu0 %v5592
    %5623 = vmatprep.subr.bf16.mxu0 %v5591
    %5624 = vmatpush1.bf16.msra.mxu0 %v5590
    %5625 = vmatprep.subr.bf16.mxu0 0
    %5626 = vmatpush2.bf16.msra.mxu0 0
    %5627 = vmatprep.subr.bf16.mxu0 0
    %5628 = vmatpush2.bf16.msra.mxu0 0
    %5629 = vmatprep.subr.bf16.mxu0 0
    %5630 = vmatpush2.bf16.msra.mxu0 0
    %5631 = vmatprep.subr.bf16.mxu0 0
    %5632 = vmatpush2.bf16.msra.mxu0 0
    %5633 = vmatprep.subr.bf16.mxu0 0
    %5634 = vmatpush2.bf16.msra.mxu0 0
    %5635 = vmatprep.subr.bf16.mxu0 0
    %5636 = vmatpush2.bf16.msra.mxu0 0
    %5637 = vmatprep.subr.bf16.mxu0 0
    %5638 = vmatpush2.bf16.msra.mxu0 0
    %5639 = vmatprep.subr.bf16.mxu0 0
    %5640 = vmatpush2.bf16.msra.mxu0 0
    %5641 = vmatprep.mubr.bf16.mxu0 0
    %5642 = vmatmul.mubr.bf16.gmra.mxu0 %v5607
    %v5643 = vpop.f32.mrf.mxu0
    %v5644 = vadd.f32 %v5559, %v5643
    %v5645 = vpop.f32.mrf.mxu0
    %v5646 = vadd.f32 %v5563, %v5645
    %v5647 = vpop.f32.mrf.mxu0
    %v5648 = vpop.f32.mrf.mxu0
    %5649 = vdwg.mxu0
    %v5650 = vxor.u32 %v5644, 2147483648
    %v5651 = vmul.f32 %v5650, 1.442695
    %v5652 = vpow.pop %v5651
    %v5653 = vadd.f32 %v5652, 1.0
    %v5654 = vrcp.pop %v5653
    %v5655 = vmul.f32 1.0, %v5654
    %v5656 = vtanh.pop %v5644
    %v5657 = vxor.u32 %v5646, 2147483648
    %v5658 = vmul.f32 %v5657, 1.442695
    %v5659 = vpow.pop %v5658
    %v5660 = vadd.f32 %v5659, 1.0
    %v5661 = vrcp.pop %v5660
    %v5662 = vmul.f32 1.0, %v5661
    %5664 = vrot.lane.b32.xlu0 %v5656, 64
    %v5665 = vpop.permute.xlu0 %5664
    %v5667 = vmul.f32 %v5655, %v5665
    %v5668 = vtanh.pop %v5667
    %v5669 = vmul.f32 %v5662, %v5668
    %v5670 = vld [vmem:[%s51] sm:$0xff]
    %v5671 = vld [vmem:[%s51 + $0x8] sm:$0xff]
    %v5672 = vld [vmem:[%s51 + $0x10] sm:$0xff]
    %v5673 = vld [vmem:[%s51 + $0x18] sm:$0xff]
    %v5674 = vld [vmem:[%s51 + $0x20] sm:$0xff]
    %v5675 = vld [vmem:[%s51 + $0x28] sm:$0xff]
    %v5676 = vld [vmem:[%s51 + $0x30] sm:$0xff]
    %v5677 = vld [vmem:[%s51 + $0x38] sm:$0xff]
    %v5678 = vpack.c.bf16 %v5669, %v5669
    %v5679 = vld [vmem:[#allocation28] sm:$0x3]
    %v5681 = vlaneseq
    %v5682 = vshrl.u32 %v5681, 7
    %v5683 = vsub.s32 0, %v5682
    %v5684 = vrot.slane %v5679, %v5683
    %v5685 = vlaneseq
    %v5686 = vshrl.u32 %v5685, 7
    %v5687 = vsub.s32 1, %v5686
    %v5688 = vrot.slane %v5679, %v5687
    %v5699 = vunpack.c.l.b16 %v5670
    %v5700 = vunpack.c.h.b16 %v5670
    %v5701 = vunpack.c.l.b16 %v5671
    %v5702 = vunpack.c.h.b16 %v5671
    %v5703 = vunpack.c.l.b16 %v5672
    %v5704 = vunpack.c.h.b16 %v5672
    %v5705 = vunpack.c.l.b16 %v5673
    %v5706 = vunpack.c.h.b16 %v5673
    %v5707 = vunpack.c.l.b16 %v5674
    %v5708 = vunpack.c.h.b16 %v5674
    %v5709 = vunpack.c.l.b16 %v5675
    %v5710 = vunpack.c.h.b16 %v5675
    %v5711 = vunpack.c.l.b16 %v5676
    %v5712 = vunpack.c.h.b16 %v5676
    %v5713 = vunpack.c.l.b16 %v5677
    %v5714 = vunpack.c.h.b16 %v5677
    %v5715 = vpack.c.b16 %v5701, %v5699
    %v5716 = vpack.c.b16 %v5702, %v5700
    %v5717 = vpack.c.b16 %v5705, %v5703
    %v5718 = vpack.c.b16 %v5706, %v5704
    %v5719 = vpack.c.b16 %v5709, %v5707
    %v5720 = vpack.c.b16 %v5710, %v5708
    %v5721 = vpack.c.b16 %v5713, %v5711
    %v5722 = vpack.c.b16 %v5714, %v5712
    %v5732 = vsel %vm2486, %v5678, 0
    %5734 = vmatprep.subr.bf16.mxu0 0
    %5735 = vmatpush1.bf16.msra.mxu0 0
    %5736 = vmatprep.subr.bf16.mxu0 0
    %5737 = vmatpush1.bf16.msra.mxu0 0
    %5738 = vmatprep.subr.bf16.mxu0 0
    %5739 = vmatpush1.bf16.msra.mxu0 0
    %5740 = vmatprep.subr.bf16.mxu0 0
    %5741 = vmatpush1.bf16.msra.mxu0 0
    %5742 = vmatprep.subr.bf16.mxu0 %v5722
    %5743 = vmatpush1.bf16.msra.mxu0 %v5721
    %5744 = vmatprep.subr.bf16.mxu0 %v5720
    %5745 = vmatpush1.bf16.msra.mxu0 %v5719
    %5746 = vmatprep.subr.bf16.mxu0 %v5718
    %5747 = vmatpush1.bf16.msra.mxu0 %v5717
    %5748 = vmatprep.subr.bf16.mxu0 %v5716
    %5749 = vmatpush1.bf16.msra.mxu0 %v5715
    %5750 = vmatprep.subr.bf16.mxu0 0
    %5751 = vmatpush2.bf16.msra.mxu0 0
    %5752 = vmatprep.subr.bf16.mxu0 0
    %5753 = vmatpush2.bf16.msra.mxu0 0
    %5754 = vmatprep.subr.bf16.mxu0 0
    %5755 = vmatpush2.bf16.msra.mxu0 0
    %5756 = vmatprep.subr.bf16.mxu0 0
    %5757 = vmatpush2.bf16.msra.mxu0 0
    %5758 = vmatprep.subr.bf16.mxu0 0
    %5759 = vmatpush2.bf16.msra.mxu0 0
    %5760 = vmatprep.subr.bf16.mxu0 0
    %5761 = vmatpush2.bf16.msra.mxu0 0
    %5762 = vmatprep.subr.bf16.mxu0 0
    %5763 = vmatpush2.bf16.msra.mxu0 0
    %5764 = vmatprep.subr.bf16.mxu0 0
    %5765 = vmatpush2.bf16.msra.mxu0 0
    %5766 = vmatprep.mubr.bf16.mxu0 0
    %5767 = vmatmul.mubr.bf16.gmra.mxu0 %v5732
    %v5768 = vpop.f32.mrf.mxu0
    %v5769 = vadd.f32 %v5684, %v5768
    %v5770 = vpop.f32.mrf.mxu0
    %v5771 = vadd.f32 %v5688, %v5770
    %v5772 = vpop.f32.mrf.mxu0
    %v5773 = vpop.f32.mrf.mxu0
    %5774 = vdwg.mxu0
    %v5775 = vxor.u32 %v5769, 2147483648
    %v5776 = vmul.f32 %v5775, 1.442695
    %v5777 = vpow.pop %v5776
    %v5778 = vadd.f32 %v5777, 1.0
    %v5779 = vrcp.pop %v5778
    %v5780 = vmul.f32 1.0, %v5779
    %v5781 = vtanh.pop %v5769
    %v5782 = vxor.u32 %v5771, 2147483648
    %v5783 = vmul.f32 %v5782, 1.442695
    %v5784 = vpow.pop %v5783
    %v5785 = vadd.f32 %v5784, 1.0
    %v5786 = vrcp.pop %v5785
    %v5787 = vmul.f32 1.0, %v5786
    %5789 = vrot.lane.b32.xlu0 %v5781, 64
    %v5790 = vpop.permute.xlu0 %5789
    %v5792 = vmul.f32 %v5780, %v5790
    %v5793 = vtanh.pop %v5792
    %v5794 = vmul.f32 %v5787, %v5793
    %v5795 = vld [vmem:[#allocation30] sm:$0xf]
    %v5796 = vld [vmem:[#allocation30 + $0x4] sm:$0xf]
    %v5797 = vld [vmem:[#allocation30 + $0x8] sm:$0xf]
    %v5798 = vld [vmem:[#allocation30 + $0xc] sm:$0xf]
    %v5799 = vld [vmem:[#allocation30 + $0x10] sm:$0xf]
    %v5800 = vld [vmem:[#allocation30 + $0x14] sm:$0xf]
    %v5801 = vld [vmem:[#allocation30 + $0x18] sm:$0xf]
    %v5802 = vld [vmem:[#allocation30 + $0x1c] sm:$0xf]
    %v5803 = vpack.c.bf16 %v5794, %v5794
    %v5804 = vld [vmem:[%s57] sm:$0x1]
    %v5806 = vlaneseq
    %v5807 = vshrl.u32 %v5806, 7
    %v5808 = vsub.s32 0, %v5807
    %v5809 = vrot.slane %v5804, %v5808
    %v5819 = vunpack.c.l.b16 %v5795
    %v5820 = vunpack.c.l.b16 %v5796
    %v5821 = vunpack.c.l.b16 %v5797
    %v5822 = vunpack.c.l.b16 %v5798
    %v5823 = vunpack.c.l.b16 %v5799
    %v5824 = vunpack.c.l.b16 %v5800
    %v5825 = vunpack.c.l.b16 %v5801
    %v5826 = vunpack.c.l.b16 %v5802
    %v5827 = vpack.c.b16 %v5820, %v5819
    %v5828 = vpack.c.b16 %v5822, %v5821
    %v5829 = vpack.c.b16 %v5824, %v5823
    %v5830 = vpack.c.b16 %v5826, %v5825
    %v5836 = vsel %vm2486, %v5803, 0
    %5838 = vmatprep.subr.bf16.mxu0 0
    %5839 = vmatpush1.bf16.msra.mxu0 0
    %5840 = vmatprep.subr.bf16.mxu0 0
    %5841 = vmatpush1.bf16.msra.mxu0 0
    %5842 = vmatprep.subr.bf16.mxu0 0
    %5843 = vmatpush1.bf16.msra.mxu0 0
    %5844 = vmatprep.subr.bf16.mxu0 0
    %5845 = vmatpush1.bf16.msra.mxu0 0
    %5846 = vmatprep.subr.bf16.mxu0 0
    %5847 = vmatpush1.bf16.msra.mxu0 %v5830
    %5848 = vmatprep.subr.bf16.mxu0 0
    %5849 = vmatpush1.bf16.msra.mxu0 %v5829
    %5850 = vmatprep.subr.bf16.mxu0 0
    %5851 = vmatpush1.bf16.msra.mxu0 %v5828
    %5852 = vmatprep.subr.bf16.mxu0 0
    %5853 = vmatpush1.bf16.msra.mxu0 %v5827
    %5854 = vmatprep.subr.bf16.mxu0 0
    %5855 = vmatpush2.bf16.msra.mxu0 0
    %5856 = vmatprep.subr.bf16.mxu0 0
    %5857 = vmatpush2.bf16.msra.mxu0 0
    %5858 = vmatprep.subr.bf16.mxu0 0
    %5859 = vmatpush2.bf16.msra.mxu0 0
    %5860 = vmatprep.subr.bf16.mxu0 0
    %5861 = vmatpush2.bf16.msra.mxu0 0
    %5862 = vmatprep.subr.bf16.mxu0 0
    %5863 = vmatpush2.bf16.msra.mxu0 0
    %5864 = vmatprep.subr.bf16.mxu0 0
    %5865 = vmatpush2.bf16.msra.mxu0 0
    %5866 = vmatprep.subr.bf16.mxu0 0
    %5867 = vmatpush2.bf16.msra.mxu0 0
    %5868 = vmatprep.subr.bf16.mxu0 0
    %5869 = vmatpush2.bf16.msra.mxu0 0
    %5870 = vmatprep.mubr.bf16.mxu0 0
    %5871 = vmatmul.mubr.bf16.gmra.mxu0 %v5836
    %v5872 = vpop.f32.mrf.mxu0
    %v5873 = vadd.f32 %v5809, %v5872
    %v5874 = vpop.f32.mrf.mxu0
    %v5875 = vpop.f32.mrf.mxu0
    %v5876 = vpop.f32.mrf.mxu0
    %5877 = vdwg.mxu0
    %v5878 = vmax.f32 %v5873, 0.0
    %v5879 = vld [vmem:[%s59] sm:$0xf]
    %v5880 = vld [vmem:[%s59 + $0x4] sm:$0xf]
    %v5881 = vpack.c.bf16 %v5878, %v5878
    %v5882 = vld [vmem:[%s61] sm:$0x1]
    %v5884 = vlaneseq
    %v5885 = vshrl.u32 %v5884, 7
    %v5886 = vsub.s32 0, %v5885
    %v5887 = vrot.slane %v5882, %v5886
    %v5891 = vunpack.c.l.b16 %v5879
    %v5892 = vunpack.c.l.b16 %v5880
    %v5893 = vpack.c.b16 %v5892, %v5891
    %v5896 = vsel %vm1622, %v5881, 0
    %5898 = vmatprep.subr.bf16.mxu0 0
    %5899 = vmatpush1.bf16.msra.mxu0 0
    %5900 = vmatprep.subr.bf16.mxu0 0
    %5901 = vmatpush1.bf16.msra.mxu0 0
    %5902 = vmatprep.subr.bf16.mxu0 0
    %5903 = vmatpush1.bf16.msra.mxu0 0
    %5904 = vmatprep.subr.bf16.mxu0 0
    %5905 = vmatpush1.bf16.msra.mxu0 0
    %5906 = vmatprep.subr.bf16.mxu0 0
    %5907 = vmatpush1.bf16.msra.mxu0 0
    %5908 = vmatprep.subr.bf16.mxu0 0
    %5909 = vmatpush1.bf16.msra.mxu0 0
    %5910 = vmatprep.subr.bf16.mxu0 0
    %5911 = vmatpush1.bf16.msra.mxu0 0
    %5912 = vmatprep.subr.bf16.mxu0 0
    %5913 = vmatpush1.bf16.msra.mxu0 %v5893
    %5914 = vmatprep.subr.bf16.mxu0 0
    %5915 = vmatpush2.bf16.msra.mxu0 0
    %5916 = vmatprep.subr.bf16.mxu0 0
    %5917 = vmatpush2.bf16.msra.mxu0 0
    %5918 = vmatprep.subr.bf16.mxu0 0
    %5919 = vmatpush2.bf16.msra.mxu0 0
    %5920 = vmatprep.subr.bf16.mxu0 0
    %5921 = vmatpush2.bf16.msra.mxu0 0
    %5922 = vmatprep.subr.bf16.mxu0 0
    %5923 = vmatpush2.bf16.msra.mxu0 0
    %5924 = vmatprep.subr.bf16.mxu0 0
    %5925 = vmatpush2.bf16.msra.mxu0 0
    %5926 = vmatprep.subr.bf16.mxu0 0
    %5927 = vmatpush2.bf16.msra.mxu0 0
    %5928 = vmatprep.subr.bf16.mxu0 0
    %5929 = vmatpush2.bf16.msra.mxu0 0
    %5930 = vmatprep.mubr.bf16.mxu0 0
    %5931 = vmatmul.mubr.bf16.gmra.mxu0 %v5896
    %v5932 = vpop.f32.mrf.mxu0
    %v5933 = vadd.f32 %v5887, %v5932
    %v5934 = vpop.f32.mrf.mxu0
    %v5935 = vpop.f32.mrf.mxu0
    %v5936 = vpop.f32.mrf.mxu0
    %5937 = vdwg.mxu0
    %v5938 = vxor.u32 %v5933, 2147483648
    %v5939 = vmul.f32 %v5938, 1.442695
    %v5940 = vpow.pop %v5939
    %v5941 = vadd.f32 %v5940, 1.0
    %v5942 = vrcp.pop %v5941
    %v5943 = vmul.f32 1.0, %v5942
    %v5944 = vmul.f32 %v5794, %v5943
    %v5945 = vld [vmem:[%s63] sm:$0xf]
    %v5946 = vld [vmem:[%s63 + $0x4] sm:$0xf]
    %v5947 = vld [vmem:[%s63 + $0x8] sm:$0xf]
    %v5948 = vld [vmem:[%s63 + $0xc] sm:$0xf]
    %v5949 = vld [vmem:[%s63 + $0x10] sm:$0xf]
    %v5950 = vld [vmem:[%s63 + $0x14] sm:$0xf]
    %v5951 = vld [vmem:[%s63 + $0x18] sm:$0xf]
    %v5952 = vld [vmem:[%s63 + $0x1c] sm:$0xf]
    %v5953 = vpack.c.bf16 %v5944, %v5944
    %v5954 = vld [vmem:[%s65] sm:$0x1]
    %v5956 = vlaneseq
    %v5957 = vshrl.u32 %v5956, 7
    %v5958 = vsub.s32 0, %v5957
    %v5959 = vrot.slane %v5954, %v5958
    %v5969 = vunpack.c.l.b16 %v5945
    %v5970 = vunpack.c.l.b16 %v5946
    %v5971 = vunpack.c.l.b16 %v5947
    %v5972 = vunpack.c.l.b16 %v5948
    %v5973 = vunpack.c.l.b16 %v5949
    %v5974 = vunpack.c.l.b16 %v5950
    %v5975 = vunpack.c.l.b16 %v5951
    %v5976 = vunpack.c.l.b16 %v5952
    %v5977 = vpack.c.b16 %v5970, %v5969
    %v5978 = vpack.c.b16 %v5972, %v5971
    %v5979 = vpack.c.b16 %v5974, %v5973
    %v5980 = vpack.c.b16 %v5976, %v5975
    %v5986 = vsel %vm2486, %v5953, 0
    %5988 = vmatprep.subr.bf16.mxu0 0
    %5989 = vmatpush1.bf16.msra.mxu0 0
    %5990 = vmatprep.subr.bf16.mxu0 0
    %5991 = vmatpush1.bf16.msra.mxu0 0
    %5992 = vmatprep.subr.bf16.mxu0 0
    %5993 = vmatpush1.bf16.msra.mxu0 0
    %5994 = vmatprep.subr.bf16.mxu0 0
    %5995 = vmatpush1.bf16.msra.mxu0 0
    %5996 = vmatprep.subr.bf16.mxu0 0
    %5997 = vmatpush1.bf16.msra.mxu0 %v5980
    %5998 = vmatprep.subr.bf16.mxu0 0
    %5999 = vmatpush1.bf16.msra.mxu0 %v5979
    %6000 = vmatprep.subr.bf16.mxu0 0
    %6001 = vmatpush1.bf16.msra.mxu0 %v5978
    %6002 = vmatprep.subr.bf16.mxu0 0
    %6003 = vmatpush1.bf16.msra.mxu0 %v5977
    %6004 = vmatprep.subr.bf16.mxu0 0
    %6005 = vmatpush2.bf16.msra.mxu0 0
    %6006 = vmatprep.subr.bf16.mxu0 0
    %6007 = vmatpush2.bf16.msra.mxu0 0
    %6008 = vmatprep.subr.bf16.mxu0 0
    %6009 = vmatpush2.bf16.msra.mxu0 0
    %6010 = vmatprep.subr.bf16.mxu0 0
    %6011 = vmatpush2.bf16.msra.mxu0 0
    %6012 = vmatprep.subr.bf16.mxu0 0
    %6013 = vmatpush2.bf16.msra.mxu0 0
    %6014 = vmatprep.subr.bf16.mxu0 0
    %6015 = vmatpush2.bf16.msra.mxu0 0
    %6016 = vmatprep.subr.bf16.mxu0 0
    %6017 = vmatpush2.bf16.msra.mxu0 0
    %6018 = vmatprep.subr.bf16.mxu0 0
    %6019 = vmatpush2.bf16.msra.mxu0 0
    %6020 = vmatprep.mubr.bf16.mxu0 0
    %6021 = vmatmul.mubr.bf16.gmra.mxu0 %v5986
    %v6022 = vpop.f32.mrf.mxu0
    %v6023 = vadd.f32 %v5959, %v6022
    %v6024 = vpop.f32.mrf.mxu0
    %v6025 = vpop.f32.mrf.mxu0
    %v6026 = vpop.f32.mrf.mxu0
    %6027 = vdwg.mxu0
    %v6028 = vmax.f32 %v6023, 0.0
    %v6029 = vld [vmem:[%s67] sm:$0x1]
    %v6031 = vlaneseq
    %v6032 = vshrl.u32 %v6031, 7
    %v6033 = vsub.s32 0, %v6032
    %v6034 = vrot.slane %v6029, %v6033
    %v6036 = vmul.f32 %v6028, %v6034
    %vm6037 = vcmask 123904
    %v6038 = vsel %vm6037, %v6036, 0.0
    %6039 = vadd.xlane.f32.xlu0 %v6038
    %v6040 = vpop.xlane.xlu0 %6039
    %v6041 = vld [vmem:[#allocation3] sm:$0x1]
    %v6043 = vlaneseq
    %v6044 = vshrl.u32 %v6043, 7
    %v6045 = vsub.s32 0, %v6044
    %v6046 = vrot.slane %v6041, %v6045
    %v6048 = vadd.f32 %v6040, %v6046
    %v6049 = vxor.u32 %v6048, 2147483648
    %v6050 = vmul.f32 %v6049, 1.442695
    %v6051 = vpow.pop %v6050
    %v6052 = vadd.f32 %v6051, 1.0
    %v6053 = vrcp.pop %v6052
    %v6054 = vmul.f32 1.0, %v6053
    %6056 = vset.pattern.permute.xlu0 0
    %6057 = vperm.xlu0 %6056, %v6054
    %v6058 = vpop.permute.xlu0 %6057
    %v6060 = vmul.f32 %v5944, %v6058
    %v6061 = vld [vmem:[%s71] sm:$0x1]
    %v6063 = vlaneseq
    %v6064 = vshrl.u32 %v6063, 7
    %v6065 = vsub.s32 0, %v6064
    %v6066 = vrot.slane %v6061, %v6065
    %v6068 = vmul.f32 %v6060, %v6066
    %vm6069 = vcmask 517120
    %v6070 = vsel %vm6069, %v6068, 0.0
    %6071 = vadd.xlane.f32.xlu0 %v6070
    %v6072 = vpop.xlane.xlu0 %6071
    %v6073 = vld [vmem:[#allocation4] sm:$0x1]
    %v6075 = vlaneseq
    %v6076 = vshrl.u32 %v6075, 7
    %v6077 = vsub.s32 0, %v6076
    %v6078 = vrot.slane %v6073, %v6077
    %v6080 = vadd.f32 %v6072, %v6078
    %6082 = vset.pattern.permute.xlu0 0
    %6083 = vperm.xlu0 %6082, %v6080
    %v6084 = vpop.permute.xlu0 %6083
    %6086 = vst [vmem:[%s75] sm:$0x3] %v6084
    // Predicated region
    $region218: #{_lambda_.1} parent=1 // pred_check
      _
    $region219: #{_lambda_.1} parent=1 // pred_check_branch
      %6088 = sbr.rel (0) target = $region221
    $region220: #{_lambda_.1} parent=1 // pred_region
      _
    $region221: #{_lambda_.1} parent=1 // pred_fallthru
      _
    // Predicated region
    $region222: #{_lambda_.1} parent=1 // pred_check
      _
    $region223: #{_lambda_.1} parent=1 // pred_check_branch
      %6090 = sbr.rel (0) target = $region225
    $region224: #{_lambda_.1} parent=1 // pred_region
      _
    $region225: #{_lambda_.1} parent=1 // pred_fallthru
      _
    %6091 = vsyncpa [#allocation6], 1
    %6092 = vsyncpa [#allocation8], 1
    %6093 = vsyncpa [#allocation11], 1
    %6094 = vsyncpa [#allocation14], 1
    %6095 = vsyncpa [#allocation17], 1
    %6096 = vsyncpa [#allocation20], 1
    %6097 = vsyncpa [#allocation23], 1
    %6098 = vsyncpa [#allocation26], 1
    %6099 = vsyncpa [#allocation29], 1

</llo_original>
